<compile_context>
chip_gen: v7x
topology: tpu7x:2x2x1
jax: 0.10.0
libtpu: 0.0.40
codegen_flags: <defaults>
</compile_context>

<pallas_src>
import jax
import jax.numpy as jnp
from jax import lax
from jax.experimental import pallas as pl
from jax.experimental.pallas import tpu as pltpu

B = 2          # batch
T = 8          # sequence length
C = 64         # input_size / attention channels
H = 32         # GRU hidden size
NH = 8         # attention heads
HD = C // NH   # head dim
NC = 2         # num_classes
NCP = 128      # lane-dense padded FC output width (sliced back to NC outside)
EPS = 1e-5     # LayerNorm eps (torch default)
G3 = 3 * H     # per-direction GRU gate width
G6 = 6 * H     # fused fwd+bwd gate width (interleaved layout)

PARAM_ORDER = ['gamma', 'beta', 'wqkv', 'bqkv', 'wproj', 'bproj',
               'wih1a', 'wih1b', 'whh1', 'bgi1', 'bhn1',
               'wih2a', 'wih2b', 'whh2', 'bgi2', 'bhn2',
               'wfc', 'bfc']


# ----------------------------- GRU step helper --------------------------------
def _gru_step(h, gi, whh_bf, bhn):
    """One fused fwd+bwd GRU step with the interleaved gate layout.

    h:      (B, 2H) f32, [h_fwd | h_bwd]
    gi:     (B, 6H) f32 input-gate preacts, layout [r_f r_b | z_f z_b | n_f n_b]
            (b_ih and the r/z part of b_hh already folded in)
    whh_bf: (2H, 6H) bf16 block-structured recurrent weight
    bhn:    (1, 2H) f32 hidden n-gate bias (stays inside r*(.), PyTorch order)
    """
    gh = jnp.dot(h.astype(jnp.bfloat16), whh_bf,
                 preferred_element_type=jnp.float32)              # (B, 6H)
    rz = jax.nn.sigmoid(gi[:, :4 * H] + gh[:, :4 * H])            # one EUP call (B,128)
    r = rz[:, :2 * H]
    z = rz[:, 2 * H:]
    n = jnp.tanh(gi[:, 4 * H:] + r * (gh[:, 4 * H:] + bhn))       # (B, 2H)
    return n + z * (h - n)                                        # == (1-z)*n + z*h


# ------------------------------- fused kernel ---------------------------------
def fused_kernel(x_ref, gamma_ref, beta_ref, wqkv_ref, bqkv_ref,
                 wproj_ref, bproj_ref,
                 wih1a_ref, wih1b_ref, whh1_ref, bgi1_ref, bhn1_ref,
                 wih2a_ref, wih2b_ref, whh2_ref, bgi2_ref, bhn2_ref,
                 wfc_ref, bfc_ref,
                 out_ref, y1_ref):
    f32 = jnp.float32
    bf16 = jnp.bfloat16

    # ---------------- attention block ----------------
    x = x_ref[...]                                               # (B, T, C) f32
    mean = jnp.mean(x, axis=-1, keepdims=True)
    var = jnp.mean((x - mean) ** 2, axis=-1, keepdims=True)
    xn = (x - mean) * lax.rsqrt(var + EPS)
    xn = xn * gamma_ref[...] + beta_ref[...]
    xn2 = xn.reshape(B * T, C)

    # 1/sqrt(HD) softmax scale is folded into the Q columns of wqkv/bqkv.
    qkv = jnp.dot(xn2.astype(bf16), wqkv_ref[...],
                  preferred_element_type=f32) + bqkv_ref[...]     # (B*T, 3C)
    qkv = qkv.reshape(B, T, 3 * C)

    # TODO(synk): the PyTorch module feeds 4-D q/k/v into nn.MultiheadAttention
    # (which raises a shape assertion); we implement the intended per-head SDPA
    # with the MHA-internal in/out projections treated as identity.
    wproj = wproj_ref[...]                                        # (C, C) bf16
    proj = jnp.zeros((B * T, C), f32)
    for h in range(NH):                                           # static, NH=8
        qh = qkv[:, :, h * HD:(h + 1) * HD].astype(bf16)
        kh = qkv[:, :, C + h * HD:C + (h + 1) * HD].astype(bf16)
        vh = qkv[:, :, 2 * C + h * HD:2 * C + (h + 1) * HD].astype(bf16)
        s = jnp.einsum('bqd,bkd->bqk', qh, kh, preferred_element_type=f32)
        s = s - jnp.max(s, axis=-1, keepdims=True)
        p = jnp.exp(s)
        p = p * pl.reciprocal(jnp.sum(p, axis=-1, keepdims=True), approx=True)
        oh = jnp.einsum('bqk,bkd->bqd', p.astype(bf16), vh,
                        preferred_element_type=f32)               # (B, T, HD)
        # Head-output concat folded into the projection matmul.
        proj = proj + jnp.dot(oh.reshape(B * T, HD).astype(bf16),
                              wproj[h * HD:(h + 1) * HD, :],
                              preferred_element_type=f32)
    # Residual against the *normalized* x, matching the PyTorch code where x
    # was reassigned to norm(x).
    attn2 = xn2 + proj + bproj_ref[...]                           # (B*T, C) f32

    # ---------------- GRU layer 1 (bidirectional, fused fwd+bwd) ---------------
    # Hoisted input-to-hidden slabs: A holds fwd-direction gate columns
    # (+ folded biases), B holds bwd-direction gate columns; per combined step t
    # the input gates are gi1a[:, t] + gi1b[:, T-1-t] (one full-width add).
    attn_bf = attn2.astype(bf16)
    gi1a = (jnp.dot(attn_bf, wih1a_ref[...], preferred_element_type=f32)
            + bgi1_ref[...]).reshape(B, T, G6)
    gi1b = jnp.dot(attn_bf, wih1b_ref[...],
                   preferred_element_type=f32).reshape(B, T, G6)

    whh1 = whh1_ref[...]                                          # (2H, 6H) bf16
    bhn1 = bhn1_ref[...]                                          # (1, 2H)  f32
    h1 = jnp.zeros((B, 2 * H), f32)
    for t in range(T):                    # statically unrolled (T fixed & tiny)
        tr = T - 1 - t
        gi = gi1a[:, t, :] + gi1b[:, tr, :]                       # (B, 6H)
        h1 = _gru_step(h1, gi, whh1, bhn1)
        # Layer-1 -> layer-2 handoff: fused state [f_t | b_{T-1-t}] goes
        # straight to VMEM scratch (replaces the old 17-way concat tree).
        y1_ref[t * B:(t + 1) * B, :] = h1

    # ---------------- GRU layer 2 ----------------
    y1_bf = y1_ref[...].astype(bf16)                              # (T*B, 2H)
    gi2a = (jnp.dot(y1_bf, wih2a_ref[...], preferred_element_type=f32)
            + bgi2_ref[...]).reshape(T, B, G6)
    gi2b = jnp.dot(y1_bf, wih2b_ref[...],
                   preferred_element_type=f32).reshape(T, B, G6)

    whh2 = whh2_ref[...]
    bhn2 = bhn2_ref[...]
    h2 = jnp.zeros((B, 2 * H), f32)
    for t in range(T):                    # statically unrolled
        tr = T - 1 - t
        gi = gi2a[t] + gi2b[tr]                                   # leading-axis picks
        h2 = _gru_step(h2, gi, whh2, bhn2)

    # out = fc(cat(hidden[-2], hidden[-1])) = fc([h2_fwd | h2_bwd]).
    # FC weights are zero-padded to 128 output lanes for a lane-dense store;
    # valid columns [:NC] are sliced outside the kernel.
    out_ref[...] = (jnp.dot(h2.astype(bf16), wfc_ref[...],
                            preferred_element_type=f32) + bfc_ref[...])


# ---------------------------------- wrapper -----------------------------------
def gru_with_attention(x, params):
    # TODO(synk): if this forward is invoked repeatedly inside a larger model,
    # hoist the pallas_call into the surrounding loop / keep the weights
    # resident -- at ~1 MFLOP the kernel is launch/param-DMA dominated.
    vmem = pl.BlockSpec(memory_space=pltpu.MemorySpace.VMEM)
    args = [x] + [params[k] for k in PARAM_ORDER]
    out_pad = pl.pallas_call(
        fused_kernel,
        out_shape=jax.ShapeDtypeStruct((B, NCP), jnp.float32),
        in_specs=[vmem] * len(args),
        out_specs=vmem,
        scratch_shapes=[pltpu.VMEM((T * B, 2 * H), jnp.float32)],
    )(*args)
    return out_pad[:, :NC]


# ----------------------- init-time weight layout helpers -----------------------
def _scatter_gates(w, direction):
    """Scatter per-direction gate columns [r|z|n] (width 3H) into the fused
    interleaved layout [r_f r_b | z_f z_b | n_f n_b] (width 6H); the other
    direction's column blocks are zero so fwd/bwd slabs can simply be added."""
    zero = jnp.zeros((w.shape[0], H), w.dtype)
    wr, wz, wn = w[:, :H], w[:, H:2 * H], w[:, 2 * H:]
    if direction == 'f':
        return jnp.concatenate([wr, zero, wz, zero, wn, zero], axis=-1)
    return jnp.concatenate([zero, wr, zero, wz, zero, wn], axis=-1)


def _interleave_cols(fwd, bwd):
    """Interleave fwd/bwd bias columns into [r_f r_b | z_f z_b | n_f n_b]."""
    return jnp.concatenate(
        [fwd[:, :H], bwd[:, :H], fwd[:, H:2 * H], bwd[:, H:2 * H],
         fwd[:, 2 * H:], bwd[:, 2 * H:]], axis=-1)


# --------------------------- deterministic parameters --------------------------
def init_params(key):
    ks = iter(jax.random.split(key, 32))
    bf16 = jnp.bfloat16

    def nrm(shape, scale=0.1):
        return scale * jax.random.normal(next(ks), shape, dtype=jnp.float32)

    # ----- attention block -----
    wqkv = nrm((C, 3 * C))
    bqkv = nrm((1, 3 * C))
    q_scale = 1.0 / (HD ** 0.5)
    wqkv = wqkv.at[:, :C].multiply(q_scale)     # fold softmax scale into Q
    bqkv = bqkv.at[:, :C].multiply(q_scale)

    params = dict(
        gamma=jnp.ones((1, C), jnp.float32),
        beta=jnp.zeros((1, C), jnp.float32),
        wqkv=wqkv.astype(bf16), bqkv=bqkv,
        wproj=nrm((C, C)).astype(bf16), bproj=nrm((1, C)),
    )

    def gru_dir(in_size):
        # (W_ih^T, W_hh^T, b_ih, b_hh); PyTorch gate order r|z|n along 3H.
        return (nrm((in_size, G3)), nrm((H, G3)), nrm((1, G3)), nrm((1, G3)))

    def fuse_biases(bihf, bhhf, bihb, bhhb):
        bih = _interleave_cols(bihf, bihb)
        bhh = _interleave_cols(bhhf, bhhb)
        bgi = bih + bhh.at[:, 4 * H:].set(0.0)  # b_ih + b_hh(r,z); b_hn separate
        bhn = bhh[:, 4 * H:]
        return bgi, bhn

    def fuse_whh(whhf, whhb):
        # Block-structured recurrent weight for the fused hidden [h_f | h_b].
        return jnp.concatenate([_scatter_gates(whhf, 'f'),
                                _scatter_gates(whhb, 'b')], axis=0)

    # Layer 1: fwd consumes x_t, bwd consumes x_{T-1-t}.
    f1, b1 = gru_dir(C), gru_dir(C)
    params['wih1a'] = _scatter_gates(f1[0], 'f').astype(bf16)
    params['wih1b'] = _scatter_gates(b1[0], 'b').astype(bf16)
    params['whh1'] = fuse_whh(f1[1], b1[1]).astype(bf16)
    params['bgi1'], params['bhn1'] = fuse_biases(f1[2], f1[3], b1[2], b1[3])

    # Layer 2 consumes VMEM-scratch rows S[t] = [f_t | b_{T-1-t}]:
    #   S[t]     @ A -> f_t via W_f[:H] (fwd cols) + b_{T-1-t} via W_b[H:] (bwd cols)
    #   S[T-1-t] @ B -> f_{T-1-t} via W_b[:H] (bwd cols) + b_t via W_f[H:] (fwd cols)
    f2, b2 = gru_dir(2 * H), gru_dir(2 * H)
    params['wih2a'] = jnp.concatenate([_scatter_gates(f2[0][:H], 'f'),
                                       _scatter_gates(b2[0][H:], 'b')],
                                      axis=0).astype(bf16)
    params['wih2b'] = jnp.concatenate([_scatter_gates(b2[0][:H], 'b'),
                                       _scatter_gates(f2[0][H:], 'f')],
                                      axis=0).astype(bf16)
    params['whh2'] = fuse_whh(f2[1], b2[1]).astype(bf16)
    params['bgi2'], params['bhn2'] = fuse_biases(f2[2], f2[3], b2[2], b2[3])

    # FC zero-padded to a lane-dense 128-wide output; valid columns are [:NC].
    params['wfc'] = (jnp.zeros((2 * H, NCP), jnp.float32)
                     .at[:, :NC].set(nrm((2 * H, NC)))).astype(bf16)
    params['bfc'] = jnp.zeros((1, NCP), jnp.float32).at[:, :NC].set(nrm((1, NC)))
    return params


# ------------------------------------ driver -----------------------------------
if __name__ == "__main__":
    key = jax.random.PRNGKey(0)
    kx, kp = jax.random.split(key)
    x = jax.random.normal(kx, (B, T, C), dtype=jnp.float32)
    params = init_params(kp)

    forward = jax.jit(lambda xi: gru_with_attention(xi, params))
    out = forward(x)
    jax.block_until_ready(out)
    assert out.shape == (B, NC) and out.dtype == jnp.float32
    assert bool(jnp.all(jnp.isfinite(out)))
    print("KERNEL_OK")
</pallas_src>

<mosaic_0001>
module attributes {stable_mosaic.version = 11 : i64} {
  func.func @fused_kernel(%arg0: memref<2x8x64xf32, #tpu.memory_space<vmem>>, %arg1: memref<1x64xf32, #tpu.memory_space<vmem>>, %arg2: memref<1x64xf32, #tpu.memory_space<vmem>>, %arg3: memref<64x192xbf16, #tpu.memory_space<vmem>>, %arg4: memref<1x192xf32, #tpu.memory_space<vmem>>, %arg5: memref<64x64xbf16, #tpu.memory_space<vmem>>, %arg6: memref<1x64xf32, #tpu.memory_space<vmem>>, %arg7: memref<64x192xbf16, #tpu.memory_space<vmem>>, %arg8: memref<64x192xbf16, #tpu.memory_space<vmem>>, %arg9: memref<64x192xbf16, #tpu.memory_space<vmem>>, %arg10: memref<1x192xf32, #tpu.memory_space<vmem>>, %arg11: memref<1x64xf32, #tpu.memory_space<vmem>>, %arg12: memref<64x192xbf16, #tpu.memory_space<vmem>>, %arg13: memref<64x192xbf16, #tpu.memory_space<vmem>>, %arg14: memref<64x192xbf16, #tpu.memory_space<vmem>>, %arg15: memref<1x192xf32, #tpu.memory_space<vmem>>, %arg16: memref<1x64xf32, #tpu.memory_space<vmem>>, %arg17: memref<64x128xbf16, #tpu.memory_space<vmem>>, %arg18: memref<1x128xf32, #tpu.memory_space<vmem>>, %arg19: memref<2x128xf32, #tpu.memory_space<vmem>>, %arg20: memref<16x64xf32, #tpu.memory_space<vmem>>) attributes {dimension_semantics = [], scalar_prefetch = 0 : i64, scratch_operands = 1 : i64, tpu.core_type = #tpu.core_type<tc>} {
    %c0 = arith.constant 0 : index
    %c0_0 = arith.constant 0 : index
    %c0_1 = arith.constant 0 : index
    %0 = vector.load %arg0[%c0, %c0_0, %c0_1] : memref<2x8x64xf32, #tpu.memory_space<vmem>>, vector<2x8x64xf32>
    %cst = arith.constant dense<0.000000e+00> : vector<2x8xf32>
    %1 = vector.multi_reduction <add>, %0, %cst [2] : vector<2x8x64xf32> to vector<2x8xf32>
    %2 = vector.shape_cast %1 : vector<2x8xf32> to vector<2x8x1xf32>
    %cst_2 = arith.constant 6.400000e+01 : f32
    %3 = vector.broadcast %cst_2 : f32 to vector<2x8x1xf32>
    %4 = arith.divf %2, %3 : vector<2x8x1xf32>
    %5 = vector.broadcast %4 : vector<2x8x1xf32> to vector<2x8x64xf32>
    %6 = arith.subf %0, %5 : vector<2x8x64xf32>
    %7 = arith.mulf %6, %6 : vector<2x8x64xf32>
    %cst_3 = arith.constant dense<0.000000e+00> : vector<2x8xf32>
    %8 = vector.multi_reduction <add>, %7, %cst_3 [2] : vector<2x8x64xf32> to vector<2x8xf32>
    %9 = vector.shape_cast %8 : vector<2x8xf32> to vector<2x8x1xf32>
    %cst_4 = arith.constant 6.400000e+01 : f32
    %10 = vector.broadcast %cst_4 : f32 to vector<2x8x1xf32>
    %11 = arith.divf %9, %10 : vector<2x8x1xf32>
    %12 = vector.broadcast %4 : vector<2x8x1xf32> to vector<2x8x64xf32>
    %13 = arith.subf %0, %12 : vector<2x8x64xf32>
    %cst_5 = arith.constant 9.99999974E-6 : f32
    %14 = vector.broadcast %cst_5 : f32 to vector<2x8x1xf32>
    %15 = arith.addf %11, %14 : vector<2x8x1xf32>
    %16 = math.rsqrt %15 : vector<2x8x1xf32>
    %17 = vector.broadcast %16 : vector<2x8x1xf32> to vector<2x8x64xf32>
    %18 = arith.mulf %13, %17 : vector<2x8x64xf32>
    %c0_6 = arith.constant 0 : index
    %c0_7 = arith.constant 0 : index
    %19 = vector.load %arg1[%c0_6, %c0_7] : memref<1x64xf32, #tpu.memory_space<vmem>>, vector<1x64xf32>
    %20 = vector.shape_cast %19 : vector<1x64xf32> to vector<1x1x64xf32>
    %21 = vector.broadcast %20 : vector<1x1x64xf32> to vector<2x8x64xf32>
    %22 = arith.mulf %18, %21 : vector<2x8x64xf32>
    %c0_8 = arith.constant 0 : index
    %c0_9 = arith.constant 0 : index
    %23 = vector.load %arg2[%c0_8, %c0_9] : memref<1x64xf32, #tpu.memory_space<vmem>>, vector<1x64xf32>
    %24 = vector.shape_cast %23 : vector<1x64xf32> to vector<1x1x64xf32>
    %25 = vector.broadcast %24 : vector<1x1x64xf32> to vector<2x8x64xf32>
    %26 = arith.addf %22, %25 : vector<2x8x64xf32>
    %27 = vector.shape_cast %26 : vector<2x8x64xf32> to vector<16x64xf32>
    %28 = arith.truncf %27 : vector<16x64xf32> to vector<16x64xbf16>
    %c0_10 = arith.constant 0 : index
    %c0_11 = arith.constant 0 : index
    %29 = vector.load %arg3[%c0_10, %c0_11] : memref<64x192xbf16, #tpu.memory_space<vmem>>, vector<64x192xbf16>
    %cst_12 = arith.constant dense<0.000000e+00> : vector<16x192xf32>
    %30 = tpu.matmul %28, %29, %cst_12 {dimension_numbers = #tpu.dot_dimension_numbers<[1], [0], [0], [1], [0, 0, 1, 1], [], []>} : vector<16x64xbf16>, vector<64x192xbf16>, vector<16x192xf32> -> vector<16x192xf32>
    %c0_13 = arith.constant 0 : index
    %c0_14 = arith.constant 0 : index
    %31 = vector.load %arg4[%c0_13, %c0_14] : memref<1x192xf32, #tpu.memory_space<vmem>>, vector<1x192xf32>
    %32 = vector.broadcast %31 : vector<1x192xf32> to vector<16x192xf32>
    %33 = arith.addf %30, %32 : vector<16x192xf32>
    %34 = vector.shape_cast %33 : vector<16x192xf32> to vector<2x8x192xf32>
    %c0_15 = arith.constant 0 : index
    %c0_16 = arith.constant 0 : index
    %35 = vector.load %arg5[%c0_15, %c0_16] : memref<64x64xbf16, #tpu.memory_space<vmem>>, vector<64x64xbf16>
    %cst_17 = arith.constant 0.000000e+00 : f32
    %36 = vector.broadcast %cst_17 : f32 to vector<16x64xf32>
    %37 = vector.extract_strided_slice %34 {offsets = [0, 0, 0], sizes = [2, 8, 8], strides = [1, 1, 1]} : vector<2x8x192xf32> to vector<2x8x8xf32>
    %38 = arith.truncf %37 : vector<2x8x8xf32> to vector<2x8x8xbf16>
    %39 = vector.extract_strided_slice %34 {offsets = [0, 0, 64], sizes = [2, 8, 8], strides = [1, 1, 1]} : vector<2x8x192xf32> to vector<2x8x8xf32>
    %40 = arith.truncf %39 : vector<2x8x8xf32> to vector<2x8x8xbf16>
    %41 = vector.extract_strided_slice %34 {offsets = [0, 0, 128], sizes = [2, 8, 8], strides = [1, 1, 1]} : vector<2x8x192xf32> to vector<2x8x8xf32>
    %42 = arith.truncf %41 : vector<2x8x8xf32> to vector<2x8x8xbf16>
    "tpu.trace_start"() <{level = 10 : i32, message = "bqd,bkd->bqk"}> : () -> ()
    %cst_18 = arith.constant dense<0.000000e+00> : vector<2x8x8xf32>
    %43 = tpu.matmul %38, %40, %cst_18 {dimension_numbers = #tpu.dot_dimension_numbers<[2], [2], [1], [1], [0, 0, 0, 1, 1, 1], [0], [0]>} : vector<2x8x8xbf16>, vector<2x8x8xbf16>, vector<2x8x8xf32> -> vector<2x8x8xf32>
    "tpu.trace_stop"() : () -> ()
    %cst_19 = arith.constant dense<0xFF800000> : vector<2x8xf32>
    %44 = vector.multi_reduction <maximumf>, %43, %cst_19 [2] : vector<2x8x8xf32> to vector<2x8xf32>
    %45 = vector.shape_cast %44 : vector<2x8xf32> to vector<2x8x1xf32>
    %46 = vector.broadcast %45 : vector<2x8x1xf32> to vector<2x8x8xf32>
    %47 = arith.subf %43, %46 : vector<2x8x8xf32>
    %48 = math.exp %47 : vector<2x8x8xf32>
    %cst_20 = arith.constant dense<0.000000e+00> : vector<2x8xf32>
    %49 = vector.multi_reduction <add>, %48, %cst_20 [2] : vector<2x8x8xf32> to vector<2x8xf32>
    %50 = vector.shape_cast %49 : vector<2x8xf32> to vector<2x8x1xf32>
    %51 = tpu.reciprocal %50 {approx = true} : vector<2x8x1xf32> -> vector<2x8x1xf32>
    %52 = vector.broadcast %51 : vector<2x8x1xf32> to vector<2x8x8xf32>
    %53 = arith.mulf %48, %52 : vector<2x8x8xf32>
    %54 = arith.truncf %53 : vector<2x8x8xf32> to vector<2x8x8xbf16>
    "tpu.trace_start"() <{level = 10 : i32, message = "bqk,bkd->bqd"}> : () -> ()
    %cst_21 = arith.constant dense<0.000000e+00> : vector<2x8x8xf32>
    %55 = tpu.matmul %54, %42, %cst_21 {dimension_numbers = #tpu.dot_dimension_numbers<[2], [1], [1], [2], [0, 0, 0, 1, 1, 2], [0], [0]>} : vector<2x8x8xbf16>, vector<2x8x8xbf16>, vector<2x8x8xf32> -> vector<2x8x8xf32>
    "tpu.trace_stop"() : () -> ()
    %56 = vector.shape_cast %55 : vector<2x8x8xf32> to vector<16x8xf32>
    %57 = arith.truncf %56 : vector<16x8xf32> to vector<16x8xbf16>
    %58 = vector.extract_strided_slice %35 {offsets = [0, 0], sizes = [8, 64], strides = [1, 1]} : vector<64x64xbf16> to vector<8x64xbf16>
    %cst_22 = arith.constant dense<0.000000e+00> : vector<16x64xf32>
    %59 = tpu.matmul %57, %58, %cst_22 {dimension_numbers = #tpu.dot_dimension_numbers<[1], [0], [0], [1], [0, 0, 1, 1], [], []>} : vector<16x8xbf16>, vector<8x64xbf16>, vector<16x64xf32> -> vector<16x64xf32>
    %60 = arith.addf %36, %59 : vector<16x64xf32>
    %61 = vector.extract_strided_slice %34 {offsets = [0, 0, 8], sizes = [2, 8, 8], strides = [1, 1, 1]} : vector<2x8x192xf32> to vector<2x8x8xf32>
    %62 = arith.truncf %61 : vector<2x8x8xf32> to vector<2x8x8xbf16>
    %63 = vector.extract_strided_slice %34 {offsets = [0, 0, 72], sizes = [2, 8, 8], strides = [1, 1, 1]} : vector<2x8x192xf32> to vector<2x8x8xf32>
    %64 = arith.truncf %63 : vector<2x8x8xf32> to vector<2x8x8xbf16>
    %65 = vector.extract_strided_slice %34 {offsets = [0, 0, 136], sizes = [2, 8, 8], strides = [1, 1, 1]} : vector<2x8x192xf32> to vector<2x8x8xf32>
    %66 = arith.truncf %65 : vector<2x8x8xf32> to vector<2x8x8xbf16>
    "tpu.trace_start"() <{level = 10 : i32, message = "bqd,bkd->bqk"}> : () -> ()
    %cst_23 = arith.constant dense<0.000000e+00> : vector<2x8x8xf32>
    %67 = tpu.matmul %62, %64, %cst_23 {dimension_numbers = #tpu.dot_dimension_numbers<[2], [2], [1], [1], [0, 0, 0, 1, 1, 1], [0], [0]>} : vector<2x8x8xbf16>, vector<2x8x8xbf16>, vector<2x8x8xf32> -> vector<2x8x8xf32>
    "tpu.trace_stop"() : () -> ()
    %cst_24 = arith.constant dense<0xFF800000> : vector<2x8xf32>
    %68 = vector.multi_reduction <maximumf>, %67, %cst_24 [2] : vector<2x8x8xf32> to vector<2x8xf32>
    %69 = vector.shape_cast %68 : vector<2x8xf32> to vector<2x8x1xf32>
    %70 = vector.broadcast %69 : vector<2x8x1xf32> to vector<2x8x8xf32>
    %71 = arith.subf %67, %70 : vector<2x8x8xf32>
    %72 = math.exp %71 : vector<2x8x8xf32>
    %cst_25 = arith.constant dense<0.000000e+00> : vector<2x8xf32>
    %73 = vector.multi_reduction <add>, %72, %cst_25 [2] : vector<2x8x8xf32> to vector<2x8xf32>
    %74 = vector.shape_cast %73 : vector<2x8xf32> to vector<2x8x1xf32>
    %75 = tpu.reciprocal %74 {approx = true} : vector<2x8x1xf32> -> vector<2x8x1xf32>
    %76 = vector.broadcast %75 : vector<2x8x1xf32> to vector<2x8x8xf32>
    %77 = arith.mulf %72, %76 : vector<2x8x8xf32>
    %78 = arith.truncf %77 : vector<2x8x8xf32> to vector<2x8x8xbf16>
    "tpu.trace_start"() <{level = 10 : i32, message = "bqk,bkd->bqd"}> : () -> ()
    %cst_26 = arith.constant dense<0.000000e+00> : vector<2x8x8xf32>
    %79 = tpu.matmul %78, %66, %cst_26 {dimension_numbers = #tpu.dot_dimension_numbers<[2], [1], [1], [2], [0, 0, 0, 1, 1, 2], [0], [0]>} : vector<2x8x8xbf16>, vector<2x8x8xbf16>, vector<2x8x8xf32> -> vector<2x8x8xf32>
    "tpu.trace_stop"() : () -> ()
    %80 = vector.shape_cast %79 : vector<2x8x8xf32> to vector<16x8xf32>
    %81 = arith.truncf %80 : vector<16x8xf32> to vector<16x8xbf16>
    %82 = vector.extract_strided_slice %35 {offsets = [8, 0], sizes = [8, 64], strides = [1, 1]} : vector<64x64xbf16> to vector<8x64xbf16>
    %cst_27 = arith.constant dense<0.000000e+00> : vector<16x64xf32>
    %83 = tpu.matmul %81, %82, %cst_27 {dimension_numbers = #tpu.dot_dimension_numbers<[1], [0], [0], [1], [0, 0, 1, 1], [], []>} : vector<16x8xbf16>, vector<8x64xbf16>, vector<16x64xf32> -> vector<16x64xf32>
    %84 = arith.addf %60, %83 : vector<16x64xf32>
    %85 = vector.extract_strided_slice %34 {offsets = [0, 0, 16], sizes = [2, 8, 8], strides = [1, 1, 1]} : vector<2x8x192xf32> to vector<2x8x8xf32>
    %86 = arith.truncf %85 : vector<2x8x8xf32> to vector<2x8x8xbf16>
    %87 = vector.extract_strided_slice %34 {offsets = [0, 0, 80], sizes = [2, 8, 8], strides = [1, 1, 1]} : vector<2x8x192xf32> to vector<2x8x8xf32>
    %88 = arith.truncf %87 : vector<2x8x8xf32> to vector<2x8x8xbf16>
    %89 = vector.extract_strided_slice %34 {offsets = [0, 0, 144], sizes = [2, 8, 8], strides = [1, 1, 1]} : vector<2x8x192xf32> to vector<2x8x8xf32>
    %90 = arith.truncf %89 : vector<2x8x8xf32> to vector<2x8x8xbf16>
    "tpu.trace_start"() <{level = 10 : i32, message = "bqd,bkd->bqk"}> : () -> ()
    %cst_28 = arith.constant dense<0.000000e+00> : vector<2x8x8xf32>
    %91 = tpu.matmul %86, %88, %cst_28 {dimension_numbers = #tpu.dot_dimension_numbers<[2], [2], [1], [1], [0, 0, 0, 1, 1, 1], [0], [0]>} : vector<2x8x8xbf16>, vector<2x8x8xbf16>, vector<2x8x8xf32> -> vector<2x8x8xf32>
    "tpu.trace_stop"() : () -> ()
    %cst_29 = arith.constant dense<0xFF800000> : vector<2x8xf32>
    %92 = vector.multi_reduction <maximumf>, %91, %cst_29 [2] : vector<2x8x8xf32> to vector<2x8xf32>
    %93 = vector.shape_cast %92 : vector<2x8xf32> to vector<2x8x1xf32>
    %94 = vector.broadcast %93 : vector<2x8x1xf32> to vector<2x8x8xf32>
    %95 = arith.subf %91, %94 : vector<2x8x8xf32>
    %96 = math.exp %95 : vector<2x8x8xf32>
    %cst_30 = arith.constant dense<0.000000e+00> : vector<2x8xf32>
    %97 = vector.multi_reduction <add>, %96, %cst_30 [2] : vector<2x8x8xf32> to vector<2x8xf32>
    %98 = vector.shape_cast %97 : vector<2x8xf32> to vector<2x8x1xf32>
    %99 = tpu.reciprocal %98 {approx = true} : vector<2x8x1xf32> -> vector<2x8x1xf32>
    %100 = vector.broadcast %99 : vector<2x8x1xf32> to vector<2x8x8xf32>
    %101 = arith.mulf %96, %100 : vector<2x8x8xf32>
    %102 = arith.truncf %101 : vector<2x8x8xf32> to vector<2x8x8xbf16>
    "tpu.trace_start"() <{level = 10 : i32, message = "bqk,bkd->bqd"}> : () -> ()
    %cst_31 = arith.constant dense<0.000000e+00> : vector<2x8x8xf32>
    %103 = tpu.matmul %102, %90, %cst_31 {dimension_numbers = #tpu.dot_dimension_numbers<[2], [1], [1], [2], [0, 0, 0, 1, 1, 2], [0], [0]>} : vector<2x8x8xbf16>, vector<2x8x8xbf16>, vector<2x8x8xf32> -> vector<2x8x8xf32>
    "tpu.trace_stop"() : () -> ()
    %104 = vector.shape_cast %103 : vector<2x8x8xf32> to vector<16x8xf32>
    %105 = arith.truncf %104 : vector<16x8xf32> to vector<16x8xbf16>
    %106 = vector.extract_strided_slice %35 {offsets = [16, 0], sizes = [8, 64], strides = [1, 1]} : vector<64x64xbf16> to vector<8x64xbf16>
    %cst_32 = arith.constant dense<0.000000e+00> : vector<16x64xf32>
    %107 = tpu.matmul %105, %106, %cst_32 {dimension_numbers = #tpu.dot_dimension_numbers<[1], [0], [0], [1], [0, 0, 1, 1], [], []>} : vector<16x8xbf16>, vector<8x64xbf16>, vector<16x64xf32> -> vector<16x64xf32>
    %108 = arith.addf %84, %107 : vector<16x64xf32>
    %109 = vector.extract_strided_slice %34 {offsets = [0, 0, 24], sizes = [2, 8, 8], strides = [1, 1, 1]} : vector<2x8x192xf32> to vector<2x8x8xf32>
    %110 = arith.truncf %109 : vector<2x8x8xf32> to vector<2x8x8xbf16>
    %111 = vector.extract_strided_slice %34 {offsets = [0, 0, 88], sizes = [2, 8, 8], strides = [1, 1, 1]} : vector<2x8x192xf32> to vector<2x8x8xf32>
    %112 = arith.truncf %111 : vector<2x8x8xf32> to vector<2x8x8xbf16>
    %113 = vector.extract_strided_slice %34 {offsets = [0, 0, 152], sizes = [2, 8, 8], strides = [1, 1, 1]} : vector<2x8x192xf32> to vector<2x8x8xf32>
    %114 = arith.truncf %113 : vector<2x8x8xf32> to vector<2x8x8xbf16>
    "tpu.trace_start"() <{level = 10 : i32, message = "bqd,bkd->bqk"}> : () -> ()
    %cst_33 = arith.constant dense<0.000000e+00> : vector<2x8x8xf32>
    %115 = tpu.matmul %110, %112, %cst_33 {dimension_numbers = #tpu.dot_dimension_numbers<[2], [2], [1], [1], [0, 0, 0, 1, 1, 1], [0], [0]>} : vector<2x8x8xbf16>, vector<2x8x8xbf16>, vector<2x8x8xf32> -> vector<2x8x8xf32>
    "tpu.trace_stop"() : () -> ()
    %cst_34 = arith.constant dense<0xFF800000> : vector<2x8xf32>
    %116 = vector.multi_reduction <maximumf>, %115, %cst_34 [2] : vector<2x8x8xf32> to vector<2x8xf32>
    %117 = vector.shape_cast %116 : vector<2x8xf32> to vector<2x8x1xf32>
    %118 = vector.broadcast %117 : vector<2x8x1xf32> to vector<2x8x8xf32>
    %119 = arith.subf %115, %118 : vector<2x8x8xf32>
    %120 = math.exp %119 : vector<2x8x8xf32>
    %cst_35 = arith.constant dense<0.000000e+00> : vector<2x8xf32>
    %121 = vector.multi_reduction <add>, %120, %cst_35 [2] : vector<2x8x8xf32> to vector<2x8xf32>
    %122 = vector.shape_cast %121 : vector<2x8xf32> to vector<2x8x1xf32>
    %123 = tpu.reciprocal %122 {approx = true} : vector<2x8x1xf32> -> vector<2x8x1xf32>
    %124 = vector.broadcast %123 : vector<2x8x1xf32> to vector<2x8x8xf32>
    %125 = arith.mulf %120, %124 : vector<2x8x8xf32>
    %126 = arith.truncf %125 : vector<2x8x8xf32> to vector<2x8x8xbf16>
    "tpu.trace_start"() <{level = 10 : i32, message = "bqk,bkd->bqd"}> : () -> ()
    %cst_36 = arith.constant dense<0.000000e+00> : vector<2x8x8xf32>
    %127 = tpu.matmul %126, %114, %cst_36 {dimension_numbers = #tpu.dot_dimension_numbers<[2], [1], [1], [2], [0, 0, 0, 1, 1, 2], [0], [0]>} : vector<2x8x8xbf16>, vector<2x8x8xbf16>, vector<2x8x8xf32> -> vector<2x8x8xf32>
    "tpu.trace_stop"() : () -> ()
    %128 = vector.shape_cast %127 : vector<2x8x8xf32> to vector<16x8xf32>
    %129 = arith.truncf %128 : vector<16x8xf32> to vector<16x8xbf16>
    %130 = vector.extract_strided_slice %35 {offsets = [24, 0], sizes = [8, 64], strides = [1, 1]} : vector<64x64xbf16> to vector<8x64xbf16>
    %cst_37 = arith.constant dense<0.000000e+00> : vector<16x64xf32>
    %131 = tpu.matmul %129, %130, %cst_37 {dimension_numbers = #tpu.dot_dimension_numbers<[1], [0], [0], [1], [0, 0, 1, 1], [], []>} : vector<16x8xbf16>, vector<8x64xbf16>, vector<16x64xf32> -> vector<16x64xf32>
    %132 = arith.addf %108, %131 : vector<16x64xf32>
    %133 = vector.extract_strided_slice %34 {offsets = [0, 0, 32], sizes = [2, 8, 8], strides = [1, 1, 1]} : vector<2x8x192xf32> to vector<2x8x8xf32>
    %134 = arith.truncf %133 : vector<2x8x8xf32> to vector<2x8x8xbf16>
    %135 = vector.extract_strided_slice %34 {offsets = [0, 0, 96], sizes = [2, 8, 8], strides = [1, 1, 1]} : vector<2x8x192xf32> to vector<2x8x8xf32>
    %136 = arith.truncf %135 : vector<2x8x8xf32> to vector<2x8x8xbf16>
    %137 = vector.extract_strided_slice %34 {offsets = [0, 0, 160], sizes = [2, 8, 8], strides = [1, 1, 1]} : vector<2x8x192xf32> to vector<2x8x8xf32>
    %138 = arith.truncf %137 : vector<2x8x8xf32> to vector<2x8x8xbf16>
    "tpu.trace_start"() <{level = 10 : i32, message = "bqd,bkd->bqk"}> : () -> ()
    %cst_38 = arith.constant dense<0.000000e+00> : vector<2x8x8xf32>
    %139 = tpu.matmul %134, %136, %cst_38 {dimension_numbers = #tpu.dot_dimension_numbers<[2], [2], [1], [1], [0, 0, 0, 1, 1, 1], [0], [0]>} : vector<2x8x8xbf16>, vector<2x8x8xbf16>, vector<2x8x8xf32> -> vector<2x8x8xf32>
    "tpu.trace_stop"() : () -> ()
    %cst_39 = arith.constant dense<0xFF800000> : vector<2x8xf32>
    %140 = vector.multi_reduction <maximumf>, %139, %cst_39 [2] : vector<2x8x8xf32> to vector<2x8xf32>
    %141 = vector.shape_cast %140 : vector<2x8xf32> to vector<2x8x1xf32>
    %142 = vector.broadcast %141 : vector<2x8x1xf32> to vector<2x8x8xf32>
    %143 = arith.subf %139, %142 : vector<2x8x8xf32>
    %144 = math.exp %143 : vector<2x8x8xf32>
    %cst_40 = arith.constant dense<0.000000e+00> : vector<2x8xf32>
    %145 = vector.multi_reduction <add>, %144, %cst_40 [2] : vector<2x8x8xf32> to vector<2x8xf32>
    %146 = vector.shape_cast %145 : vector<2x8xf32> to vector<2x8x1xf32>
    %147 = tpu.reciprocal %146 {approx = true} : vector<2x8x1xf32> -> vector<2x8x1xf32>
    %148 = vector.broadcast %147 : vector<2x8x1xf32> to vector<2x8x8xf32>
    %149 = arith.mulf %144, %148 : vector<2x8x8xf32>
    %150 = arith.truncf %149 : vector<2x8x8xf32> to vector<2x8x8xbf16>
    "tpu.trace_start"() <{level = 10 : i32, message = "bqk,bkd->bqd"}> : () -> ()
    %cst_41 = arith.constant dense<0.000000e+00> : vector<2x8x8xf32>
    %151 = tpu.matmul %150, %138, %cst_41 {dimension_numbers = #tpu.dot_dimension_numbers<[2], [1], [1], [2], [0, 0, 0, 1, 1, 2], [0], [0]>} : vector<2x8x8xbf16>, vector<2x8x8xbf16>, vector<2x8x8xf32> -> vector<2x8x8xf32>
    "tpu.trace_stop"() : () -> ()
    %152 = vector.shape_cast %151 : vector<2x8x8xf32> to vector<16x8xf32>
    %153 = arith.truncf %152 : vector<16x8xf32> to vector<16x8xbf16>
    %154 = vector.extract_strided_slice %35 {offsets = [32, 0], sizes = [8, 64], strides = [1, 1]} : vector<64x64xbf16> to vector<8x64xbf16>
    %cst_42 = arith.constant dense<0.000000e+00> : vector<16x64xf32>
    %155 = tpu.matmul %153, %154, %cst_42 {dimension_numbers = #tpu.dot_dimension_numbers<[1], [0], [0], [1], [0, 0, 1, 1], [], []>} : vector<16x8xbf16>, vector<8x64xbf16>, vector<16x64xf32> -> vector<16x64xf32>
    %156 = arith.addf %132, %155 : vector<16x64xf32>
    %157 = vector.extract_strided_slice %34 {offsets = [0, 0, 40], sizes = [2, 8, 8], strides = [1, 1, 1]} : vector<2x8x192xf32> to vector<2x8x8xf32>
    %158 = arith.truncf %157 : vector<2x8x8xf32> to vector<2x8x8xbf16>
    %159 = vector.extract_strided_slice %34 {offsets = [0, 0, 104], sizes = [2, 8, 8], strides = [1, 1, 1]} : vector<2x8x192xf32> to vector<2x8x8xf32>
    %160 = arith.truncf %159 : vector<2x8x8xf32> to vector<2x8x8xbf16>
    %161 = vector.extract_strided_slice %34 {offsets = [0, 0, 168], sizes = [2, 8, 8], strides = [1, 1, 1]} : vector<2x8x192xf32> to vector<2x8x8xf32>
    %162 = arith.truncf %161 : vector<2x8x8xf32> to vector<2x8x8xbf16>
    "tpu.trace_start"() <{level = 10 : i32, message = "bqd,bkd->bqk"}> : () -> ()
    %cst_43 = arith.constant dense<0.000000e+00> : vector<2x8x8xf32>
    %163 = tpu.matmul %158, %160, %cst_43 {dimension_numbers = #tpu.dot_dimension_numbers<[2], [2], [1], [1], [0, 0, 0, 1, 1, 1], [0], [0]>} : vector<2x8x8xbf16>, vector<2x8x8xbf16>, vector<2x8x8xf32> -> vector<2x8x8xf32>
    "tpu.trace_stop"() : () -> ()
    %cst_44 = arith.constant dense<0xFF800000> : vector<2x8xf32>
    %164 = vector.multi_reduction <maximumf>, %163, %cst_44 [2] : vector<2x8x8xf32> to vector<2x8xf32>
    %165 = vector.shape_cast %164 : vector<2x8xf32> to vector<2x8x1xf32>
    %166 = vector.broadcast %165 : vector<2x8x1xf32> to vector<2x8x8xf32>
    %167 = arith.subf %163, %166 : vector<2x8x8xf32>
    %168 = math.exp %167 : vector<2x8x8xf32>
    %cst_45 = arith.constant dense<0.000000e+00> : vector<2x8xf32>
    %169 = vector.multi_reduction <add>, %168, %cst_45 [2] : vector<2x8x8xf32> to vector<2x8xf32>
    %170 = vector.shape_cast %169 : vector<2x8xf32> to vector<2x8x1xf32>
    %171 = tpu.reciprocal %170 {approx = true} : vector<2x8x1xf32> -> vector<2x8x1xf32>
    %172 = vector.broadcast %171 : vector<2x8x1xf32> to vector<2x8x8xf32>
    %173 = arith.mulf %168, %172 : vector<2x8x8xf32>
    %174 = arith.truncf %173 : vector<2x8x8xf32> to vector<2x8x8xbf16>
    "tpu.trace_start"() <{level = 10 : i32, message = "bqk,bkd->bqd"}> : () -> ()
    %cst_46 = arith.constant dense<0.000000e+00> : vector<2x8x8xf32>
    %175 = tpu.matmul %174, %162, %cst_46 {dimension_numbers = #tpu.dot_dimension_numbers<[2], [1], [1], [2], [0, 0, 0, 1, 1, 2], [0], [0]>} : vector<2x8x8xbf16>, vector<2x8x8xbf16>, vector<2x8x8xf32> -> vector<2x8x8xf32>
    "tpu.trace_stop"() : () -> ()
    %176 = vector.shape_cast %175 : vector<2x8x8xf32> to vector<16x8xf32>
    %177 = arith.truncf %176 : vector<16x8xf32> to vector<16x8xbf16>
    %178 = vector.extract_strided_slice %35 {offsets = [40, 0], sizes = [8, 64], strides = [1, 1]} : vector<64x64xbf16> to vector<8x64xbf16>
    %cst_47 = arith.constant dense<0.000000e+00> : vector<16x64xf32>
    %179 = tpu.matmul %177, %178, %cst_47 {dimension_numbers = #tpu.dot_dimension_numbers<[1], [0], [0], [1], [0, 0, 1, 1], [], []>} : vector<16x8xbf16>, vector<8x64xbf16>, vector<16x64xf32> -> vector<16x64xf32>
    %180 = arith.addf %156, %179 : vector<16x64xf32>
    %181 = vector.extract_strided_slice %34 {offsets = [0, 0, 48], sizes = [2, 8, 8], strides = [1, 1, 1]} : vector<2x8x192xf32> to vector<2x8x8xf32>
    %182 = arith.truncf %181 : vector<2x8x8xf32> to vector<2x8x8xbf16>
    %183 = vector.extract_strided_slice %34 {offsets = [0, 0, 112], sizes = [2, 8, 8], strides = [1, 1, 1]} : vector<2x8x192xf32> to vector<2x8x8xf32>
    %184 = arith.truncf %183 : vector<2x8x8xf32> to vector<2x8x8xbf16>
    %185 = vector.extract_strided_slice %34 {offsets = [0, 0, 176], sizes = [2, 8, 8], strides = [1, 1, 1]} : vector<2x8x192xf32> to vector<2x8x8xf32>
    %186 = arith.truncf %185 : vector<2x8x8xf32> to vector<2x8x8xbf16>
    "tpu.trace_start"() <{level = 10 : i32, message = "bqd,bkd->bqk"}> : () -> ()
    %cst_48 = arith.constant dense<0.000000e+00> : vector<2x8x8xf32>
    %187 = tpu.matmul %182, %184, %cst_48 {dimension_numbers = #tpu.dot_dimension_numbers<[2], [2], [1], [1], [0, 0, 0, 1, 1, 1], [0], [0]>} : vector<2x8x8xbf16>, vector<2x8x8xbf16>, vector<2x8x8xf32> -> vector<2x8x8xf32>
    "tpu.trace_stop"() : () -> ()
    %cst_49 = arith.constant dense<0xFF800000> : vector<2x8xf32>
    %188 = vector.multi_reduction <maximumf>, %187, %cst_49 [2] : vector<2x8x8xf32> to vector<2x8xf32>
    %189 = vector.shape_cast %188 : vector<2x8xf32> to vector<2x8x1xf32>
    %190 = vector.broadcast %189 : vector<2x8x1xf32> to vector<2x8x8xf32>
    %191 = arith.subf %187, %190 : vector<2x8x8xf32>
    %192 = math.exp %191 : vector<2x8x8xf32>
    %cst_50 = arith.constant dense<0.000000e+00> : vector<2x8xf32>
    %193 = vector.multi_reduction <add>, %192, %cst_50 [2] : vector<2x8x8xf32> to vector<2x8xf32>
    %194 = vector.shape_cast %193 : vector<2x8xf32> to vector<2x8x1xf32>
    %195 = tpu.reciprocal %194 {approx = true} : vector<2x8x1xf32> -> vector<2x8x1xf32>
    %196 = vector.broadcast %195 : vector<2x8x1xf32> to vector<2x8x8xf32>
    %197 = arith.mulf %192, %196 : vector<2x8x8xf32>
    %198 = arith.truncf %197 : vector<2x8x8xf32> to vector<2x8x8xbf16>
    "tpu.trace_start"() <{level = 10 : i32, message = "bqk,bkd->bqd"}> : () -> ()
    %cst_51 = arith.constant dense<0.000000e+00> : vector<2x8x8xf32>
    %199 = tpu.matmul %198, %186, %cst_51 {dimension_numbers = #tpu.dot_dimension_numbers<[2], [1], [1], [2], [0, 0, 0, 1, 1, 2], [0], [0]>} : vector<2x8x8xbf16>, vector<2x8x8xbf16>, vector<2x8x8xf32> -> vector<2x8x8xf32>
    "tpu.trace_stop"() : () -> ()
    %200 = vector.shape_cast %199 : vector<2x8x8xf32> to vector<16x8xf32>
    %201 = arith.truncf %200 : vector<16x8xf32> to vector<16x8xbf16>
    %202 = vector.extract_strided_slice %35 {offsets = [48, 0], sizes = [8, 64], strides = [1, 1]} : vector<64x64xbf16> to vector<8x64xbf16>
    %cst_52 = arith.constant dense<0.000000e+00> : vector<16x64xf32>
    %203 = tpu.matmul %201, %202, %cst_52 {dimension_numbers = #tpu.dot_dimension_numbers<[1], [0], [0], [1], [0, 0, 1, 1], [], []>} : vector<16x8xbf16>, vector<8x64xbf16>, vector<16x64xf32> -> vector<16x64xf32>
    %204 = arith.addf %180, %203 : vector<16x64xf32>
    %205 = vector.extract_strided_slice %34 {offsets = [0, 0, 56], sizes = [2, 8, 8], strides = [1, 1, 1]} : vector<2x8x192xf32> to vector<2x8x8xf32>
    %206 = arith.truncf %205 : vector<2x8x8xf32> to vector<2x8x8xbf16>
    %207 = vector.extract_strided_slice %34 {offsets = [0, 0, 120], sizes = [2, 8, 8], strides = [1, 1, 1]} : vector<2x8x192xf32> to vector<2x8x8xf32>
    %208 = arith.truncf %207 : vector<2x8x8xf32> to vector<2x8x8xbf16>
    %209 = vector.extract_strided_slice %34 {offsets = [0, 0, 184], sizes = [2, 8, 8], strides = [1, 1, 1]} : vector<2x8x192xf32> to vector<2x8x8xf32>
    %210 = arith.truncf %209 : vector<2x8x8xf32> to vector<2x8x8xbf16>
    "tpu.trace_start"() <{level = 10 : i32, message = "bqd,bkd->bqk"}> : () -> ()
    %cst_53 = arith.constant dense<0.000000e+00> : vector<2x8x8xf32>
    %211 = tpu.matmul %206, %208, %cst_53 {dimension_numbers = #tpu.dot_dimension_numbers<[2], [2], [1], [1], [0, 0, 0, 1, 1, 1], [0], [0]>} : vector<2x8x8xbf16>, vector<2x8x8xbf16>, vector<2x8x8xf32> -> vector<2x8x8xf32>
    "tpu.trace_stop"() : () -> ()
    %cst_54 = arith.constant dense<0xFF800000> : vector<2x8xf32>
    %212 = vector.multi_reduction <maximumf>, %211, %cst_54 [2] : vector<2x8x8xf32> to vector<2x8xf32>
    %213 = vector.shape_cast %212 : vector<2x8xf32> to vector<2x8x1xf32>
    %214 = vector.broadcast %213 : vector<2x8x1xf32> to vector<2x8x8xf32>
    %215 = arith.subf %211, %214 : vector<2x8x8xf32>
    %216 = math.exp %215 : vector<2x8x8xf32>
    %cst_55 = arith.constant dense<0.000000e+00> : vector<2x8xf32>
    %217 = vector.multi_reduction <add>, %216, %cst_55 [2] : vector<2x8x8xf32> to vector<2x8xf32>
    %218 = vector.shape_cast %217 : vector<2x8xf32> to vector<2x8x1xf32>
    %219 = tpu.reciprocal %218 {approx = true} : vector<2x8x1xf32> -> vector<2x8x1xf32>
    %220 = vector.broadcast %219 : vector<2x8x1xf32> to vector<2x8x8xf32>
    %221 = arith.mulf %216, %220 : vector<2x8x8xf32>
    %222 = arith.truncf %221 : vector<2x8x8xf32> to vector<2x8x8xbf16>
    "tpu.trace_start"() <{level = 10 : i32, message = "bqk,bkd->bqd"}> : () -> ()
    %cst_56 = arith.constant dense<0.000000e+00> : vector<2x8x8xf32>
    %223 = tpu.matmul %222, %210, %cst_56 {dimension_numbers = #tpu.dot_dimension_numbers<[2], [1], [1], [2], [0, 0, 0, 1, 1, 2], [0], [0]>} : vector<2x8x8xbf16>, vector<2x8x8xbf16>, vector<2x8x8xf32> -> vector<2x8x8xf32>
    "tpu.trace_stop"() : () -> ()
    %224 = vector.shape_cast %223 : vector<2x8x8xf32> to vector<16x8xf32>
    %225 = arith.truncf %224 : vector<16x8xf32> to vector<16x8xbf16>
    %226 = vector.extract_strided_slice %35 {offsets = [56, 0], sizes = [8, 64], strides = [1, 1]} : vector<64x64xbf16> to vector<8x64xbf16>
    %cst_57 = arith.constant dense<0.000000e+00> : vector<16x64xf32>
    %227 = tpu.matmul %225, %226, %cst_57 {dimension_numbers = #tpu.dot_dimension_numbers<[1], [0], [0], [1], [0, 0, 1, 1], [], []>} : vector<16x8xbf16>, vector<8x64xbf16>, vector<16x64xf32> -> vector<16x64xf32>
    %228 = arith.addf %204, %227 : vector<16x64xf32>
    %229 = arith.addf %27, %228 : vector<16x64xf32>
    %c0_58 = arith.constant 0 : index
    %c0_59 = arith.constant 0 : index
    %230 = vector.load %arg6[%c0_58, %c0_59] : memref<1x64xf32, #tpu.memory_space<vmem>>, vector<1x64xf32>
    %231 = vector.broadcast %230 : vector<1x64xf32> to vector<16x64xf32>
    %232 = arith.addf %229, %231 : vector<16x64xf32>
    %233 = arith.truncf %232 : vector<16x64xf32> to vector<16x64xbf16>
    %c0_60 = arith.constant 0 : index
    %c0_61 = arith.constant 0 : index
    %234 = vector.load %arg7[%c0_60, %c0_61] : memref<64x192xbf16, #tpu.memory_space<vmem>>, vector<64x192xbf16>
    %cst_62 = arith.constant dense<0.000000e+00> : vector<16x192xf32>
    %235 = tpu.matmul %233, %234, %cst_62 {dimension_numbers = #tpu.dot_dimension_numbers<[1], [0], [0], [1], [0, 0, 1, 1], [], []>} : vector<16x64xbf16>, vector<64x192xbf16>, vector<16x192xf32> -> vector<16x192xf32>
    %c0_63 = arith.constant 0 : index
    %c0_64 = arith.constant 0 : index
    %236 = vector.load %arg10[%c0_63, %c0_64] : memref<1x192xf32, #tpu.memory_space<vmem>>, vector<1x192xf32>
    %237 = vector.broadcast %236 : vector<1x192xf32> to vector<16x192xf32>
    %238 = arith.addf %235, %237 : vector<16x192xf32>
    %239 = vector.shape_cast %238 : vector<16x192xf32> to vector<2x8x192xf32>
    %c0_65 = arith.constant 0 : index
    %c0_66 = arith.constant 0 : index
    %240 = vector.load %arg8[%c0_65, %c0_66] : memref<64x192xbf16, #tpu.memory_space<vmem>>, vector<64x192xbf16>
    %cst_67 = arith.constant dense<0.000000e+00> : vector<16x192xf32>
    %241 = tpu.matmul %233, %240, %cst_67 {dimension_numbers = #tpu.dot_dimension_numbers<[1], [0], [0], [1], [0, 0, 1, 1], [], []>} : vector<16x64xbf16>, vector<64x192xbf16>, vector<16x192xf32> -> vector<16x192xf32>
    %242 = vector.shape_cast %241 : vector<16x192xf32> to vector<2x8x192xf32>
    %c0_68 = arith.constant 0 : index
    %c0_69 = arith.constant 0 : index
    %243 = vector.load %arg9[%c0_68, %c0_69] : memref<64x192xbf16, #tpu.memory_space<vmem>>, vector<64x192xbf16>
    %c0_70 = arith.constant 0 : index
    %c0_71 = arith.constant 0 : index
    %244 = vector.load %arg11[%c0_70, %c0_71] : memref<1x64xf32, #tpu.memory_space<vmem>>, vector<1x64xf32>
    %cst_72 = arith.constant 0.000000e+00 : f32
    %245 = vector.broadcast %cst_72 : f32 to vector<2x64xf32>
    %246 = vector.extract_strided_slice %239 {offsets = [0, 0, 0], sizes = [2, 1, 192], strides = [1, 1, 1]} : vector<2x8x192xf32> to vector<2x1x192xf32>
    %247 = vector.shape_cast %246 : vector<2x1x192xf32> to vector<2x192xf32>
    %248 = vector.extract_strided_slice %242 {offsets = [0, 7, 0], sizes = [2, 1, 192], strides = [1, 1, 1]} : vector<2x8x192xf32> to vector<2x1x192xf32>
    %249 = vector.shape_cast %248 : vector<2x1x192xf32> to vector<2x192xf32>
    %250 = arith.addf %247, %249 : vector<2x192xf32>
    %251 = arith.truncf %245 : vector<2x64xf32> to vector<2x64xbf16>
    %cst_73 = arith.constant dense<0.000000e+00> : vector<2x192xf32>
    %252 = tpu.matmul %251, %243, %cst_73 {dimension_numbers = #tpu.dot_dimension_numbers<[1], [0], [0], [1], [0, 0, 1, 1], [], []>} : vector<2x64xbf16>, vector<64x192xbf16>, vector<2x192xf32> -> vector<2x192xf32>
    %253 = vector.extract_strided_slice %250 {offsets = [0, 0], sizes = [2, 128], strides = [1, 1]} : vector<2x192xf32> to vector<2x128xf32>
    %254 = vector.extract_strided_slice %252 {offsets = [0, 0], sizes = [2, 128], strides = [1, 1]} : vector<2x192xf32> to vector<2x128xf32>
    %255 = arith.addf %253, %254 : vector<2x128xf32>
    %256 = arith.negf %255 : vector<2x128xf32>
    %257 = math.exp %256 : vector<2x128xf32>
    %cst_74 = arith.constant 1.000000e+00 : f32
    %258 = vector.broadcast %cst_74 : f32 to vector<2x128xf32>
    %259 = arith.addf %258, %257 : vector<2x128xf32>
    %260 = arith.divf %258, %259 : vector<2x128xf32>
    %261 = vector.extract_strided_slice %260 {offsets = [0, 0], sizes = [2, 64], strides = [1, 1]} : vector<2x128xf32> to vector<2x64xf32>
    %262 = vector.extract_strided_slice %260 {offsets = [0, 64], sizes = [2, 64], strides = [1, 1]} : vector<2x128xf32> to vector<2x64xf32>
    %263 = vector.extract_strided_slice %250 {offsets = [0, 128], sizes = [2, 64], strides = [1, 1]} : vector<2x192xf32> to vector<2x64xf32>
    %264 = vector.extract_strided_slice %252 {offsets = [0, 128], sizes = [2, 64], strides = [1, 1]} : vector<2x192xf32> to vector<2x64xf32>
    %265 = vector.broadcast %244 : vector<1x64xf32> to vector<2x64xf32>
    %266 = arith.addf %264, %265 : vector<2x64xf32>
    %267 = arith.mulf %261, %266 : vector<2x64xf32>
    %268 = arith.addf %263, %267 : vector<2x64xf32>
    %269 = math.tanh %268 : vector<2x64xf32>
    %270 = arith.subf %245, %269 : vector<2x64xf32>
    %271 = arith.mulf %262, %270 : vector<2x64xf32>
    %272 = arith.addf %269, %271 : vector<2x64xf32>
    %c0_75 = arith.constant 0 : index
    %c0_76 = arith.constant 0 : index
    %273 = vector.load %arg20[%c0_75, %c0_76] : memref<16x64xf32, #tpu.memory_space<vmem>>, vector<2x64xf32>
    tpu.vector_store %arg20[%c0_75, %c0_76], %272 {strides = array<i32>} : memref<16x64xf32, #tpu.memory_space<vmem>>, vector<2x64xf32>,
    %274 = vector.extract_strided_slice %239 {offsets = [0, 1, 0], sizes = [2, 1, 192], strides = [1, 1, 1]} : vector<2x8x192xf32> to vector<2x1x192xf32>
    %275 = vector.shape_cast %274 : vector<2x1x192xf32> to vector<2x192xf32>
    %276 = vector.extract_strided_slice %242 {offsets = [0, 6, 0], sizes = [2, 1, 192], strides = [1, 1, 1]} : vector<2x8x192xf32> to vector<2x1x192xf32>
    %277 = vector.shape_cast %276 : vector<2x1x192xf32> to vector<2x192xf32>
    %278 = arith.addf %275, %277 : vector<2x192xf32>
    %279 = arith.truncf %272 : vector<2x64xf32> to vector<2x64xbf16>
    %cst_77 = arith.constant dense<0.000000e+00> : vector<2x192xf32>
    %280 = tpu.matmul %279, %243, %cst_77 {dimension_numbers = #tpu.dot_dimension_numbers<[1], [0], [0], [1], [0, 0, 1, 1], [], []>} : vector<2x64xbf16>, vector<64x192xbf16>, vector<2x192xf32> -> vector<2x192xf32>
    %281 = vector.extract_strided_slice %278 {offsets = [0, 0], sizes = [2, 128], strides = [1, 1]} : vector<2x192xf32> to vector<2x128xf32>
    %282 = vector.extract_strided_slice %280 {offsets = [0, 0], sizes = [2, 128], strides = [1, 1]} : vector<2x192xf32> to vector<2x128xf32>
    %283 = arith.addf %281, %282 : vector<2x128xf32>
    %284 = arith.negf %283 : vector<2x128xf32>
    %285 = math.exp %284 : vector<2x128xf32>
    %cst_78 = arith.constant 1.000000e+00 : f32
    %286 = vector.broadcast %cst_78 : f32 to vector<2x128xf32>
    %287 = arith.addf %286, %285 : vector<2x128xf32>
    %288 = arith.divf %286, %287 : vector<2x128xf32>
    %289 = vector.extract_strided_slice %288 {offsets = [0, 0], sizes = [2, 64], strides = [1, 1]} : vector<2x128xf32> to vector<2x64xf32>
    %290 = vector.extract_strided_slice %288 {offsets = [0, 64], sizes = [2, 64], strides = [1, 1]} : vector<2x128xf32> to vector<2x64xf32>
    %291 = vector.extract_strided_slice %278 {offsets = [0, 128], sizes = [2, 64], strides = [1, 1]} : vector<2x192xf32> to vector<2x64xf32>
    %292 = vector.extract_strided_slice %280 {offsets = [0, 128], sizes = [2, 64], strides = [1, 1]} : vector<2x192xf32> to vector<2x64xf32>
    %293 = vector.broadcast %244 : vector<1x64xf32> to vector<2x64xf32>
    %294 = arith.addf %292, %293 : vector<2x64xf32>
    %295 = arith.mulf %289, %294 : vector<2x64xf32>
    %296 = arith.addf %291, %295 : vector<2x64xf32>
    %297 = math.tanh %296 : vector<2x64xf32>
    %298 = arith.subf %272, %297 : vector<2x64xf32>
    %299 = arith.mulf %290, %298 : vector<2x64xf32>
    %300 = arith.addf %297, %299 : vector<2x64xf32>
    %c2 = arith.constant 2 : index
    %c0_79 = arith.constant 0 : index
    %301 = vector.load %arg20[%c2, %c0_79] : memref<16x64xf32, #tpu.memory_space<vmem>>, vector<2x64xf32>
    tpu.vector_store %arg20[%c2, %c0_79], %300 {strides = array<i32>} : memref<16x64xf32, #tpu.memory_space<vmem>>, vector<2x64xf32>,
    %302 = vector.extract_strided_slice %239 {offsets = [0, 2, 0], sizes = [2, 1, 192], strides = [1, 1, 1]} : vector<2x8x192xf32> to vector<2x1x192xf32>
    %303 = vector.shape_cast %302 : vector<2x1x192xf32> to vector<2x192xf32>
    %304 = vector.extract_strided_slice %242 {offsets = [0, 5, 0], sizes = [2, 1, 192], strides = [1, 1, 1]} : vector<2x8x192xf32> to vector<2x1x192xf32>
    %305 = vector.shape_cast %304 : vector<2x1x192xf32> to vector<2x192xf32>
    %306 = arith.addf %303, %305 : vector<2x192xf32>
    %307 = arith.truncf %300 : vector<2x64xf32> to vector<2x64xbf16>
    %cst_80 = arith.constant dense<0.000000e+00> : vector<2x192xf32>
    %308 = tpu.matmul %307, %243, %cst_80 {dimension_numbers = #tpu.dot_dimension_numbers<[1], [0], [0], [1], [0, 0, 1, 1], [], []>} : vector<2x64xbf16>, vector<64x192xbf16>, vector<2x192xf32> -> vector<2x192xf32>
    %309 = vector.extract_strided_slice %306 {offsets = [0, 0], sizes = [2, 128], strides = [1, 1]} : vector<2x192xf32> to vector<2x128xf32>
    %310 = vector.extract_strided_slice %308 {offsets = [0, 0], sizes = [2, 128], strides = [1, 1]} : vector<2x192xf32> to vector<2x128xf32>
    %311 = arith.addf %309, %310 : vector<2x128xf32>
    %312 = arith.negf %311 : vector<2x128xf32>
    %313 = math.exp %312 : vector<2x128xf32>
    %cst_81 = arith.constant 1.000000e+00 : f32
    %314 = vector.broadcast %cst_81 : f32 to vector<2x128xf32>
    %315 = arith.addf %314, %313 : vector<2x128xf32>
    %316 = arith.divf %314, %315 : vector<2x128xf32>
    %317 = vector.extract_strided_slice %316 {offsets = [0, 0], sizes = [2, 64], strides = [1, 1]} : vector<2x128xf32> to vector<2x64xf32>
    %318 = vector.extract_strided_slice %316 {offsets = [0, 64], sizes = [2, 64], strides = [1, 1]} : vector<2x128xf32> to vector<2x64xf32>
    %319 = vector.extract_strided_slice %306 {offsets = [0, 128], sizes = [2, 64], strides = [1, 1]} : vector<2x192xf32> to vector<2x64xf32>
    %320 = vector.extract_strided_slice %308 {offsets = [0, 128], sizes = [2, 64], strides = [1, 1]} : vector<2x192xf32> to vector<2x64xf32>
    %321 = vector.broadcast %244 : vector<1x64xf32> to vector<2x64xf32>
    %322 = arith.addf %320, %321 : vector<2x64xf32>
    %323 = arith.mulf %317, %322 : vector<2x64xf32>
    %324 = arith.addf %319, %323 : vector<2x64xf32>
    %325 = math.tanh %324 : vector<2x64xf32>
    %326 = arith.subf %300, %325 : vector<2x64xf32>
    %327 = arith.mulf %318, %326 : vector<2x64xf32>
    %328 = arith.addf %325, %327 : vector<2x64xf32>
    %c4 = arith.constant 4 : index
    %c0_82 = arith.constant 0 : index
    %329 = vector.load %arg20[%c4, %c0_82] : memref<16x64xf32, #tpu.memory_space<vmem>>, vector<2x64xf32>
    tpu.vector_store %arg20[%c4, %c0_82], %328 {strides = array<i32>} : memref<16x64xf32, #tpu.memory_space<vmem>>, vector<2x64xf32>,
    %330 = vector.extract_strided_slice %239 {offsets = [0, 3, 0], sizes = [2, 1, 192], strides = [1, 1, 1]} : vector<2x8x192xf32> to vector<2x1x192xf32>
    %331 = vector.shape_cast %330 : vector<2x1x192xf32> to vector<2x192xf32>
    %332 = vector.extract_strided_slice %242 {offsets = [0, 4, 0], sizes = [2, 1, 192], strides = [1, 1, 1]} : vector<2x8x192xf32> to vector<2x1x192xf32>
    %333 = vector.shape_cast %332 : vector<2x1x192xf32> to vector<2x192xf32>
    %334 = arith.addf %331, %333 : vector<2x192xf32>
    %335 = arith.truncf %328 : vector<2x64xf32> to vector<2x64xbf16>
    %cst_83 = arith.constant dense<0.000000e+00> : vector<2x192xf32>
    %336 = tpu.matmul %335, %243, %cst_83 {dimension_numbers = #tpu.dot_dimension_numbers<[1], [0], [0], [1], [0, 0, 1, 1], [], []>} : vector<2x64xbf16>, vector<64x192xbf16>, vector<2x192xf32> -> vector<2x192xf32>
    %337 = vector.extract_strided_slice %334 {offsets = [0, 0], sizes = [2, 128], strides = [1, 1]} : vector<2x192xf32> to vector<2x128xf32>
    %338 = vector.extract_strided_slice %336 {offsets = [0, 0], sizes = [2, 128], strides = [1, 1]} : vector<2x192xf32> to vector<2x128xf32>
    %339 = arith.addf %337, %338 : vector<2x128xf32>
    %340 = arith.negf %339 : vector<2x128xf32>
    %341 = math.exp %340 : vector<2x128xf32>
    %cst_84 = arith.constant 1.000000e+00 : f32
    %342 = vector.broadcast %cst_84 : f32 to vector<2x128xf32>
    %343 = arith.addf %342, %341 : vector<2x128xf32>
    %344 = arith.divf %342, %343 : vector<2x128xf32>
    %345 = vector.extract_strided_slice %344 {offsets = [0, 0], sizes = [2, 64], strides = [1, 1]} : vector<2x128xf32> to vector<2x64xf32>
    %346 = vector.extract_strided_slice %344 {offsets = [0, 64], sizes = [2, 64], strides = [1, 1]} : vector<2x128xf32> to vector<2x64xf32>
    %347 = vector.extract_strided_slice %334 {offsets = [0, 128], sizes = [2, 64], strides = [1, 1]} : vector<2x192xf32> to vector<2x64xf32>
    %348 = vector.extract_strided_slice %336 {offsets = [0, 128], sizes = [2, 64], strides = [1, 1]} : vector<2x192xf32> to vector<2x64xf32>
    %349 = vector.broadcast %244 : vector<1x64xf32> to vector<2x64xf32>
    %350 = arith.addf %348, %349 : vector<2x64xf32>
    %351 = arith.mulf %345, %350 : vector<2x64xf32>
    %352 = arith.addf %347, %351 : vector<2x64xf32>
    %353 = math.tanh %352 : vector<2x64xf32>
    %354 = arith.subf %328, %353 : vector<2x64xf32>
    %355 = arith.mulf %346, %354 : vector<2x64xf32>
    %356 = arith.addf %353, %355 : vector<2x64xf32>
    %c6 = arith.constant 6 : index
    %c0_85 = arith.constant 0 : index
    %357 = vector.load %arg20[%c6, %c0_85] : memref<16x64xf32, #tpu.memory_space<vmem>>, vector<2x64xf32>
    tpu.vector_store %arg20[%c6, %c0_85], %356 {strides = array<i32>} : memref<16x64xf32, #tpu.memory_space<vmem>>, vector<2x64xf32>,
    %358 = vector.extract_strided_slice %239 {offsets = [0, 4, 0], sizes = [2, 1, 192], strides = [1, 1, 1]} : vector<2x8x192xf32> to vector<2x1x192xf32>
    %359 = vector.shape_cast %358 : vector<2x1x192xf32> to vector<2x192xf32>
    %360 = vector.extract_strided_slice %242 {offsets = [0, 3, 0], sizes = [2, 1, 192], strides = [1, 1, 1]} : vector<2x8x192xf32> to vector<2x1x192xf32>
    %361 = vector.shape_cast %360 : vector<2x1x192xf32> to vector<2x192xf32>
    %362 = arith.addf %359, %361 : vector<2x192xf32>
    %363 = arith.truncf %356 : vector<2x64xf32> to vector<2x64xbf16>
    %cst_86 = arith.constant dense<0.000000e+00> : vector<2x192xf32>
    %364 = tpu.matmul %363, %243, %cst_86 {dimension_numbers = #tpu.dot_dimension_numbers<[1], [0], [0], [1], [0, 0, 1, 1], [], []>} : vector<2x64xbf16>, vector<64x192xbf16>, vector<2x192xf32> -> vector<2x192xf32>
    %365 = vector.extract_strided_slice %362 {offsets = [0, 0], sizes = [2, 128], strides = [1, 1]} : vector<2x192xf32> to vector<2x128xf32>
    %366 = vector.extract_strided_slice %364 {offsets = [0, 0], sizes = [2, 128], strides = [1, 1]} : vector<2x192xf32> to vector<2x128xf32>
    %367 = arith.addf %365, %366 : vector<2x128xf32>
    %368 = arith.negf %367 : vector<2x128xf32>
    %369 = math.exp %368 : vector<2x128xf32>
    %cst_87 = arith.constant 1.000000e+00 : f32
    %370 = vector.broadcast %cst_87 : f32 to vector<2x128xf32>
    %371 = arith.addf %370, %369 : vector<2x128xf32>
    %372 = arith.divf %370, %371 : vector<2x128xf32>
    %373 = vector.extract_strided_slice %372 {offsets = [0, 0], sizes = [2, 64], strides = [1, 1]} : vector<2x128xf32> to vector<2x64xf32>
    %374 = vector.extract_strided_slice %372 {offsets = [0, 64], sizes = [2, 64], strides = [1, 1]} : vector<2x128xf32> to vector<2x64xf32>
    %375 = vector.extract_strided_slice %362 {offsets = [0, 128], sizes = [2, 64], strides = [1, 1]} : vector<2x192xf32> to vector<2x64xf32>
    %376 = vector.extract_strided_slice %364 {offsets = [0, 128], sizes = [2, 64], strides = [1, 1]} : vector<2x192xf32> to vector<2x64xf32>
    %377 = vector.broadcast %244 : vector<1x64xf32> to vector<2x64xf32>
    %378 = arith.addf %376, %377 : vector<2x64xf32>
    %379 = arith.mulf %373, %378 : vector<2x64xf32>
    %380 = arith.addf %375, %379 : vector<2x64xf32>
    %381 = math.tanh %380 : vector<2x64xf32>
    %382 = arith.subf %356, %381 : vector<2x64xf32>
    %383 = arith.mulf %374, %382 : vector<2x64xf32>
    %384 = arith.addf %381, %383 : vector<2x64xf32>
    %c8 = arith.constant 8 : index
    %c0_88 = arith.constant 0 : index
    %385 = vector.load %arg20[%c8, %c0_88] : memref<16x64xf32, #tpu.memory_space<vmem>>, vector<2x64xf32>
    tpu.vector_store %arg20[%c8, %c0_88], %384 {strides = array<i32>} : memref<16x64xf32, #tpu.memory_space<vmem>>, vector<2x64xf32>,
    %386 = vector.extract_strided_slice %239 {offsets = [0, 5, 0], sizes = [2, 1, 192], strides = [1, 1, 1]} : vector<2x8x192xf32> to vector<2x1x192xf32>
    %387 = vector.shape_cast %386 : vector<2x1x192xf32> to vector<2x192xf32>
    %388 = vector.extract_strided_slice %242 {offsets = [0, 2, 0], sizes = [2, 1, 192], strides = [1, 1, 1]} : vector<2x8x192xf32> to vector<2x1x192xf32>
    %389 = vector.shape_cast %388 : vector<2x1x192xf32> to vector<2x192xf32>
    %390 = arith.addf %387, %389 : vector<2x192xf32>
    %391 = arith.truncf %384 : vector<2x64xf32> to vector<2x64xbf16>
    %cst_89 = arith.constant dense<0.000000e+00> : vector<2x192xf32>
    %392 = tpu.matmul %391, %243, %cst_89 {dimension_numbers = #tpu.dot_dimension_numbers<[1], [0], [0], [1], [0, 0, 1, 1], [], []>} : vector<2x64xbf16>, vector<64x192xbf16>, vector<2x192xf32> -> vector<2x192xf32>
    %393 = vector.extract_strided_slice %390 {offsets = [0, 0], sizes = [2, 128], strides = [1, 1]} : vector<2x192xf32> to vector<2x128xf32>
    %394 = vector.extract_strided_slice %392 {offsets = [0, 0], sizes = [2, 128], strides = [1, 1]} : vector<2x192xf32> to vector<2x128xf32>
    %395 = arith.addf %393, %394 : vector<2x128xf32>
    %396 = arith.negf %395 : vector<2x128xf32>
    %397 = math.exp %396 : vector<2x128xf32>
    %cst_90 = arith.constant 1.000000e+00 : f32
    %398 = vector.broadcast %cst_90 : f32 to vector<2x128xf32>
    %399 = arith.addf %398, %397 : vector<2x128xf32>
    %400 = arith.divf %398, %399 : vector<2x128xf32>
    %401 = vector.extract_strided_slice %400 {offsets = [0, 0], sizes = [2, 64], strides = [1, 1]} : vector<2x128xf32> to vector<2x64xf32>
    %402 = vector.extract_strided_slice %400 {offsets = [0, 64], sizes = [2, 64], strides = [1, 1]} : vector<2x128xf32> to vector<2x64xf32>
    %403 = vector.extract_strided_slice %390 {offsets = [0, 128], sizes = [2, 64], strides = [1, 1]} : vector<2x192xf32> to vector<2x64xf32>
    %404 = vector.extract_strided_slice %392 {offsets = [0, 128], sizes = [2, 64], strides = [1, 1]} : vector<2x192xf32> to vector<2x64xf32>
    %405 = vector.broadcast %244 : vector<1x64xf32> to vector<2x64xf32>
    %406 = arith.addf %404, %405 : vector<2x64xf32>
    %407 = arith.mulf %401, %406 : vector<2x64xf32>
    %408 = arith.addf %403, %407 : vector<2x64xf32>
    %409 = math.tanh %408 : vector<2x64xf32>
    %410 = arith.subf %384, %409 : vector<2x64xf32>
    %411 = arith.mulf %402, %410 : vector<2x64xf32>
    %412 = arith.addf %409, %411 : vector<2x64xf32>
    %c10 = arith.constant 10 : index
    %c0_91 = arith.constant 0 : index
    %413 = vector.load %arg20[%c10, %c0_91] : memref<16x64xf32, #tpu.memory_space<vmem>>, vector<2x64xf32>
    tpu.vector_store %arg20[%c10, %c0_91], %412 {strides = array<i32>} : memref<16x64xf32, #tpu.memory_space<vmem>>, vector<2x64xf32>,
    %414 = vector.extract_strided_slice %239 {offsets = [0, 6, 0], sizes = [2, 1, 192], strides = [1, 1, 1]} : vector<2x8x192xf32> to vector<2x1x192xf32>
    %415 = vector.shape_cast %414 : vector<2x1x192xf32> to vector<2x192xf32>
    %416 = vector.extract_strided_slice %242 {offsets = [0, 1, 0], sizes = [2, 1, 192], strides = [1, 1, 1]} : vector<2x8x192xf32> to vector<2x1x192xf32>
    %417 = vector.shape_cast %416 : vector<2x1x192xf32> to vector<2x192xf32>
    %418 = arith.addf %415, %417 : vector<2x192xf32>
    %419 = arith.truncf %412 : vector<2x64xf32> to vector<2x64xbf16>
    %cst_92 = arith.constant dense<0.000000e+00> : vector<2x192xf32>
    %420 = tpu.matmul %419, %243, %cst_92 {dimension_numbers = #tpu.dot_dimension_numbers<[1], [0], [0], [1], [0, 0, 1, 1], [], []>} : vector<2x64xbf16>, vector<64x192xbf16>, vector<2x192xf32> -> vector<2x192xf32>
    %421 = vector.extract_strided_slice %418 {offsets = [0, 0], sizes = [2, 128], strides = [1, 1]} : vector<2x192xf32> to vector<2x128xf32>
    %422 = vector.extract_strided_slice %420 {offsets = [0, 0], sizes = [2, 128], strides = [1, 1]} : vector<2x192xf32> to vector<2x128xf32>
    %423 = arith.addf %421, %422 : vector<2x128xf32>
    %424 = arith.negf %423 : vector<2x128xf32>
    %425 = math.exp %424 : vector<2x128xf32>
    %cst_93 = arith.constant 1.000000e+00 : f32
    %426 = vector.broadcast %cst_93 : f32 to vector<2x128xf32>
    %427 = arith.addf %426, %425 : vector<2x128xf32>
    %428 = arith.divf %426, %427 : vector<2x128xf32>
    %429 = vector.extract_strided_slice %428 {offsets = [0, 0], sizes = [2, 64], strides = [1, 1]} : vector<2x128xf32> to vector<2x64xf32>
    %430 = vector.extract_strided_slice %428 {offsets = [0, 64], sizes = [2, 64], strides = [1, 1]} : vector<2x128xf32> to vector<2x64xf32>
    %431 = vector.extract_strided_slice %418 {offsets = [0, 128], sizes = [2, 64], strides = [1, 1]} : vector<2x192xf32> to vector<2x64xf32>
    %432 = vector.extract_strided_slice %420 {offsets = [0, 128], sizes = [2, 64], strides = [1, 1]} : vector<2x192xf32> to vector<2x64xf32>
    %433 = vector.broadcast %244 : vector<1x64xf32> to vector<2x64xf32>
    %434 = arith.addf %432, %433 : vector<2x64xf32>
    %435 = arith.mulf %429, %434 : vector<2x64xf32>
    %436 = arith.addf %431, %435 : vector<2x64xf32>
    %437 = math.tanh %436 : vector<2x64xf32>
    %438 = arith.subf %412, %437 : vector<2x64xf32>
    %439 = arith.mulf %430, %438 : vector<2x64xf32>
    %440 = arith.addf %437, %439 : vector<2x64xf32>
    %c12 = arith.constant 12 : index
    %c0_94 = arith.constant 0 : index
    %441 = vector.load %arg20[%c12, %c0_94] : memref<16x64xf32, #tpu.memory_space<vmem>>, vector<2x64xf32>
    tpu.vector_store %arg20[%c12, %c0_94], %440 {strides = array<i32>} : memref<16x64xf32, #tpu.memory_space<vmem>>, vector<2x64xf32>,
    %442 = vector.extract_strided_slice %239 {offsets = [0, 7, 0], sizes = [2, 1, 192], strides = [1, 1, 1]} : vector<2x8x192xf32> to vector<2x1x192xf32>
    %443 = vector.shape_cast %442 : vector<2x1x192xf32> to vector<2x192xf32>
    %444 = vector.extract_strided_slice %242 {offsets = [0, 0, 0], sizes = [2, 1, 192], strides = [1, 1, 1]} : vector<2x8x192xf32> to vector<2x1x192xf32>
    %445 = vector.shape_cast %444 : vector<2x1x192xf32> to vector<2x192xf32>
    %446 = arith.addf %443, %445 : vector<2x192xf32>
    %447 = arith.truncf %440 : vector<2x64xf32> to vector<2x64xbf16>
    %cst_95 = arith.constant dense<0.000000e+00> : vector<2x192xf32>
    %448 = tpu.matmul %447, %243, %cst_95 {dimension_numbers = #tpu.dot_dimension_numbers<[1], [0], [0], [1], [0, 0, 1, 1], [], []>} : vector<2x64xbf16>, vector<64x192xbf16>, vector<2x192xf32> -> vector<2x192xf32>
    %449 = vector.extract_strided_slice %446 {offsets = [0, 0], sizes = [2, 128], strides = [1, 1]} : vector<2x192xf32> to vector<2x128xf32>
    %450 = vector.extract_strided_slice %448 {offsets = [0, 0], sizes = [2, 128], strides = [1, 1]} : vector<2x192xf32> to vector<2x128xf32>
    %451 = arith.addf %449, %450 : vector<2x128xf32>
    %452 = arith.negf %451 : vector<2x128xf32>
    %453 = math.exp %452 : vector<2x128xf32>
    %cst_96 = arith.constant 1.000000e+00 : f32
    %454 = vector.broadcast %cst_96 : f32 to vector<2x128xf32>
    %455 = arith.addf %454, %453 : vector<2x128xf32>
    %456 = arith.divf %454, %455 : vector<2x128xf32>
    %457 = vector.extract_strided_slice %456 {offsets = [0, 0], sizes = [2, 64], strides = [1, 1]} : vector<2x128xf32> to vector<2x64xf32>
    %458 = vector.extract_strided_slice %456 {offsets = [0, 64], sizes = [2, 64], strides = [1, 1]} : vector<2x128xf32> to vector<2x64xf32>
    %459 = vector.extract_strided_slice %446 {offsets = [0, 128], sizes = [2, 64], strides = [1, 1]} : vector<2x192xf32> to vector<2x64xf32>
    %460 = vector.extract_strided_slice %448 {offsets = [0, 128], sizes = [2, 64], strides = [1, 1]} : vector<2x192xf32> to vector<2x64xf32>
    %461 = vector.broadcast %244 : vector<1x64xf32> to vector<2x64xf32>
    %462 = arith.addf %460, %461 : vector<2x64xf32>
    %463 = arith.mulf %457, %462 : vector<2x64xf32>
    %464 = arith.addf %459, %463 : vector<2x64xf32>
    %465 = math.tanh %464 : vector<2x64xf32>
    %466 = arith.subf %440, %465 : vector<2x64xf32>
    %467 = arith.mulf %458, %466 : vector<2x64xf32>
    %468 = arith.addf %465, %467 : vector<2x64xf32>
    %c14 = arith.constant 14 : index
    %c0_97 = arith.constant 0 : index
    %469 = vector.load %arg20[%c14, %c0_97] : memref<16x64xf32, #tpu.memory_space<vmem>>, vector<2x64xf32>
    tpu.vector_store %arg20[%c14, %c0_97], %468 {strides = array<i32>} : memref<16x64xf32, #tpu.memory_space<vmem>>, vector<2x64xf32>,
    %c0_98 = arith.constant 0 : index
    %c0_99 = arith.constant 0 : index
    %470 = vector.load %arg20[%c0_98, %c0_99] : memref<16x64xf32, #tpu.memory_space<vmem>>, vector<16x64xf32>
    %471 = arith.truncf %470 : vector<16x64xf32> to vector<16x64xbf16>
    %c0_100 = arith.constant 0 : index
    %c0_101 = arith.constant 0 : index
    %472 = vector.load %arg12[%c0_100, %c0_101] : memref<64x192xbf16, #tpu.memory_space<vmem>>, vector<64x192xbf16>
    %cst_102 = arith.constant dense<0.000000e+00> : vector<16x192xf32>
    %473 = tpu.matmul %471, %472, %cst_102 {dimension_numbers = #tpu.dot_dimension_numbers<[1], [0], [0], [1], [0, 0, 1, 1], [], []>} : vector<16x64xbf16>, vector<64x192xbf16>, vector<16x192xf32> -> vector<16x192xf32>
    %c0_103 = arith.constant 0 : index
    %c0_104 = arith.constant 0 : index
    %474 = vector.load %arg15[%c0_103, %c0_104] : memref<1x192xf32, #tpu.memory_space<vmem>>, vector<1x192xf32>
    %475 = vector.broadcast %474 : vector<1x192xf32> to vector<16x192xf32>
    %476 = arith.addf %473, %475 : vector<16x192xf32>
    %477 = vector.shape_cast %476 : vector<16x192xf32> to vector<8x2x192xf32>
    %c0_105 = arith.constant 0 : index
    %c0_106 = arith.constant 0 : index
    %478 = vector.load %arg13[%c0_105, %c0_106] : memref<64x192xbf16, #tpu.memory_space<vmem>>, vector<64x192xbf16>
    %cst_107 = arith.constant dense<0.000000e+00> : vector<16x192xf32>
    %479 = tpu.matmul %471, %478, %cst_107 {dimension_numbers = #tpu.dot_dimension_numbers<[1], [0], [0], [1], [0, 0, 1, 1], [], []>} : vector<16x64xbf16>, vector<64x192xbf16>, vector<16x192xf32> -> vector<16x192xf32>
    %480 = vector.shape_cast %479 : vector<16x192xf32> to vector<8x2x192xf32>
    %c0_108 = arith.constant 0 : index
    %c0_109 = arith.constant 0 : index
    %481 = vector.load %arg14[%c0_108, %c0_109] : memref<64x192xbf16, #tpu.memory_space<vmem>>, vector<64x192xbf16>
    %c0_110 = arith.constant 0 : index
    %c0_111 = arith.constant 0 : index
    %482 = vector.load %arg16[%c0_110, %c0_111] : memref<1x64xf32, #tpu.memory_space<vmem>>, vector<1x64xf32>
    %cst_112 = arith.constant 0.000000e+00 : f32
    %483 = vector.broadcast %cst_112 : f32 to vector<2x64xf32>
    %484 = vector.extract_strided_slice %477 {offsets = [0, 0, 0], sizes = [1, 2, 192], strides = [1, 1, 1]} : vector<8x2x192xf32> to vector<1x2x192xf32>
    %485 = vector.shape_cast %484 : vector<1x2x192xf32> to vector<2x192xf32>
    %486 = vector.extract_strided_slice %480 {offsets = [7, 0, 0], sizes = [1, 2, 192], strides = [1, 1, 1]} : vector<8x2x192xf32> to vector<1x2x192xf32>
    %487 = vector.shape_cast %486 : vector<1x2x192xf32> to vector<2x192xf32>
    %488 = arith.addf %485, %487 : vector<2x192xf32>
    %489 = arith.truncf %483 : vector<2x64xf32> to vector<2x64xbf16>
    %cst_113 = arith.constant dense<0.000000e+00> : vector<2x192xf32>
    %490 = tpu.matmul %489, %481, %cst_113 {dimension_numbers = #tpu.dot_dimension_numbers<[1], [0], [0], [1], [0, 0, 1, 1], [], []>} : vector<2x64xbf16>, vector<64x192xbf16>, vector<2x192xf32> -> vector<2x192xf32>
    %491 = vector.extract_strided_slice %488 {offsets = [0, 0], sizes = [2, 128], strides = [1, 1]} : vector<2x192xf32> to vector<2x128xf32>
    %492 = vector.extract_strided_slice %490 {offsets = [0, 0], sizes = [2, 128], strides = [1, 1]} : vector<2x192xf32> to vector<2x128xf32>
    %493 = arith.addf %491, %492 : vector<2x128xf32>
    %494 = arith.negf %493 : vector<2x128xf32>
    %495 = math.exp %494 : vector<2x128xf32>
    %cst_114 = arith.constant 1.000000e+00 : f32
    %496 = vector.broadcast %cst_114 : f32 to vector<2x128xf32>
    %497 = arith.addf %496, %495 : vector<2x128xf32>
    %498 = arith.divf %496, %497 : vector<2x128xf32>
    %499 = vector.extract_strided_slice %498 {offsets = [0, 0], sizes = [2, 64], strides = [1, 1]} : vector<2x128xf32> to vector<2x64xf32>
    %500 = vector.extract_strided_slice %498 {offsets = [0, 64], sizes = [2, 64], strides = [1, 1]} : vector<2x128xf32> to vector<2x64xf32>
    %501 = vector.extract_strided_slice %488 {offsets = [0, 128], sizes = [2, 64], strides = [1, 1]} : vector<2x192xf32> to vector<2x64xf32>
    %502 = vector.extract_strided_slice %490 {offsets = [0, 128], sizes = [2, 64], strides = [1, 1]} : vector<2x192xf32> to vector<2x64xf32>
    %503 = vector.broadcast %482 : vector<1x64xf32> to vector<2x64xf32>
    %504 = arith.addf %502, %503 : vector<2x64xf32>
    %505 = arith.mulf %499, %504 : vector<2x64xf32>
    %506 = arith.addf %501, %505 : vector<2x64xf32>
    %507 = math.tanh %506 : vector<2x64xf32>
    %508 = arith.subf %483, %507 : vector<2x64xf32>
    %509 = arith.mulf %500, %508 : vector<2x64xf32>
    %510 = arith.addf %507, %509 : vector<2x64xf32>
    %511 = vector.extract_strided_slice %477 {offsets = [1, 0, 0], sizes = [1, 2, 192], strides = [1, 1, 1]} : vector<8x2x192xf32> to vector<1x2x192xf32>
    %512 = vector.shape_cast %511 : vector<1x2x192xf32> to vector<2x192xf32>
    %513 = vector.extract_strided_slice %480 {offsets = [6, 0, 0], sizes = [1, 2, 192], strides = [1, 1, 1]} : vector<8x2x192xf32> to vector<1x2x192xf32>
    %514 = vector.shape_cast %513 : vector<1x2x192xf32> to vector<2x192xf32>
    %515 = arith.addf %512, %514 : vector<2x192xf32>
    %516 = arith.truncf %510 : vector<2x64xf32> to vector<2x64xbf16>
    %cst_115 = arith.constant dense<0.000000e+00> : vector<2x192xf32>
    %517 = tpu.matmul %516, %481, %cst_115 {dimension_numbers = #tpu.dot_dimension_numbers<[1], [0], [0], [1], [0, 0, 1, 1], [], []>} : vector<2x64xbf16>, vector<64x192xbf16>, vector<2x192xf32> -> vector<2x192xf32>
    %518 = vector.extract_strided_slice %515 {offsets = [0, 0], sizes = [2, 128], strides = [1, 1]} : vector<2x192xf32> to vector<2x128xf32>
    %519 = vector.extract_strided_slice %517 {offsets = [0, 0], sizes = [2, 128], strides = [1, 1]} : vector<2x192xf32> to vector<2x128xf32>
    %520 = arith.addf %518, %519 : vector<2x128xf32>
    %521 = arith.negf %520 : vector<2x128xf32>
    %522 = math.exp %521 : vector<2x128xf32>
    %cst_116 = arith.constant 1.000000e+00 : f32
    %523 = vector.broadcast %cst_116 : f32 to vector<2x128xf32>
    %524 = arith.addf %523, %522 : vector<2x128xf32>
    %525 = arith.divf %523, %524 : vector<2x128xf32>
    %526 = vector.extract_strided_slice %525 {offsets = [0, 0], sizes = [2, 64], strides = [1, 1]} : vector<2x128xf32> to vector<2x64xf32>
    %527 = vector.extract_strided_slice %525 {offsets = [0, 64], sizes = [2, 64], strides = [1, 1]} : vector<2x128xf32> to vector<2x64xf32>
    %528 = vector.extract_strided_slice %515 {offsets = [0, 128], sizes = [2, 64], strides = [1, 1]} : vector<2x192xf32> to vector<2x64xf32>
    %529 = vector.extract_strided_slice %517 {offsets = [0, 128], sizes = [2, 64], strides = [1, 1]} : vector<2x192xf32> to vector<2x64xf32>
    %530 = vector.broadcast %482 : vector<1x64xf32> to vector<2x64xf32>
    %531 = arith.addf %529, %530 : vector<2x64xf32>
    %532 = arith.mulf %526, %531 : vector<2x64xf32>
    %533 = arith.addf %528, %532 : vector<2x64xf32>
    %534 = math.tanh %533 : vector<2x64xf32>
    %535 = arith.subf %510, %534 : vector<2x64xf32>
    %536 = arith.mulf %527, %535 : vector<2x64xf32>
    %537 = arith.addf %534, %536 : vector<2x64xf32>
    %538 = vector.extract_strided_slice %477 {offsets = [2, 0, 0], sizes = [1, 2, 192], strides = [1, 1, 1]} : vector<8x2x192xf32> to vector<1x2x192xf32>
    %539 = vector.shape_cast %538 : vector<1x2x192xf32> to vector<2x192xf32>
    %540 = vector.extract_strided_slice %480 {offsets = [5, 0, 0], sizes = [1, 2, 192], strides = [1, 1, 1]} : vector<8x2x192xf32> to vector<1x2x192xf32>
    %541 = vector.shape_cast %540 : vector<1x2x192xf32> to vector<2x192xf32>
    %542 = arith.addf %539, %541 : vector<2x192xf32>
    %543 = arith.truncf %537 : vector<2x64xf32> to vector<2x64xbf16>
    %cst_117 = arith.constant dense<0.000000e+00> : vector<2x192xf32>
    %544 = tpu.matmul %543, %481, %cst_117 {dimension_numbers = #tpu.dot_dimension_numbers<[1], [0], [0], [1], [0, 0, 1, 1], [], []>} : vector<2x64xbf16>, vector<64x192xbf16>, vector<2x192xf32> -> vector<2x192xf32>
    %545 = vector.extract_strided_slice %542 {offsets = [0, 0], sizes = [2, 128], strides = [1, 1]} : vector<2x192xf32> to vector<2x128xf32>
    %546 = vector.extract_strided_slice %544 {offsets = [0, 0], sizes = [2, 128], strides = [1, 1]} : vector<2x192xf32> to vector<2x128xf32>
    %547 = arith.addf %545, %546 : vector<2x128xf32>
    %548 = arith.negf %547 : vector<2x128xf32>
    %549 = math.exp %548 : vector<2x128xf32>
    %cst_118 = arith.constant 1.000000e+00 : f32
    %550 = vector.broadcast %cst_118 : f32 to vector<2x128xf32>
    %551 = arith.addf %550, %549 : vector<2x128xf32>
    %552 = arith.divf %550, %551 : vector<2x128xf32>
    %553 = vector.extract_strided_slice %552 {offsets = [0, 0], sizes = [2, 64], strides = [1, 1]} : vector<2x128xf32> to vector<2x64xf32>
    %554 = vector.extract_strided_slice %552 {offsets = [0, 64], sizes = [2, 64], strides = [1, 1]} : vector<2x128xf32> to vector<2x64xf32>
    %555 = vector.extract_strided_slice %542 {offsets = [0, 128], sizes = [2, 64], strides = [1, 1]} : vector<2x192xf32> to vector<2x64xf32>
    %556 = vector.extract_strided_slice %544 {offsets = [0, 128], sizes = [2, 64], strides = [1, 1]} : vector<2x192xf32> to vector<2x64xf32>
    %557 = vector.broadcast %482 : vector<1x64xf32> to vector<2x64xf32>
    %558 = arith.addf %556, %557 : vector<2x64xf32>
    %559 = arith.mulf %553, %558 : vector<2x64xf32>
    %560 = arith.addf %555, %559 : vector<2x64xf32>
    %561 = math.tanh %560 : vector<2x64xf32>
    %562 = arith.subf %537, %561 : vector<2x64xf32>
    %563 = arith.mulf %554, %562 : vector<2x64xf32>
    %564 = arith.addf %561, %563 : vector<2x64xf32>
    %565 = vector.extract_strided_slice %477 {offsets = [3, 0, 0], sizes = [1, 2, 192], strides = [1, 1, 1]} : vector<8x2x192xf32> to vector<1x2x192xf32>
    %566 = vector.shape_cast %565 : vector<1x2x192xf32> to vector<2x192xf32>
    %567 = vector.extract_strided_slice %480 {offsets = [4, 0, 0], sizes = [1, 2, 192], strides = [1, 1, 1]} : vector<8x2x192xf32> to vector<1x2x192xf32>
    %568 = vector.shape_cast %567 : vector<1x2x192xf32> to vector<2x192xf32>
    %569 = arith.addf %566, %568 : vector<2x192xf32>
    %570 = arith.truncf %564 : vector<2x64xf32> to vector<2x64xbf16>
    %cst_119 = arith.constant dense<0.000000e+00> : vector<2x192xf32>
    %571 = tpu.matmul %570, %481, %cst_119 {dimension_numbers = #tpu.dot_dimension_numbers<[1], [0], [0], [1], [0, 0, 1, 1], [], []>} : vector<2x64xbf16>, vector<64x192xbf16>, vector<2x192xf32> -> vector<2x192xf32>
    %572 = vector.extract_strided_slice %569 {offsets = [0, 0], sizes = [2, 128], strides = [1, 1]} : vector<2x192xf32> to vector<2x128xf32>
    %573 = vector.extract_strided_slice %571 {offsets = [0, 0], sizes = [2, 128], strides = [1, 1]} : vector<2x192xf32> to vector<2x128xf32>
    %574 = arith.addf %572, %573 : vector<2x128xf32>
    %575 = arith.negf %574 : vector<2x128xf32>
    %576 = math.exp %575 : vector<2x128xf32>
    %cst_120 = arith.constant 1.000000e+00 : f32
    %577 = vector.broadcast %cst_120 : f32 to vector<2x128xf32>
    %578 = arith.addf %577, %576 : vector<2x128xf32>
    %579 = arith.divf %577, %578 : vector<2x128xf32>
    %580 = vector.extract_strided_slice %579 {offsets = [0, 0], sizes = [2, 64], strides = [1, 1]} : vector<2x128xf32> to vector<2x64xf32>
    %581 = vector.extract_strided_slice %579 {offsets = [0, 64], sizes = [2, 64], strides = [1, 1]} : vector<2x128xf32> to vector<2x64xf32>
    %582 = vector.extract_strided_slice %569 {offsets = [0, 128], sizes = [2, 64], strides = [1, 1]} : vector<2x192xf32> to vector<2x64xf32>
    %583 = vector.extract_strided_slice %571 {offsets = [0, 128], sizes = [2, 64], strides = [1, 1]} : vector<2x192xf32> to vector<2x64xf32>
    %584 = vector.broadcast %482 : vector<1x64xf32> to vector<2x64xf32>
    %585 = arith.addf %583, %584 : vector<2x64xf32>
    %586 = arith.mulf %580, %585 : vector<2x64xf32>
    %587 = arith.addf %582, %586 : vector<2x64xf32>
    %588 = math.tanh %587 : vector<2x64xf32>
    %589 = arith.subf %564, %588 : vector<2x64xf32>
    %590 = arith.mulf %581, %589 : vector<2x64xf32>
    %591 = arith.addf %588, %590 : vector<2x64xf32>
    %592 = vector.extract_strided_slice %477 {offsets = [4, 0, 0], sizes = [1, 2, 192], strides = [1, 1, 1]} : vector<8x2x192xf32> to vector<1x2x192xf32>
    %593 = vector.shape_cast %592 : vector<1x2x192xf32> to vector<2x192xf32>
    %594 = vector.extract_strided_slice %480 {offsets = [3, 0, 0], sizes = [1, 2, 192], strides = [1, 1, 1]} : vector<8x2x192xf32> to vector<1x2x192xf32>
    %595 = vector.shape_cast %594 : vector<1x2x192xf32> to vector<2x192xf32>
    %596 = arith.addf %593, %595 : vector<2x192xf32>
    %597 = arith.truncf %591 : vector<2x64xf32> to vector<2x64xbf16>
    %cst_121 = arith.constant dense<0.000000e+00> : vector<2x192xf32>
    %598 = tpu.matmul %597, %481, %cst_121 {dimension_numbers = #tpu.dot_dimension_numbers<[1], [0], [0], [1], [0, 0, 1, 1], [], []>} : vector<2x64xbf16>, vector<64x192xbf16>, vector<2x192xf32> -> vector<2x192xf32>
    %599 = vector.extract_strided_slice %596 {offsets = [0, 0], sizes = [2, 128], strides = [1, 1]} : vector<2x192xf32> to vector<2x128xf32>
    %600 = vector.extract_strided_slice %598 {offsets = [0, 0], sizes = [2, 128], strides = [1, 1]} : vector<2x192xf32> to vector<2x128xf32>
    %601 = arith.addf %599, %600 : vector<2x128xf32>
    %602 = arith.negf %601 : vector<2x128xf32>
    %603 = math.exp %602 : vector<2x128xf32>
    %cst_122 = arith.constant 1.000000e+00 : f32
    %604 = vector.broadcast %cst_122 : f32 to vector<2x128xf32>
    %605 = arith.addf %604, %603 : vector<2x128xf32>
    %606 = arith.divf %604, %605 : vector<2x128xf32>
    %607 = vector.extract_strided_slice %606 {offsets = [0, 0], sizes = [2, 64], strides = [1, 1]} : vector<2x128xf32> to vector<2x64xf32>
    %608 = vector.extract_strided_slice %606 {offsets = [0, 64], sizes = [2, 64], strides = [1, 1]} : vector<2x128xf32> to vector<2x64xf32>
    %609 = vector.extract_strided_slice %596 {offsets = [0, 128], sizes = [2, 64], strides = [1, 1]} : vector<2x192xf32> to vector<2x64xf32>
    %610 = vector.extract_strided_slice %598 {offsets = [0, 128], sizes = [2, 64], strides = [1, 1]} : vector<2x192xf32> to vector<2x64xf32>
    %611 = vector.broadcast %482 : vector<1x64xf32> to vector<2x64xf32>
    %612 = arith.addf %610, %611 : vector<2x64xf32>
    %613 = arith.mulf %607, %612 : vector<2x64xf32>
    %614 = arith.addf %609, %613 : vector<2x64xf32>
    %615 = math.tanh %614 : vector<2x64xf32>
    %616 = arith.subf %591, %615 : vector<2x64xf32>
    %617 = arith.mulf %608, %616 : vector<2x64xf32>
    %618 = arith.addf %615, %617 : vector<2x64xf32>
    %619 = vector.extract_strided_slice %477 {offsets = [5, 0, 0], sizes = [1, 2, 192], strides = [1, 1, 1]} : vector<8x2x192xf32> to vector<1x2x192xf32>
    %620 = vector.shape_cast %619 : vector<1x2x192xf32> to vector<2x192xf32>
    %621 = vector.extract_strided_slice %480 {offsets = [2, 0, 0], sizes = [1, 2, 192], strides = [1, 1, 1]} : vector<8x2x192xf32> to vector<1x2x192xf32>
    %622 = vector.shape_cast %621 : vector<1x2x192xf32> to vector<2x192xf32>
    %623 = arith.addf %620, %622 : vector<2x192xf32>
    %624 = arith.truncf %618 : vector<2x64xf32> to vector<2x64xbf16>
    %cst_123 = arith.constant dense<0.000000e+00> : vector<2x192xf32>
    %625 = tpu.matmul %624, %481, %cst_123 {dimension_numbers = #tpu.dot_dimension_numbers<[1], [0], [0], [1], [0, 0, 1, 1], [], []>} : vector<2x64xbf16>, vector<64x192xbf16>, vector<2x192xf32> -> vector<2x192xf32>
    %626 = vector.extract_strided_slice %623 {offsets = [0, 0], sizes = [2, 128], strides = [1, 1]} : vector<2x192xf32> to vector<2x128xf32>
    %627 = vector.extract_strided_slice %625 {offsets = [0, 0], sizes = [2, 128], strides = [1, 1]} : vector<2x192xf32> to vector<2x128xf32>
    %628 = arith.addf %626, %627 : vector<2x128xf32>
    %629 = arith.negf %628 : vector<2x128xf32>
    %630 = math.exp %629 : vector<2x128xf32>
    %cst_124 = arith.constant 1.000000e+00 : f32
    %631 = vector.broadcast %cst_124 : f32 to vector<2x128xf32>
    %632 = arith.addf %631, %630 : vector<2x128xf32>
    %633 = arith.divf %631, %632 : vector<2x128xf32>
    %634 = vector.extract_strided_slice %633 {offsets = [0, 0], sizes = [2, 64], strides = [1, 1]} : vector<2x128xf32> to vector<2x64xf32>
    %635 = vector.extract_strided_slice %633 {offsets = [0, 64], sizes = [2, 64], strides = [1, 1]} : vector<2x128xf32> to vector<2x64xf32>
    %636 = vector.extract_strided_slice %623 {offsets = [0, 128], sizes = [2, 64], strides = [1, 1]} : vector<2x192xf32> to vector<2x64xf32>
    %637 = vector.extract_strided_slice %625 {offsets = [0, 128], sizes = [2, 64], strides = [1, 1]} : vector<2x192xf32> to vector<2x64xf32>
    %638 = vector.broadcast %482 : vector<1x64xf32> to vector<2x64xf32>
    %639 = arith.addf %637, %638 : vector<2x64xf32>
    %640 = arith.mulf %634, %639 : vector<2x64xf32>
    %641 = arith.addf %636, %640 : vector<2x64xf32>
    %642 = math.tanh %641 : vector<2x64xf32>
    %643 = arith.subf %618, %642 : vector<2x64xf32>
    %644 = arith.mulf %635, %643 : vector<2x64xf32>
    %645 = arith.addf %642, %644 : vector<2x64xf32>
    %646 = vector.extract_strided_slice %477 {offsets = [6, 0, 0], sizes = [1, 2, 192], strides = [1, 1, 1]} : vector<8x2x192xf32> to vector<1x2x192xf32>
    %647 = vector.shape_cast %646 : vector<1x2x192xf32> to vector<2x192xf32>
    %648 = vector.extract_strided_slice %480 {offsets = [1, 0, 0], sizes = [1, 2, 192], strides = [1, 1, 1]} : vector<8x2x192xf32> to vector<1x2x192xf32>
    %649 = vector.shape_cast %648 : vector<1x2x192xf32> to vector<2x192xf32>
    %650 = arith.addf %647, %649 : vector<2x192xf32>
    %651 = arith.truncf %645 : vector<2x64xf32> to vector<2x64xbf16>
    %cst_125 = arith.constant dense<0.000000e+00> : vector<2x192xf32>
    %652 = tpu.matmul %651, %481, %cst_125 {dimension_numbers = #tpu.dot_dimension_numbers<[1], [0], [0], [1], [0, 0, 1, 1], [], []>} : vector<2x64xbf16>, vector<64x192xbf16>, vector<2x192xf32> -> vector<2x192xf32>
    %653 = vector.extract_strided_slice %650 {offsets = [0, 0], sizes = [2, 128], strides = [1, 1]} : vector<2x192xf32> to vector<2x128xf32>
    %654 = vector.extract_strided_slice %652 {offsets = [0, 0], sizes = [2, 128], strides = [1, 1]} : vector<2x192xf32> to vector<2x128xf32>
    %655 = arith.addf %653, %654 : vector<2x128xf32>
    %656 = arith.negf %655 : vector<2x128xf32>
    %657 = math.exp %656 : vector<2x128xf32>
    %cst_126 = arith.constant 1.000000e+00 : f32
    %658 = vector.broadcast %cst_126 : f32 to vector<2x128xf32>
    %659 = arith.addf %658, %657 : vector<2x128xf32>
    %660 = arith.divf %658, %659 : vector<2x128xf32>
    %661 = vector.extract_strided_slice %660 {offsets = [0, 0], sizes = [2, 64], strides = [1, 1]} : vector<2x128xf32> to vector<2x64xf32>
    %662 = vector.extract_strided_slice %660 {offsets = [0, 64], sizes = [2, 64], strides = [1, 1]} : vector<2x128xf32> to vector<2x64xf32>
    %663 = vector.extract_strided_slice %650 {offsets = [0, 128], sizes = [2, 64], strides = [1, 1]} : vector<2x192xf32> to vector<2x64xf32>
    %664 = vector.extract_strided_slice %652 {offsets = [0, 128], sizes = [2, 64], strides = [1, 1]} : vector<2x192xf32> to vector<2x64xf32>
    %665 = vector.broadcast %482 : vector<1x64xf32> to vector<2x64xf32>
    %666 = arith.addf %664, %665 : vector<2x64xf32>
    %667 = arith.mulf %661, %666 : vector<2x64xf32>
    %668 = arith.addf %663, %667 : vector<2x64xf32>
    %669 = math.tanh %668 : vector<2x64xf32>
    %670 = arith.subf %645, %669 : vector<2x64xf32>
    %671 = arith.mulf %662, %670 : vector<2x64xf32>
    %672 = arith.addf %669, %671 : vector<2x64xf32>
    %673 = vector.extract_strided_slice %477 {offsets = [7, 0, 0], sizes = [1, 2, 192], strides = [1, 1, 1]} : vector<8x2x192xf32> to vector<1x2x192xf32>
    %674 = vector.shape_cast %673 : vector<1x2x192xf32> to vector<2x192xf32>
    %675 = vector.extract_strided_slice %480 {offsets = [0, 0, 0], sizes = [1, 2, 192], strides = [1, 1, 1]} : vector<8x2x192xf32> to vector<1x2x192xf32>
    %676 = vector.shape_cast %675 : vector<1x2x192xf32> to vector<2x192xf32>
    %677 = arith.addf %674, %676 : vector<2x192xf32>
    %678 = arith.truncf %672 : vector<2x64xf32> to vector<2x64xbf16>
    %cst_127 = arith.constant dense<0.000000e+00> : vector<2x192xf32>
    %679 = tpu.matmul %678, %481, %cst_127 {dimension_numbers = #tpu.dot_dimension_numbers<[1], [0], [0], [1], [0, 0, 1, 1], [], []>} : vector<2x64xbf16>, vector<64x192xbf16>, vector<2x192xf32> -> vector<2x192xf32>
    %680 = vector.extract_strided_slice %677 {offsets = [0, 0], sizes = [2, 128], strides = [1, 1]} : vector<2x192xf32> to vector<2x128xf32>
    %681 = vector.extract_strided_slice %679 {offsets = [0, 0], sizes = [2, 128], strides = [1, 1]} : vector<2x192xf32> to vector<2x128xf32>
    %682 = arith.addf %680, %681 : vector<2x128xf32>
    %683 = arith.negf %682 : vector<2x128xf32>
    %684 = math.exp %683 : vector<2x128xf32>
    %cst_128 = arith.constant 1.000000e+00 : f32
    %685 = vector.broadcast %cst_128 : f32 to vector<2x128xf32>
    %686 = arith.addf %685, %684 : vector<2x128xf32>
    %687 = arith.divf %685, %686 : vector<2x128xf32>
    %688 = vector.extract_strided_slice %687 {offsets = [0, 0], sizes = [2, 64], strides = [1, 1]} : vector<2x128xf32> to vector<2x64xf32>
    %689 = vector.extract_strided_slice %687 {offsets = [0, 64], sizes = [2, 64], strides = [1, 1]} : vector<2x128xf32> to vector<2x64xf32>
    %690 = vector.extract_strided_slice %677 {offsets = [0, 128], sizes = [2, 64], strides = [1, 1]} : vector<2x192xf32> to vector<2x64xf32>
    %691 = vector.extract_strided_slice %679 {offsets = [0, 128], sizes = [2, 64], strides = [1, 1]} : vector<2x192xf32> to vector<2x64xf32>
    %692 = vector.broadcast %482 : vector<1x64xf32> to vector<2x64xf32>
    %693 = arith.addf %691, %692 : vector<2x64xf32>
    %694 = arith.mulf %688, %693 : vector<2x64xf32>
    %695 = arith.addf %690, %694 : vector<2x64xf32>
    %696 = math.tanh %695 : vector<2x64xf32>
    %697 = arith.subf %672, %696 : vector<2x64xf32>
    %698 = arith.mulf %689, %697 : vector<2x64xf32>
    %699 = arith.addf %696, %698 : vector<2x64xf32>
    %700 = arith.truncf %699 : vector<2x64xf32> to vector<2x64xbf16>
    %c0_129 = arith.constant 0 : index
    %c0_130 = arith.constant 0 : index
    %701 = vector.load %arg17[%c0_129, %c0_130] : memref<64x128xbf16, #tpu.memory_space<vmem>>, vector<64x128xbf16>
    %cst_131 = arith.constant dense<0.000000e+00> : vector<2x128xf32>
    %702 = tpu.matmul %700, %701, %cst_131 {dimension_numbers = #tpu.dot_dimension_numbers<[1], [0], [0], [1], [0, 0, 1, 1], [], []>} : vector<2x64xbf16>, vector<64x128xbf16>, vector<2x128xf32> -> vector<2x128xf32>
    %c0_132 = arith.constant 0 : index
    %c0_133 = arith.constant 0 : index
    %703 = vector.load %arg18[%c0_132, %c0_133] : memref<1x128xf32, #tpu.memory_space<vmem>>, vector<1x128xf32>
    %704 = vector.broadcast %703 : vector<1x128xf32> to vector<2x128xf32>
    %705 = arith.addf %702, %704 : vector<2x128xf32>
    %c0_134 = arith.constant 0 : index
    %c0_135 = arith.constant 0 : index
    %706 = vector.load %arg19[%c0_134, %c0_135] : memref<2x128xf32, #tpu.memory_space<vmem>>, vector<2x128xf32>
    tpu.vector_store %arg19[%c0_134, %c0_135], %705 {strides = array<i32>} : memref<2x128xf32, #tpu.memory_space<vmem>>, vector<2x128xf32>,
    return
  }
}

</mosaic_0001>

<llo_original>
// kernel: _lambda_.1
$region0: #{_lambda_.1}
  #allocation0 [shape = 'u32[]', space=smem, size = 0x4, offset = 0x4, fixed_abs, tag = 'smem constant byte address 0x4 - core index']
  #allocation1 [shape = 'u32[144,128]{1,0:T(1,128)}', space=vmem, size = 0x12000, scoped, tag = 'internal scratch']
  #allocation2 [shape = 'f32[16,64]{1,0:T(8,128)}', space=vmem, size = 0x2000, scoped, tag = 'scratch operand']
  %s0 = inlined_call_operand.vmem [shape: f32[2,8,64], index: 0, kind: input, shape index: {}]
  %s1 = inlined_call_operand.vmem [shape: f32[1,64], index: 1, kind: input, shape index: {}]
  %s2 = inlined_call_operand.vmem [shape: f32[1,64], index: 2, kind: input, shape index: {}]
  %s3 = inlined_call_operand.vmem [shape: bf16[64,192], index: 3, kind: input, shape index: {}]
  %s4 = inlined_call_operand.vmem [shape: f32[1,192], index: 4, kind: input, shape index: {}]
  %s5 = inlined_call_operand.vmem [shape: bf16[64,64], index: 5, kind: input, shape index: {}]
  %s6 = inlined_call_operand.vmem [shape: f32[1,64], index: 6, kind: input, shape index: {}]
  %s7 = inlined_call_operand.vmem [shape: bf16[64,192], index: 7, kind: input, shape index: {}]
  %s8 = inlined_call_operand.vmem [shape: bf16[64,192], index: 8, kind: input, shape index: {}]
  %s9 = inlined_call_operand.vmem [shape: bf16[64,192], index: 9, kind: input, shape index: {}]
  %s10 = inlined_call_operand.vmem [shape: f32[1,192], index: 10, kind: input, shape index: {}]
  %s11 = inlined_call_operand.vmem [shape: f32[1,64], index: 11, kind: input, shape index: {}]
  %s12 = inlined_call_operand.vmem [shape: bf16[64,192], index: 12, kind: input, shape index: {}]
  %s13 = inlined_call_operand.vmem [shape: bf16[64,192], index: 13, kind: input, shape index: {}]
  %s14 = inlined_call_operand.vmem [shape: bf16[64,192], index: 14, kind: input, shape index: {}]
  %s15 = inlined_call_operand.vmem [shape: f32[1,192], index: 15, kind: input, shape index: {}]
  %s16 = inlined_call_operand.vmem [shape: f32[1,64], index: 16, kind: input, shape index: {}]
  %s17 = inlined_call_operand.vmem [shape: bf16[64,128], index: 17, kind: input, shape index: {}]
  %s18 = inlined_call_operand.vmem [shape: f32[1,128], index: 18, kind: input, shape index: {}]
  %s19 = inlined_call_operand.hbm [shape: f32[2,128], index: 19, kind: output, shape index: {}]
  %s20 = sld [smem:[#allocation0]]
  $region86: #{_lambda_.1} parent=0
    _
  %s22 = ssub.s32 1, %s20
  %s23 = scalar_select 0, %s22, %s20
  $region1: #{_lambda_.1} parent=0
    #allocation3 [shape = 'u8[1024]{0}', space=vmem, size = 0x400, scoped, tag = 'output window, operand 0, single buffered']
    #allocation4 [shape = 's32[1]{0}', space=sflag, size = 0x4, scoped, tag = 'scoped memory for _lambda_.1']
    %24 = vsyncpa [#allocation4], 0
    // Predicated region
    $region2: #{_lambda_.1} parent=1 // pred_check
      _
    $region3: #{_lambda_.1} parent=1 // pred_check_branch
      %26 = sbr.rel (0) target = $region5
    $region4: #{_lambda_.1} parent=1 // pred_region
      _
    $region5: #{_lambda_.1} parent=1 // pred_fallthru
      _
    // Predicated region
    $region6: #{_lambda_.1} parent=1 // pred_check
      _
    $region7: #{_lambda_.1} parent=1 // pred_check_branch
      %28 = sbr.rel (0) target = $region9
    $region8: #{_lambda_.1} parent=1 // pred_region
      _
    $region9: #{_lambda_.1} parent=1 // pred_fallthru
      _
    // Predicated region
    $region10: #{_lambda_.1} parent=1 // pred_check
      _
    $region11: #{_lambda_.1} parent=1 // pred_check_branch
      %30 = sbr.rel (0) target = $region13
    $region12: #{_lambda_.1} parent=1 // pred_region
      _
    $region13: #{_lambda_.1} parent=1 // pred_fallthru
      _
    // Predicated region
    $region14: #{_lambda_.1} parent=1 // pred_check
      _
    $region15: #{_lambda_.1} parent=1 // pred_check_branch
      %32 = sbr.rel (0) target = $region17
    $region16: #{_lambda_.1} parent=1 // pred_region
      _
    $region17: #{_lambda_.1} parent=1 // pred_fallthru
      _
    // Predicated region
    $region18: #{_lambda_.1} parent=1 // pred_check
      _
    $region19: #{_lambda_.1} parent=1 // pred_check_branch
      %34 = sbr.rel (0) target = $region21
    $region20: #{_lambda_.1} parent=1 // pred_region
      _
    $region21: #{_lambda_.1} parent=1 // pred_fallthru
      _
    // Predicated region
    $region22: #{_lambda_.1} parent=1 // pred_check
      _
    $region23: #{_lambda_.1} parent=1 // pred_check_branch
      %36 = sbr.rel (0) target = $region25
    $region24: #{_lambda_.1} parent=1 // pred_region
      _
    $region25: #{_lambda_.1} parent=1 // pred_fallthru
      _
    // Predicated region
    $region26: #{_lambda_.1} parent=1 // pred_check
      _
    $region27: #{_lambda_.1} parent=1 // pred_check_branch
      %38 = sbr.rel (0) target = $region29
    $region28: #{_lambda_.1} parent=1 // pred_region
      _
    $region29: #{_lambda_.1} parent=1 // pred_fallthru
      _
    // Predicated region
    $region30: #{_lambda_.1} parent=1 // pred_check
      _
    $region31: #{_lambda_.1} parent=1 // pred_check_branch
      %40 = sbr.rel (0) target = $region33
    $region32: #{_lambda_.1} parent=1 // pred_region
      _
    $region33: #{_lambda_.1} parent=1 // pred_fallthru
      _
    // Predicated region
    $region34: #{_lambda_.1} parent=1 // pred_check
      _
    $region35: #{_lambda_.1} parent=1 // pred_check_branch
      %42 = sbr.rel (0) target = $region37
    $region36: #{_lambda_.1} parent=1 // pred_region
      _
    $region37: #{_lambda_.1} parent=1 // pred_fallthru
      _
    // Predicated region
    $region38: #{_lambda_.1} parent=1 // pred_check
      _
    $region39: #{_lambda_.1} parent=1 // pred_check_branch
      %44 = sbr.rel (0) target = $region41
    $region40: #{_lambda_.1} parent=1 // pred_region
      _
    $region41: #{_lambda_.1} parent=1 // pred_fallthru
      _
    // Predicated region
    $region42: #{_lambda_.1} parent=1 // pred_check
      _
    $region43: #{_lambda_.1} parent=1 // pred_check_branch
      %46 = sbr.rel (0) target = $region45
    $region44: #{_lambda_.1} parent=1 // pred_region
      _
    $region45: #{_lambda_.1} parent=1 // pred_fallthru
      _
    // Predicated region
    $region46: #{_lambda_.1} parent=1 // pred_check
      _
    $region47: #{_lambda_.1} parent=1 // pred_check_branch
      %48 = sbr.rel (0) target = $region49
    $region48: #{_lambda_.1} parent=1 // pred_region
      _
    $region49: #{_lambda_.1} parent=1 // pred_fallthru
      _
    // Predicated region
    $region50: #{_lambda_.1} parent=1 // pred_check
      _
    $region51: #{_lambda_.1} parent=1 // pred_check_branch
      %50 = sbr.rel (0) target = $region53
    $region52: #{_lambda_.1} parent=1 // pred_region
      _
    $region53: #{_lambda_.1} parent=1 // pred_fallthru
      _
    // Predicated region
    $region54: #{_lambda_.1} parent=1 // pred_check
      _
    $region55: #{_lambda_.1} parent=1 // pred_check_branch
      %52 = sbr.rel (0) target = $region57
    $region56: #{_lambda_.1} parent=1 // pred_region
      _
    $region57: #{_lambda_.1} parent=1 // pred_fallthru
      _
    // Predicated region
    $region58: #{_lambda_.1} parent=1 // pred_check
      _
    $region59: #{_lambda_.1} parent=1 // pred_check_branch
      %54 = sbr.rel (0) target = $region61
    $region60: #{_lambda_.1} parent=1 // pred_region
      _
    $region61: #{_lambda_.1} parent=1 // pred_fallthru
      _
    // Predicated region
    $region62: #{_lambda_.1} parent=1 // pred_check
      _
    $region63: #{_lambda_.1} parent=1 // pred_check_branch
      %56 = sbr.rel (0) target = $region65
    $region64: #{_lambda_.1} parent=1 // pred_region
      _
    $region65: #{_lambda_.1} parent=1 // pred_fallthru
      _
    // Predicated region
    $region66: #{_lambda_.1} parent=1 // pred_check
      _
    $region67: #{_lambda_.1} parent=1 // pred_check_branch
      %58 = sbr.rel (0) target = $region69
    $region68: #{_lambda_.1} parent=1 // pred_region
      _
    $region69: #{_lambda_.1} parent=1 // pred_fallthru
      _
    // Predicated region
    $region70: #{_lambda_.1} parent=1 // pred_check
      _
    $region71: #{_lambda_.1} parent=1 // pred_check_branch
      %60 = sbr.rel (0) target = $region73
    $region72: #{_lambda_.1} parent=1 // pred_region
      _
    $region73: #{_lambda_.1} parent=1 // pred_fallthru
      _
    // Predicated region
    $region74: #{_lambda_.1} parent=1 // pred_check
      _
    $region75: #{_lambda_.1} parent=1 // pred_check_branch
      %62 = sbr.rel (0) target = $region77
    $region76: #{_lambda_.1} parent=1 // pred_region
      _
    $region77: #{_lambda_.1} parent=1 // pred_fallthru
      _
    %v64 = vld [vmem:[%s0] sm:$0xff]
    %v65 = vld [vmem:[%s0 + $0x8] sm:$0xff]
    %vm66 = vcmask 523264
    %v67 = vsel %vm66, %v64, 0.0
    %68 = vadd.xlane.f32.xlu0 %v67
    %v69 = vpop.xlane.xlu0 %68
    %v70 = vsel %vm66, %v65, 0.0
    %71 = vadd.xlane.f32.xlu0 %v70
    %v72 = vpop.xlane.xlu0 %71
    %v73 = vrcp.pop 64.0
    %v74 = vmul.f32 %v69, %v73
    %v75 = vmul.f32 %v72, %v73
    %v76 = vsub.f32 %v64, %v74
    %v77 = vsub.f32 %v65, %v75
    %v78 = vmul.f32 %v76, %v76
    %v79 = vmul.f32 %v77, %v77
    %v80 = vsel %vm66, %v78, 0.0
    %81 = vadd.xlane.f32.xlu0 %v80
    %v82 = vpop.xlane.xlu0 %81
    %v83 = vsel %vm66, %v79, 0.0
    %84 = vadd.xlane.f32.xlu0 %v83
    %v85 = vpop.xlane.xlu0 %84
    %v86 = vmul.f32 %v82, %v73
    %v87 = vmul.f32 %v85, %v73
    %v88 = vadd.f32 %v86, 1e-05
    %v89 = vadd.f32 %v87, 1e-05
    %v90 = vrsqrt.pop %v88
    %v91 = vrsqrt.pop %v89
    %v92 = vmul.f32 %v76, %v90
    %v93 = vmul.f32 %v77, %v91
    %v94 = vld [vmem:[%s1] sm:$0x1]
    %v96 = vlaneseq
    %v97 = vshrl.u32 %v96, 7
    %v98 = vsub.s32 0, %v97
    %v99 = vrot.slane %v94, %v98
    %v101 = vmul.f32 %v92, %v99
    %v102 = vmul.f32 %v93, %v99
    %v103 = vld [vmem:[%s2] sm:$0x1]
    %v105 = vlaneseq
    %v106 = vshrl.u32 %v105, 7
    %v107 = vsub.s32 0, %v106
    %v108 = vrot.slane %v103, %v107
    %v110 = vadd.f32 %v101, %v108
    %v111 = vadd.f32 %v102, %v108
    %v112 = vpack.c.bf16 %v111, %v110
    %v113 = vld [vmem:[%s3] sm:$0xff]
    %v114 = vld [vmem:[%s3 + $0x8] sm:$0xff]
    %v115 = vld [vmem:[%s3 + $0x10] sm:$0xff]
    %v116 = vld [vmem:[%s3 + $0x18] sm:$0xff]
    %v117 = vld [vmem:[%s3 + $0x20] sm:$0xff]
    %v118 = vld [vmem:[%s3 + $0x28] sm:$0xff]
    %v119 = vld [vmem:[%s3 + $0x30] sm:$0xff]
    %v120 = vld [vmem:[%s3 + $0x38] sm:$0xff]
    %v121 = vld [vmem:[%s4] sm:$0x3]
    %v123 = vlaneseq
    %v124 = vshrl.u32 %v123, 7
    %v125 = vsub.s32 0, %v124
    %v126 = vrot.slane %v121, %v125
    %v127 = vlaneseq
    %v128 = vshrl.u32 %v127, 7
    %v129 = vsub.s32 1, %v128
    %v130 = vrot.slane %v121, %v129
    %v141 = vunpack.c.l.b16 %v113
    %v142 = vunpack.c.h.b16 %v113
    %v143 = vunpack.c.l.b16 %v114
    %v144 = vunpack.c.h.b16 %v114
    %v145 = vunpack.c.l.b16 %v115
    %v146 = vunpack.c.h.b16 %v115
    %v147 = vunpack.c.l.b16 %v116
    %v148 = vunpack.c.h.b16 %v116
    %v149 = vunpack.c.l.b16 %v117
    %v150 = vunpack.c.h.b16 %v117
    %v151 = vunpack.c.l.b16 %v118
    %v152 = vunpack.c.h.b16 %v118
    %v153 = vunpack.c.l.b16 %v119
    %v154 = vunpack.c.h.b16 %v119
    %v155 = vunpack.c.l.b16 %v120
    %v156 = vunpack.c.h.b16 %v120
    %v157 = vpack.c.b16 %v143, %v141
    %v158 = vpack.c.b16 %v144, %v142
    %v159 = vpack.c.b16 %v147, %v145
    %v160 = vpack.c.b16 %v148, %v146
    %v161 = vpack.c.b16 %v151, %v149
    %v162 = vpack.c.b16 %v152, %v150
    %v163 = vpack.c.b16 %v155, %v153
    %v164 = vpack.c.b16 %v156, %v154
    %v174 = vsel %vm66, %v112, 0
    %176 = vmatprep.subr.bf16.mxu0 %v158
    %177 = vmatpush1.bf16.msra.mxu0 %v157
    %178 = vmatprep.subr.bf16.mxu0 %v160
    %179 = vmatpush1.bf16.msra.mxu0 %v159
    %180 = vmatprep.subr.bf16.mxu0 %v162
    %181 = vmatpush1.bf16.msra.mxu0 %v161
    %182 = vmatprep.subr.bf16.mxu0 %v164
    %183 = vmatpush1.bf16.msra.mxu0 %v163
    %184 = vmatprep.subr.bf16.mxu0 0
    %185 = vmatpush1.bf16.msra.mxu0 0
    %186 = vmatprep.subr.bf16.mxu0 0
    %187 = vmatpush1.bf16.msra.mxu0 0
    %188 = vmatprep.subr.bf16.mxu0 0
    %189 = vmatpush1.bf16.msra.mxu0 0
    %190 = vmatprep.subr.bf16.mxu0 0
    %191 = vmatpush1.bf16.msra.mxu0 0
    %192 = vmatprep.subr.bf16.mxu0 0
    %193 = vmatpush1.bf16.msra.mxu0 0
    %194 = vmatprep.subr.bf16.mxu0 0
    %195 = vmatpush1.bf16.msra.mxu0 0
    %196 = vmatprep.subr.bf16.mxu0 0
    %197 = vmatpush1.bf16.msra.mxu0 0
    %198 = vmatprep.subr.bf16.mxu0 0
    %199 = vmatpush1.bf16.msra.mxu0 0
    %200 = vmatprep.subr.bf16.mxu0 0
    %201 = vmatpush1.bf16.msra.mxu0 0
    %202 = vmatprep.subr.bf16.mxu0 0
    %203 = vmatpush1.bf16.msra.mxu0 0
    %204 = vmatprep.subr.bf16.mxu0 0
    %205 = vmatpush1.bf16.msra.mxu0 0
    %206 = vmatprep.subr.bf16.mxu0 0
    %207 = vmatpush1.bf16.msra.mxu0 0
    %208 = vmatprep.mubr.bf16.mxu0 0
    %209 = vmatmul.mubr.bf16.gmra.mrb[0].mxu0 %v174
    %v210 = vpop.f32.mrb[0].mxu0
    %v211 = vadd.f32 %v126, %v210
    %v212 = vpop.f32.mrb[0].mxu0
    %v213 = vadd.f32 %v130, %v212
    %v214 = vpop.f32.mrb[0].mxu0
    %v215 = vadd.f32 %v126, %v214
    %v216 = vpop.f32.mrb[0].mxu0
    %v217 = vadd.f32 %v130, %v216
    %218 = vdwg.mxu0
    %v219 = vld [vmem:[%s5] sm:$0xf]
    %v220 = vld [vmem:[%s5 + $0x4] sm:$0xf]
    %v221 = vld [vmem:[%s5 + $0x8] sm:$0xf]
    %v222 = vld [vmem:[%s5 + $0xc] sm:$0xf]
    %v223 = vld [vmem:[%s5 + $0x10] sm:$0xf]
    %v224 = vld [vmem:[%s5 + $0x14] sm:$0xf]
    %v225 = vld [vmem:[%s5 + $0x18] sm:$0xf]
    %v226 = vld [vmem:[%s5 + $0x1c] sm:$0xf]
    %v227 = vpack.c.bf16 %v211, %v211
    %v228 = vpack.c.bf16 %v215, %v215
    %v229 = vpack.c.bf16 %v213, %v213
    %v230 = vpack.c.bf16 %v217, %v217
    %232 = vrot.lane.b32.xlu0 %v227, 64
    %v233 = vpop.permute.xlu0 %232
    %vm234 = vcmask 64512
    %v236 = vsel %vm234, %v227, 0
    %v239 = vsel %vm234, %v233, 0
    %241 = vmatprep.subr.bf16.mxu0 0
    %242 = vmatpush1.bf16.xpose.msra.mxu0 %v239
    %243 = vmatprep.subr.bf16.mxu0 0
    %244 = vmatpush1.bf16.xpose.msra.mxu0 0
    %245 = vmatprep.subr.bf16.mxu0 0
    %246 = vmatpush1.bf16.xpose.msra.mxu0 0
    %247 = vmatprep.subr.bf16.mxu0 0
    %248 = vmatpush1.bf16.xpose.msra.mxu0 0
    %249 = vmatprep.subr.bf16.mxu0 0
    %250 = vmatpush1.bf16.xpose.msra.mxu0 0
    %251 = vmatprep.subr.bf16.mxu0 0
    %252 = vmatpush1.bf16.xpose.msra.mxu0 0
    %253 = vmatprep.subr.bf16.mxu0 0
    %254 = vmatpush1.bf16.xpose.msra.mxu0 0
    %255 = vmatprep.subr.bf16.mxu0 0
    %256 = vmatpush1.bf16.xpose.msra.mxu0 0
    %257 = vmatprep.subr.bf16.mxu0 0
    %258 = vmatpush1.bf16.xpose.msra.mxu0 0
    %259 = vmatprep.subr.bf16.mxu0 0
    %260 = vmatpush1.bf16.xpose.msra.mxu0 0
    %261 = vmatprep.subr.bf16.mxu0 0
    %262 = vmatpush1.bf16.xpose.msra.mxu0 0
    %263 = vmatprep.subr.bf16.mxu0 0
    %264 = vmatpush1.bf16.xpose.msra.mxu0 0
    %265 = vmatprep.subr.bf16.mxu0 0
    %266 = vmatpush1.bf16.xpose.msra.mxu0 0
    %267 = vmatprep.subr.bf16.mxu0 0
    %268 = vmatpush1.bf16.xpose.msra.mxu0 0
    %269 = vmatprep.subr.bf16.mxu0 0
    %270 = vmatpush1.bf16.xpose.msra.mxu0 0
    %271 = vmatprep.subr.bf16.mxu0 0
    %272 = vmatpush1.bf16.xpose.msra.mxu0 0
    %273 = vmatprep.mubr.bf16.mxu0 0
    %274 = vmatmul.mubr.bf16.gmra.mrb[0].mxu0 %v236
    %v275 = vpop.f32.mrb[0].mxu0
    %v276 = vadd.f32 0.0, %v275
    %v277 = vpop.f32.mrb[0].mxu0
    %v278 = vpop.f32.mrb[0].mxu0
    %v279 = vpop.f32.mrb[0].mxu0
    %280 = vdwg.mxu0
    %282 = vrot.lane.b32.xlu0 %v228, 64
    %v283 = vpop.permute.xlu0 %282
    %v285 = vsel %vm234, %v228, 0
    %v288 = vsel %vm234, %v283, 0
    %290 = vmatprep.subr.bf16.mxu0 0
    %291 = vmatpush1.bf16.xpose.msra.mxu0 %v288
    %292 = vmatprep.subr.bf16.mxu0 0
    %293 = vmatpush1.bf16.xpose.msra.mxu0 0
    %294 = vmatprep.subr.bf16.mxu0 0
    %295 = vmatpush1.bf16.xpose.msra.mxu0 0
    %296 = vmatprep.subr.bf16.mxu0 0
    %297 = vmatpush1.bf16.xpose.msra.mxu0 0
    %298 = vmatprep.subr.bf16.mxu0 0
    %299 = vmatpush1.bf16.xpose.msra.mxu0 0
    %300 = vmatprep.subr.bf16.mxu0 0
    %301 = vmatpush1.bf16.xpose.msra.mxu0 0
    %302 = vmatprep.subr.bf16.mxu0 0
    %303 = vmatpush1.bf16.xpose.msra.mxu0 0
    %304 = vmatprep.subr.bf16.mxu0 0
    %305 = vmatpush1.bf16.xpose.msra.mxu0 0
    %306 = vmatprep.subr.bf16.mxu0 0
    %307 = vmatpush1.bf16.xpose.msra.mxu0 0
    %308 = vmatprep.subr.bf16.mxu0 0
    %309 = vmatpush1.bf16.xpose.msra.mxu0 0
    %310 = vmatprep.subr.bf16.mxu0 0
    %311 = vmatpush1.bf16.xpose.msra.mxu0 0
    %312 = vmatprep.subr.bf16.mxu0 0
    %313 = vmatpush1.bf16.xpose.msra.mxu0 0
    %314 = vmatprep.subr.bf16.mxu0 0
    %315 = vmatpush1.bf16.xpose.msra.mxu0 0
    %316 = vmatprep.subr.bf16.mxu0 0
    %317 = vmatpush1.bf16.xpose.msra.mxu0 0
    %318 = vmatprep.subr.bf16.mxu0 0
    %319 = vmatpush1.bf16.xpose.msra.mxu0 0
    %320 = vmatprep.subr.bf16.mxu0 0
    %321 = vmatpush1.bf16.xpose.msra.mxu0 0
    %322 = vmatprep.mubr.bf16.mxu0 0
    %323 = vmatmul.mubr.bf16.gmra.mrb[0].mxu0 %v285
    %v324 = vpop.f32.mrb[0].mxu0
    %v325 = vadd.f32 0.0, %v324
    %v326 = vpop.f32.mrb[0].mxu0
    %v327 = vpop.f32.mrb[0].mxu0
    %v328 = vpop.f32.mrb[0].mxu0
    %329 = vdwg.mxu0
    %v330 = vsel %vm234, %v276, -inf
    %331 = vmax.xlane.f32.xlu0 %v330
    %v332 = vpop.xlane.xlu0 %331
    %v333 = vsel %vm234, %v325, -inf
    %334 = vmax.xlane.f32.xlu0 %v333
    %v335 = vpop.xlane.xlu0 %334
    %v336 = vsub.f32 %v276, %v332
    %v337 = vsub.f32 %v325, %v335
    %v338 = vmul.f32 %v336, 1.442695
    %v339 = vpow.pop %v338
    %v340 = vmul.f32 %v337, 1.442695
    %v341 = vpow.pop %v340
    %v342 = vsel %vm234, %v339, 0.0
    %343 = vadd.xlane.f32.xlu0 %v342
    %v344 = vpop.xlane.xlu0 %343
    %v345 = vsel %vm234, %v341, 0.0
    %346 = vadd.xlane.f32.xlu0 %v345
    %v347 = vpop.xlane.xlu0 %346
    %v348 = vrcp.pop %v344
    %v349 = vrcp.pop %v347
    %v350 = vmul.f32 %v339, %v348
    %v351 = vmul.f32 %v341, %v349
    %v352 = vpack.c.bf16 %v350, %v350
    %v353 = vpack.c.bf16 %v351, %v351
    %v355 = vsel %vm234, %v352, 0
    %vm357 = vcmask 1043456
    %v359 = vsel %vm357, %v229, 0
    %361 = vmatprep.subr.bf16.mxu0 0
    %362 = vmatpush1.bf16.msra.mxu0 %v359
    %363 = vmatprep.subr.bf16.mxu0 0
    %364 = vmatpush1.bf16.msra.mxu0 0
    %365 = vmatprep.subr.bf16.mxu0 0
    %366 = vmatpush1.bf16.msra.mxu0 0
    %367 = vmatprep.subr.bf16.mxu0 0
    %368 = vmatpush1.bf16.msra.mxu0 0
    %369 = vmatprep.subr.bf16.mxu0 0
    %370 = vmatpush1.bf16.msra.mxu0 0
    %371 = vmatprep.subr.bf16.mxu0 0
    %372 = vmatpush1.bf16.msra.mxu0 0
    %373 = vmatprep.subr.bf16.mxu0 0
    %374 = vmatpush1.bf16.msra.mxu0 0
    %375 = vmatprep.subr.bf16.mxu0 0
    %376 = vmatpush1.bf16.msra.mxu0 0
    %377 = vmatprep.subr.bf16.mxu0 0
    %378 = vmatpush1.bf16.msra.mxu0 0
    %379 = vmatprep.subr.bf16.mxu0 0
    %380 = vmatpush1.bf16.msra.mxu0 0
    %381 = vmatprep.subr.bf16.mxu0 0
    %382 = vmatpush1.bf16.msra.mxu0 0
    %383 = vmatprep.subr.bf16.mxu0 0
    %384 = vmatpush1.bf16.msra.mxu0 0
    %385 = vmatprep.subr.bf16.mxu0 0
    %386 = vmatpush1.bf16.msra.mxu0 0
    %387 = vmatprep.subr.bf16.mxu0 0
    %388 = vmatpush1.bf16.msra.mxu0 0
    %389 = vmatprep.subr.bf16.mxu0 0
    %390 = vmatpush1.bf16.msra.mxu0 0
    %391 = vmatprep.subr.bf16.mxu0 0
    %392 = vmatpush1.bf16.msra.mxu0 0
    %393 = vmatprep.mubr.bf16.mxu0 0
    %394 = vmatmul.mubr.bf16.gmra.mrb[0].mxu0 %v355
    %v395 = vpop.f32.mrb[0].mxu0
    %v396 = vadd.f32 0.0, %v395
    %v397 = vpop.f32.mrb[0].mxu0
    %v398 = vpop.f32.mrb[0].mxu0
    %v399 = vpop.f32.mrb[0].mxu0
    %400 = vdwg.mxu0
    %v402 = vsel %vm234, %v353, 0
    %v405 = vsel %vm357, %v230, 0
    %407 = vmatprep.subr.bf16.mxu0 0
    %408 = vmatpush1.bf16.msra.mxu0 %v405
    %409 = vmatprep.subr.bf16.mxu0 0
    %410 = vmatpush1.bf16.msra.mxu0 0
    %411 = vmatprep.subr.bf16.mxu0 0
    %412 = vmatpush1.bf16.msra.mxu0 0
    %413 = vmatprep.subr.bf16.mxu0 0
    %414 = vmatpush1.bf16.msra.mxu0 0
    %415 = vmatprep.subr.bf16.mxu0 0
    %416 = vmatpush1.bf16.msra.mxu0 0
    %417 = vmatprep.subr.bf16.mxu0 0
    %418 = vmatpush1.bf16.msra.mxu0 0
    %419 = vmatprep.subr.bf16.mxu0 0
    %420 = vmatpush1.bf16.msra.mxu0 0
    %421 = vmatprep.subr.bf16.mxu0 0
    %422 = vmatpush1.bf16.msra.mxu0 0
    %423 = vmatprep.subr.bf16.mxu0 0
    %424 = vmatpush1.bf16.msra.mxu0 0
    %425 = vmatprep.subr.bf16.mxu0 0
    %426 = vmatpush1.bf16.msra.mxu0 0
    %427 = vmatprep.subr.bf16.mxu0 0
    %428 = vmatpush1.bf16.msra.mxu0 0
    %429 = vmatprep.subr.bf16.mxu0 0
    %430 = vmatpush1.bf16.msra.mxu0 0
    %431 = vmatprep.subr.bf16.mxu0 0
    %432 = vmatpush1.bf16.msra.mxu0 0
    %433 = vmatprep.subr.bf16.mxu0 0
    %434 = vmatpush1.bf16.msra.mxu0 0
    %435 = vmatprep.subr.bf16.mxu0 0
    %436 = vmatpush1.bf16.msra.mxu0 0
    %437 = vmatprep.subr.bf16.mxu0 0
    %438 = vmatpush1.bf16.msra.mxu0 0
    %439 = vmatprep.mubr.bf16.mxu0 0
    %440 = vmatmul.mubr.bf16.gmra.mrb[0].mxu0 %v402
    %v441 = vpop.f32.mrb[0].mxu0
    %v442 = vadd.f32 0.0, %v441
    %v443 = vpop.f32.mrb[0].mxu0
    %v444 = vpop.f32.mrb[0].mxu0
    %v445 = vpop.f32.mrb[0].mxu0
    %446 = vdwg.mxu0
    %v447 = vpack.c.bf16 %v442, %v396
    %448 = vrot.lane.b32.xlu0 %v227, 120
    %v449 = vpop.permute.xlu0 %448
    %450 = vrot.lane.b32.xlu0 %v227, 56
    %v451 = vpop.permute.xlu0 %450
    %v453 = vsel %vm234, %v449, 0
    %v456 = vsel %vm234, %v451, 0
    %458 = vmatprep.subr.bf16.mxu0 0
    %459 = vmatpush1.bf16.xpose.msra.mxu0 %v456
    %460 = vmatprep.subr.bf16.mxu0 0
    %461 = vmatpush1.bf16.xpose.msra.mxu0 0
    %462 = vmatprep.subr.bf16.mxu0 0
    %463 = vmatpush1.bf16.xpose.msra.mxu0 0
    %464 = vmatprep.subr.bf16.mxu0 0
    %465 = vmatpush1.bf16.xpose.msra.mxu0 0
    %466 = vmatprep.subr.bf16.mxu0 0
    %467 = vmatpush1.bf16.xpose.msra.mxu0 0
    %468 = vmatprep.subr.bf16.mxu0 0
    %469 = vmatpush1.bf16.xpose.msra.mxu0 0
    %470 = vmatprep.subr.bf16.mxu0 0
    %471 = vmatpush1.bf16.xpose.msra.mxu0 0
    %472 = vmatprep.subr.bf16.mxu0 0
    %473 = vmatpush1.bf16.xpose.msra.mxu0 0
    %474 = vmatprep.subr.bf16.mxu0 0
    %475 = vmatpush1.bf16.xpose.msra.mxu0 0
    %476 = vmatprep.subr.bf16.mxu0 0
    %477 = vmatpush1.bf16.xpose.msra.mxu0 0
    %478 = vmatprep.subr.bf16.mxu0 0
    %479 = vmatpush1.bf16.xpose.msra.mxu0 0
    %480 = vmatprep.subr.bf16.mxu0 0
    %481 = vmatpush1.bf16.xpose.msra.mxu0 0
    %482 = vmatprep.subr.bf16.mxu0 0
    %483 = vmatpush1.bf16.xpose.msra.mxu0 0
    %484 = vmatprep.subr.bf16.mxu0 0
    %485 = vmatpush1.bf16.xpose.msra.mxu0 0
    %486 = vmatprep.subr.bf16.mxu0 0
    %487 = vmatpush1.bf16.xpose.msra.mxu0 0
    %488 = vmatprep.subr.bf16.mxu0 0
    %489 = vmatpush1.bf16.xpose.msra.mxu0 0
    %490 = vmatprep.mubr.bf16.mxu0 0
    %491 = vmatmul.mubr.bf16.gmra.mrb[0].mxu0 %v453
    %v492 = vpop.f32.mrb[0].mxu0
    %v493 = vadd.f32 0.0, %v492
    %v494 = vpop.f32.mrb[0].mxu0
    %v495 = vpop.f32.mrb[0].mxu0
    %v496 = vpop.f32.mrb[0].mxu0
    %497 = vdwg.mxu0
    %498 = vrot.lane.b32.xlu0 %v228, 120
    %v499 = vpop.permute.xlu0 %498
    %500 = vrot.lane.b32.xlu0 %v228, 56
    %v501 = vpop.permute.xlu0 %500
    %v503 = vsel %vm234, %v499, 0
    %v506 = vsel %vm234, %v501, 0
    %508 = vmatprep.subr.bf16.mxu0 0
    %509 = vmatpush1.bf16.xpose.msra.mxu0 %v506
    %510 = vmatprep.subr.bf16.mxu0 0
    %511 = vmatpush1.bf16.xpose.msra.mxu0 0
    %512 = vmatprep.subr.bf16.mxu0 0
    %513 = vmatpush1.bf16.xpose.msra.mxu0 0
    %514 = vmatprep.subr.bf16.mxu0 0
    %515 = vmatpush1.bf16.xpose.msra.mxu0 0
    %516 = vmatprep.subr.bf16.mxu0 0
    %517 = vmatpush1.bf16.xpose.msra.mxu0 0
    %518 = vmatprep.subr.bf16.mxu0 0
    %519 = vmatpush1.bf16.xpose.msra.mxu0 0
    %520 = vmatprep.subr.bf16.mxu0 0
    %521 = vmatpush1.bf16.xpose.msra.mxu0 0
    %522 = vmatprep.subr.bf16.mxu0 0
    %523 = vmatpush1.bf16.xpose.msra.mxu0 0
    %524 = vmatprep.subr.bf16.mxu0 0
    %525 = vmatpush1.bf16.xpose.msra.mxu0 0
    %526 = vmatprep.subr.bf16.mxu0 0
    %527 = vmatpush1.bf16.xpose.msra.mxu0 0
    %528 = vmatprep.subr.bf16.mxu0 0
    %529 = vmatpush1.bf16.xpose.msra.mxu0 0
    %530 = vmatprep.subr.bf16.mxu0 0
    %531 = vmatpush1.bf16.xpose.msra.mxu0 0
    %532 = vmatprep.subr.bf16.mxu0 0
    %533 = vmatpush1.bf16.xpose.msra.mxu0 0
    %534 = vmatprep.subr.bf16.mxu0 0
    %535 = vmatpush1.bf16.xpose.msra.mxu0 0
    %536 = vmatprep.subr.bf16.mxu0 0
    %537 = vmatpush1.bf16.xpose.msra.mxu0 0
    %538 = vmatprep.subr.bf16.mxu0 0
    %539 = vmatpush1.bf16.xpose.msra.mxu0 0
    %540 = vmatprep.mubr.bf16.mxu0 0
    %541 = vmatmul.mubr.bf16.gmra.mrb[0].mxu0 %v503
    %v542 = vpop.f32.mrb[0].mxu0
    %v543 = vadd.f32 0.0, %v542
    %v544 = vpop.f32.mrb[0].mxu0
    %v545 = vpop.f32.mrb[0].mxu0
    %v546 = vpop.f32.mrb[0].mxu0
    %547 = vdwg.mxu0
    %v548 = vsel %vm234, %v493, -inf
    %549 = vmax.xlane.f32.xlu0 %v548
    %v550 = vpop.xlane.xlu0 %549
    %v551 = vsel %vm234, %v543, -inf
    %552 = vmax.xlane.f32.xlu0 %v551
    %v553 = vpop.xlane.xlu0 %552
    %v554 = vsub.f32 %v493, %v550
    %v555 = vsub.f32 %v543, %v553
    %v556 = vmul.f32 %v554, 1.442695
    %v557 = vpow.pop %v556
    %v558 = vmul.f32 %v555, 1.442695
    %v559 = vpow.pop %v558
    %v560 = vsel %vm234, %v557, 0.0
    %561 = vadd.xlane.f32.xlu0 %v560
    %v562 = vpop.xlane.xlu0 %561
    %v563 = vsel %vm234, %v559, 0.0
    %564 = vadd.xlane.f32.xlu0 %v563
    %v565 = vpop.xlane.xlu0 %564
    %v566 = vrcp.pop %v562
    %v567 = vrcp.pop %v565
    %v568 = vmul.f32 %v557, %v566
    %v569 = vmul.f32 %v559, %v567
    %v570 = vpack.c.bf16 %v568, %v568
    %v571 = vpack.c.bf16 %v569, %v569
    %573 = vrot.lane.b32.xlu0 %v229, 120
    %v574 = vpop.permute.xlu0 %573
    %v576 = vsel %vm234, %v570, 0
    %v579 = vsel %vm357, %v574, 0
    %581 = vmatprep.subr.bf16.mxu0 0
    %582 = vmatpush1.bf16.msra.mxu0 %v579
    %583 = vmatprep.subr.bf16.mxu0 0
    %584 = vmatpush1.bf16.msra.mxu0 0
    %585 = vmatprep.subr.bf16.mxu0 0
    %586 = vmatpush1.bf16.msra.mxu0 0
    %587 = vmatprep.subr.bf16.mxu0 0
    %588 = vmatpush1.bf16.msra.mxu0 0
    %589 = vmatprep.subr.bf16.mxu0 0
    %590 = vmatpush1.bf16.msra.mxu0 0
    %591 = vmatprep.subr.bf16.mxu0 0
    %592 = vmatpush1.bf16.msra.mxu0 0
    %593 = vmatprep.subr.bf16.mxu0 0
    %594 = vmatpush1.bf16.msra.mxu0 0
    %595 = vmatprep.subr.bf16.mxu0 0
    %596 = vmatpush1.bf16.msra.mxu0 0
    %597 = vmatprep.subr.bf16.mxu0 0
    %598 = vmatpush1.bf16.msra.mxu0 0
    %599 = vmatprep.subr.bf16.mxu0 0
    %600 = vmatpush1.bf16.msra.mxu0 0
    %601 = vmatprep.subr.bf16.mxu0 0
    %602 = vmatpush1.bf16.msra.mxu0 0
    %603 = vmatprep.subr.bf16.mxu0 0
    %604 = vmatpush1.bf16.msra.mxu0 0
    %605 = vmatprep.subr.bf16.mxu0 0
    %606 = vmatpush1.bf16.msra.mxu0 0
    %607 = vmatprep.subr.bf16.mxu0 0
    %608 = vmatpush1.bf16.msra.mxu0 0
    %609 = vmatprep.subr.bf16.mxu0 0
    %610 = vmatpush1.bf16.msra.mxu0 0
    %611 = vmatprep.subr.bf16.mxu0 0
    %612 = vmatpush1.bf16.msra.mxu0 0
    %613 = vmatprep.mubr.bf16.mxu0 0
    %614 = vmatmul.mubr.bf16.gmra.mrb[0].mxu0 %v576
    %v615 = vpop.f32.mrb[0].mxu0
    %v616 = vadd.f32 0.0, %v615
    %v617 = vpop.f32.mrb[0].mxu0
    %v618 = vpop.f32.mrb[0].mxu0
    %v619 = vpop.f32.mrb[0].mxu0
    %620 = vdwg.mxu0
    %622 = vrot.lane.b32.xlu0 %v230, 120
    %v623 = vpop.permute.xlu0 %622
    %v625 = vsel %vm234, %v571, 0
    %v628 = vsel %vm357, %v623, 0
    %630 = vmatprep.subr.bf16.mxu0 0
    %631 = vmatpush1.bf16.msra.mxu0 %v628
    %632 = vmatprep.subr.bf16.mxu0 0
    %633 = vmatpush1.bf16.msra.mxu0 0
    %634 = vmatprep.subr.bf16.mxu0 0
    %635 = vmatpush1.bf16.msra.mxu0 0
    %636 = vmatprep.subr.bf16.mxu0 0
    %637 = vmatpush1.bf16.msra.mxu0 0
    %638 = vmatprep.subr.bf16.mxu0 0
    %639 = vmatpush1.bf16.msra.mxu0 0
    %640 = vmatprep.subr.bf16.mxu0 0
    %641 = vmatpush1.bf16.msra.mxu0 0
    %642 = vmatprep.subr.bf16.mxu0 0
    %643 = vmatpush1.bf16.msra.mxu0 0
    %644 = vmatprep.subr.bf16.mxu0 0
    %645 = vmatpush1.bf16.msra.mxu0 0
    %646 = vmatprep.subr.bf16.mxu0 0
    %647 = vmatpush1.bf16.msra.mxu0 0
    %648 = vmatprep.subr.bf16.mxu0 0
    %649 = vmatpush1.bf16.msra.mxu0 0
    %650 = vmatprep.subr.bf16.mxu0 0
    %651 = vmatpush1.bf16.msra.mxu0 0
    %652 = vmatprep.subr.bf16.mxu0 0
    %653 = vmatpush1.bf16.msra.mxu0 0
    %654 = vmatprep.subr.bf16.mxu0 0
    %655 = vmatpush1.bf16.msra.mxu0 0
    %656 = vmatprep.subr.bf16.mxu0 0
    %657 = vmatpush1.bf16.msra.mxu0 0
    %658 = vmatprep.subr.bf16.mxu0 0
    %659 = vmatpush1.bf16.msra.mxu0 0
    %660 = vmatprep.subr.bf16.mxu0 0
    %661 = vmatpush1.bf16.msra.mxu0 0
    %662 = vmatprep.mubr.bf16.mxu0 0
    %663 = vmatmul.mubr.bf16.gmra.mrb[0].mxu0 %v625
    %v664 = vpop.f32.mrb[0].mxu0
    %v665 = vadd.f32 0.0, %v664
    %v666 = vpop.f32.mrb[0].mxu0
    %v667 = vpop.f32.mrb[0].mxu0
    %v668 = vpop.f32.mrb[0].mxu0
    %669 = vdwg.mxu0
    %v670 = vpack.c.bf16 %v665, %v616
    %v672 = vsel %vm234, %v670, 0
    %v675 = vsel %vm357, %v220, 0
    %677 = vmatprep.subr.bf16.mxu0 0
    %678 = vmatpush1.bf16.msra.mxu0 %v675
    %679 = vmatprep.subr.bf16.mxu0 0
    %680 = vmatpush1.bf16.msra.mxu0 0
    %681 = vmatprep.subr.bf16.mxu0 0
    %682 = vmatpush1.bf16.msra.mxu0 0
    %683 = vmatprep.subr.bf16.mxu0 0
    %684 = vmatpush1.bf16.msra.mxu0 0
    %685 = vmatprep.subr.bf16.mxu0 0
    %686 = vmatpush1.bf16.msra.mxu0 0
    %687 = vmatprep.subr.bf16.mxu0 0
    %688 = vmatpush1.bf16.msra.mxu0 0
    %689 = vmatprep.subr.bf16.mxu0 0
    %690 = vmatpush1.bf16.msra.mxu0 0
    %691 = vmatprep.subr.bf16.mxu0 0
    %692 = vmatpush1.bf16.msra.mxu0 0
    %693 = vmatprep.subr.bf16.mxu0 0
    %694 = vmatpush1.bf16.msra.mxu0 0
    %695 = vmatprep.subr.bf16.mxu0 0
    %696 = vmatpush1.bf16.msra.mxu0 0
    %697 = vmatprep.subr.bf16.mxu0 0
    %698 = vmatpush1.bf16.msra.mxu0 0
    %699 = vmatprep.subr.bf16.mxu0 0
    %700 = vmatpush1.bf16.msra.mxu0 0
    %701 = vmatprep.subr.bf16.mxu0 0
    %702 = vmatpush1.bf16.msra.mxu0 0
    %703 = vmatprep.subr.bf16.mxu0 0
    %704 = vmatpush1.bf16.msra.mxu0 0
    %705 = vmatprep.subr.bf16.mxu0 0
    %706 = vmatpush1.bf16.msra.mxu0 0
    %707 = vmatprep.subr.bf16.mxu0 0
    %708 = vmatpush1.bf16.msra.mxu0 0
    %709 = vmatprep.mubr.bf16.mxu0 0
    %710 = vmatmul.mubr.bf16.gmra.mrb[0].mxu0 %v672
    %v711 = vpop.f32.mrb[0].mxu0
    %v712 = vadd.f32 0.0, %v711
    %v713 = vpop.f32.mrb[0].mxu0
    %v714 = vpop.f32.mrb[0].mxu0
    %v715 = vadd.f32 0.0, %v714
    %v716 = vpop.f32.mrb[0].mxu0
    %717 = vdwg.mxu0
    %v719 = vsel %vm234, %v447, 0
    %v722 = vsel %vm357, %v219, 0
    %724 = vmatprep.subr.bf16.mxu0 0
    %725 = vmatpush1.bf16.msra.mxu0 %v722
    %726 = vmatprep.subr.bf16.mxu0 0
    %727 = vmatpush1.bf16.msra.mxu0 0
    %728 = vmatprep.subr.bf16.mxu0 0
    %729 = vmatpush1.bf16.msra.mxu0 0
    %730 = vmatprep.subr.bf16.mxu0 0
    %731 = vmatpush1.bf16.msra.mxu0 0
    %732 = vmatprep.subr.bf16.mxu0 0
    %733 = vmatpush1.bf16.msra.mxu0 0
    %734 = vmatprep.subr.bf16.mxu0 0
    %735 = vmatpush1.bf16.msra.mxu0 0
    %736 = vmatprep.subr.bf16.mxu0 0
    %737 = vmatpush1.bf16.msra.mxu0 0
    %738 = vmatprep.subr.bf16.mxu0 0
    %739 = vmatpush1.bf16.msra.mxu0 0
    %740 = vmatprep.subr.bf16.mxu0 0
    %741 = vmatpush1.bf16.msra.mxu0 0
    %742 = vmatprep.subr.bf16.mxu0 0
    %743 = vmatpush1.bf16.msra.mxu0 0
    %744 = vmatprep.subr.bf16.mxu0 0
    %745 = vmatpush1.bf16.msra.mxu0 0
    %746 = vmatprep.subr.bf16.mxu0 0
    %747 = vmatpush1.bf16.msra.mxu0 0
    %748 = vmatprep.subr.bf16.mxu0 0
    %749 = vmatpush1.bf16.msra.mxu0 0
    %750 = vmatprep.subr.bf16.mxu0 0
    %751 = vmatpush1.bf16.msra.mxu0 0
    %752 = vmatprep.subr.bf16.mxu0 0
    %753 = vmatpush1.bf16.msra.mxu0 0
    %754 = vmatprep.subr.bf16.mxu0 0
    %755 = vmatpush1.bf16.msra.mxu0 0
    %756 = vmatprep.mubr.bf16.mxu0 0
    %757 = vmatmul.mubr.bf16.gmra.mrb[0].mxu0 %v719
    %v758 = vpop.f32.mrb[0].mxu0
    %v759 = vadd.f32 %v712, %v758
    %v760 = vpop.f32.mrb[0].mxu0
    %v761 = vpop.f32.mrb[0].mxu0
    %v762 = vadd.f32 %v715, %v761
    %v763 = vpop.f32.mrb[0].mxu0
    %764 = vdwg.mxu0
    %765 = vrot.lane.b32.xlu0 %v227, 112
    %v766 = vpop.permute.xlu0 %765
    %767 = vrot.lane.b32.xlu0 %v227, 48
    %v768 = vpop.permute.xlu0 %767
    %v770 = vsel %vm234, %v766, 0
    %v773 = vsel %vm234, %v768, 0
    %775 = vmatprep.subr.bf16.mxu0 0
    %776 = vmatpush1.bf16.xpose.msra.mxu0 %v773
    %777 = vmatprep.subr.bf16.mxu0 0
    %778 = vmatpush1.bf16.xpose.msra.mxu0 0
    %779 = vmatprep.subr.bf16.mxu0 0
    %780 = vmatpush1.bf16.xpose.msra.mxu0 0
    %781 = vmatprep.subr.bf16.mxu0 0
    %782 = vmatpush1.bf16.xpose.msra.mxu0 0
    %783 = vmatprep.subr.bf16.mxu0 0
    %784 = vmatpush1.bf16.xpose.msra.mxu0 0
    %785 = vmatprep.subr.bf16.mxu0 0
    %786 = vmatpush1.bf16.xpose.msra.mxu0 0
    %787 = vmatprep.subr.bf16.mxu0 0
    %788 = vmatpush1.bf16.xpose.msra.mxu0 0
    %789 = vmatprep.subr.bf16.mxu0 0
    %790 = vmatpush1.bf16.xpose.msra.mxu0 0
    %791 = vmatprep.subr.bf16.mxu0 0
    %792 = vmatpush1.bf16.xpose.msra.mxu0 0
    %793 = vmatprep.subr.bf16.mxu0 0
    %794 = vmatpush1.bf16.xpose.msra.mxu0 0
    %795 = vmatprep.subr.bf16.mxu0 0
    %796 = vmatpush1.bf16.xpose.msra.mxu0 0
    %797 = vmatprep.subr.bf16.mxu0 0
    %798 = vmatpush1.bf16.xpose.msra.mxu0 0
    %799 = vmatprep.subr.bf16.mxu0 0
    %800 = vmatpush1.bf16.xpose.msra.mxu0 0
    %801 = vmatprep.subr.bf16.mxu0 0
    %802 = vmatpush1.bf16.xpose.msra.mxu0 0
    %803 = vmatprep.subr.bf16.mxu0 0
    %804 = vmatpush1.bf16.xpose.msra.mxu0 0
    %805 = vmatprep.subr.bf16.mxu0 0
    %806 = vmatpush1.bf16.xpose.msra.mxu0 0
    %807 = vmatprep.mubr.bf16.mxu0 0
    %808 = vmatmul.mubr.bf16.gmra.mrb[0].mxu0 %v770
    %v809 = vpop.f32.mrb[0].mxu0
    %v810 = vadd.f32 0.0, %v809
    %v811 = vpop.f32.mrb[0].mxu0
    %v812 = vpop.f32.mrb[0].mxu0
    %v813 = vpop.f32.mrb[0].mxu0
    %814 = vdwg.mxu0
    %815 = vrot.lane.b32.xlu0 %v228, 112
    %v816 = vpop.permute.xlu0 %815
    %817 = vrot.lane.b32.xlu0 %v228, 48
    %v818 = vpop.permute.xlu0 %817
    %v820 = vsel %vm234, %v816, 0
    %v823 = vsel %vm234, %v818, 0
    %825 = vmatprep.subr.bf16.mxu0 0
    %826 = vmatpush1.bf16.xpose.msra.mxu0 %v823
    %827 = vmatprep.subr.bf16.mxu0 0
    %828 = vmatpush1.bf16.xpose.msra.mxu0 0
    %829 = vmatprep.subr.bf16.mxu0 0
    %830 = vmatpush1.bf16.xpose.msra.mxu0 0
    %831 = vmatprep.subr.bf16.mxu0 0
    %832 = vmatpush1.bf16.xpose.msra.mxu0 0
    %833 = vmatprep.subr.bf16.mxu0 0
    %834 = vmatpush1.bf16.xpose.msra.mxu0 0
    %835 = vmatprep.subr.bf16.mxu0 0
    %836 = vmatpush1.bf16.xpose.msra.mxu0 0
    %837 = vmatprep.subr.bf16.mxu0 0
    %838 = vmatpush1.bf16.xpose.msra.mxu0 0
    %839 = vmatprep.subr.bf16.mxu0 0
    %840 = vmatpush1.bf16.xpose.msra.mxu0 0
    %841 = vmatprep.subr.bf16.mxu0 0
    %842 = vmatpush1.bf16.xpose.msra.mxu0 0
    %843 = vmatprep.subr.bf16.mxu0 0
    %844 = vmatpush1.bf16.xpose.msra.mxu0 0
    %845 = vmatprep.subr.bf16.mxu0 0
    %846 = vmatpush1.bf16.xpose.msra.mxu0 0
    %847 = vmatprep.subr.bf16.mxu0 0
    %848 = vmatpush1.bf16.xpose.msra.mxu0 0
    %849 = vmatprep.subr.bf16.mxu0 0
    %850 = vmatpush1.bf16.xpose.msra.mxu0 0
    %851 = vmatprep.subr.bf16.mxu0 0
    %852 = vmatpush1.bf16.xpose.msra.mxu0 0
    %853 = vmatprep.subr.bf16.mxu0 0
    %854 = vmatpush1.bf16.xpose.msra.mxu0 0
    %855 = vmatprep.subr.bf16.mxu0 0
    %856 = vmatpush1.bf16.xpose.msra.mxu0 0
    %857 = vmatprep.mubr.bf16.mxu0 0
    %858 = vmatmul.mubr.bf16.gmra.mrb[0].mxu0 %v820
    %v859 = vpop.f32.mrb[0].mxu0
    %v860 = vadd.f32 0.0, %v859
    %v861 = vpop.f32.mrb[0].mxu0
    %v862 = vpop.f32.mrb[0].mxu0
    %v863 = vpop.f32.mrb[0].mxu0
    %864 = vdwg.mxu0
    %v865 = vsel %vm234, %v810, -inf
    %866 = vmax.xlane.f32.xlu0 %v865
    %v867 = vpop.xlane.xlu0 %866
    %v868 = vsel %vm234, %v860, -inf
    %869 = vmax.xlane.f32.xlu0 %v868
    %v870 = vpop.xlane.xlu0 %869
    %v871 = vsub.f32 %v810, %v867
    %v872 = vsub.f32 %v860, %v870
    %v873 = vmul.f32 %v871, 1.442695
    %v874 = vpow.pop %v873
    %v875 = vmul.f32 %v872, 1.442695
    %v876 = vpow.pop %v875
    %v877 = vsel %vm234, %v874, 0.0
    %878 = vadd.xlane.f32.xlu0 %v877
    %v879 = vpop.xlane.xlu0 %878
    %v880 = vsel %vm234, %v876, 0.0
    %881 = vadd.xlane.f32.xlu0 %v880
    %v882 = vpop.xlane.xlu0 %881
    %v883 = vrcp.pop %v879
    %v884 = vrcp.pop %v882
    %v885 = vmul.f32 %v874, %v883
    %v886 = vmul.f32 %v876, %v884
    %v887 = vpack.c.bf16 %v885, %v885
    %v888 = vpack.c.bf16 %v886, %v886
    %889 = vrot.lane.b32.xlu0 %v229, 112
    %v890 = vpop.permute.xlu0 %889
    %v892 = vsel %vm234, %v887, 0
    %v895 = vsel %vm357, %v890, 0
    %897 = vmatprep.subr.bf16.mxu0 0
    %898 = vmatpush1.bf16.msra.mxu0 %v895
    %899 = vmatprep.subr.bf16.mxu0 0
    %900 = vmatpush1.bf16.msra.mxu0 0
    %901 = vmatprep.subr.bf16.mxu0 0
    %902 = vmatpush1.bf16.msra.mxu0 0
    %903 = vmatprep.subr.bf16.mxu0 0
    %904 = vmatpush1.bf16.msra.mxu0 0
    %905 = vmatprep.subr.bf16.mxu0 0
    %906 = vmatpush1.bf16.msra.mxu0 0
    %907 = vmatprep.subr.bf16.mxu0 0
    %908 = vmatpush1.bf16.msra.mxu0 0
    %909 = vmatprep.subr.bf16.mxu0 0
    %910 = vmatpush1.bf16.msra.mxu0 0
    %911 = vmatprep.subr.bf16.mxu0 0
    %912 = vmatpush1.bf16.msra.mxu0 0
    %913 = vmatprep.subr.bf16.mxu0 0
    %914 = vmatpush1.bf16.msra.mxu0 0
    %915 = vmatprep.subr.bf16.mxu0 0
    %916 = vmatpush1.bf16.msra.mxu0 0
    %917 = vmatprep.subr.bf16.mxu0 0
    %918 = vmatpush1.bf16.msra.mxu0 0
    %919 = vmatprep.subr.bf16.mxu0 0
    %920 = vmatpush1.bf16.msra.mxu0 0
    %921 = vmatprep.subr.bf16.mxu0 0
    %922 = vmatpush1.bf16.msra.mxu0 0
    %923 = vmatprep.subr.bf16.mxu0 0
    %924 = vmatpush1.bf16.msra.mxu0 0
    %925 = vmatprep.subr.bf16.mxu0 0
    %926 = vmatpush1.bf16.msra.mxu0 0
    %927 = vmatprep.subr.bf16.mxu0 0
    %928 = vmatpush1.bf16.msra.mxu0 0
    %929 = vmatprep.mubr.bf16.mxu0 0
    %930 = vmatmul.mubr.bf16.gmra.mrb[0].mxu0 %v892
    %v931 = vpop.f32.mrb[0].mxu0
    %v932 = vadd.f32 0.0, %v931
    %v933 = vpop.f32.mrb[0].mxu0
    %v934 = vpop.f32.mrb[0].mxu0
    %v935 = vpop.f32.mrb[0].mxu0
    %936 = vdwg.mxu0
    %937 = vrot.lane.b32.xlu0 %v230, 112
    %v938 = vpop.permute.xlu0 %937
    %v940 = vsel %vm234, %v888, 0
    %v943 = vsel %vm357, %v938, 0
    %945 = vmatprep.subr.bf16.mxu0 0
    %946 = vmatpush1.bf16.msra.mxu0 %v943
    %947 = vmatprep.subr.bf16.mxu0 0
    %948 = vmatpush1.bf16.msra.mxu0 0
    %949 = vmatprep.subr.bf16.mxu0 0
    %950 = vmatpush1.bf16.msra.mxu0 0
    %951 = vmatprep.subr.bf16.mxu0 0
    %952 = vmatpush1.bf16.msra.mxu0 0
    %953 = vmatprep.subr.bf16.mxu0 0
    %954 = vmatpush1.bf16.msra.mxu0 0
    %955 = vmatprep.subr.bf16.mxu0 0
    %956 = vmatpush1.bf16.msra.mxu0 0
    %957 = vmatprep.subr.bf16.mxu0 0
    %958 = vmatpush1.bf16.msra.mxu0 0
    %959 = vmatprep.subr.bf16.mxu0 0
    %960 = vmatpush1.bf16.msra.mxu0 0
    %961 = vmatprep.subr.bf16.mxu0 0
    %962 = vmatpush1.bf16.msra.mxu0 0
    %963 = vmatprep.subr.bf16.mxu0 0
    %964 = vmatpush1.bf16.msra.mxu0 0
    %965 = vmatprep.subr.bf16.mxu0 0
    %966 = vmatpush1.bf16.msra.mxu0 0
    %967 = vmatprep.subr.bf16.mxu0 0
    %968 = vmatpush1.bf16.msra.mxu0 0
    %969 = vmatprep.subr.bf16.mxu0 0
    %970 = vmatpush1.bf16.msra.mxu0 0
    %971 = vmatprep.subr.bf16.mxu0 0
    %972 = vmatpush1.bf16.msra.mxu0 0
    %973 = vmatprep.subr.bf16.mxu0 0
    %974 = vmatpush1.bf16.msra.mxu0 0
    %975 = vmatprep.subr.bf16.mxu0 0
    %976 = vmatpush1.bf16.msra.mxu0 0
    %977 = vmatprep.mubr.bf16.mxu0 0
    %978 = vmatmul.mubr.bf16.gmra.mrb[0].mxu0 %v940
    %v979 = vpop.f32.mrb[0].mxu0
    %v980 = vadd.f32 0.0, %v979
    %v981 = vpop.f32.mrb[0].mxu0
    %v982 = vpop.f32.mrb[0].mxu0
    %v983 = vpop.f32.mrb[0].mxu0
    %984 = vdwg.mxu0
    %v985 = vpack.c.bf16 %v980, %v932
    %v987 = vsel %vm234, %v985, 0
    %v990 = vsel %vm357, %v221, 0
    %992 = vmatprep.subr.bf16.mxu0 0
    %993 = vmatpush1.bf16.msra.mxu0 %v990
    %994 = vmatprep.subr.bf16.mxu0 0
    %995 = vmatpush1.bf16.msra.mxu0 0
    %996 = vmatprep.subr.bf16.mxu0 0
    %997 = vmatpush1.bf16.msra.mxu0 0
    %998 = vmatprep.subr.bf16.mxu0 0
    %999 = vmatpush1.bf16.msra.mxu0 0
    %1000 = vmatprep.subr.bf16.mxu0 0
    %1001 = vmatpush1.bf16.msra.mxu0 0
    %1002 = vmatprep.subr.bf16.mxu0 0
    %1003 = vmatpush1.bf16.msra.mxu0 0
    %1004 = vmatprep.subr.bf16.mxu0 0
    %1005 = vmatpush1.bf16.msra.mxu0 0
    %1006 = vmatprep.subr.bf16.mxu0 0
    %1007 = vmatpush1.bf16.msra.mxu0 0
    %1008 = vmatprep.subr.bf16.mxu0 0
    %1009 = vmatpush1.bf16.msra.mxu0 0
    %1010 = vmatprep.subr.bf16.mxu0 0
    %1011 = vmatpush1.bf16.msra.mxu0 0
    %1012 = vmatprep.subr.bf16.mxu0 0
    %1013 = vmatpush1.bf16.msra.mxu0 0
    %1014 = vmatprep.subr.bf16.mxu0 0
    %1015 = vmatpush1.bf16.msra.mxu0 0
    %1016 = vmatprep.subr.bf16.mxu0 0
    %1017 = vmatpush1.bf16.msra.mxu0 0
    %1018 = vmatprep.subr.bf16.mxu0 0
    %1019 = vmatpush1.bf16.msra.mxu0 0
    %1020 = vmatprep.subr.bf16.mxu0 0
    %1021 = vmatpush1.bf16.msra.mxu0 0
    %1022 = vmatprep.subr.bf16.mxu0 0
    %1023 = vmatpush1.bf16.msra.mxu0 0
    %1024 = vmatprep.mubr.bf16.mxu0 0
    %1025 = vmatmul.mubr.bf16.gmra.mrb[0].mxu0 %v987
    %v1026 = vpop.f32.mrb[0].mxu0
    %v1027 = vadd.f32 0.0, %v1026
    %v1028 = vpop.f32.mrb[0].mxu0
    %v1029 = vpop.f32.mrb[0].mxu0
    %v1030 = vadd.f32 0.0, %v1029
    %v1031 = vpop.f32.mrb[0].mxu0
    %1032 = vdwg.mxu0
    %v1033 = vadd.f32 %v759, %v1027
    %v1034 = vadd.f32 %v762, %v1030
    %1035 = vrot.lane.b32.xlu0 %v227, 104
    %v1036 = vpop.permute.xlu0 %1035
    %1037 = vrot.lane.b32.xlu0 %v227, 40
    %v1038 = vpop.permute.xlu0 %1037
    %v1040 = vsel %vm234, %v1036, 0
    %v1043 = vsel %vm234, %v1038, 0
    %1045 = vmatprep.subr.bf16.mxu0 0
    %1046 = vmatpush1.bf16.xpose.msra.mxu0 %v1043
    %1047 = vmatprep.subr.bf16.mxu0 0
    %1048 = vmatpush1.bf16.xpose.msra.mxu0 0
    %1049 = vmatprep.subr.bf16.mxu0 0
    %1050 = vmatpush1.bf16.xpose.msra.mxu0 0
    %1051 = vmatprep.subr.bf16.mxu0 0
    %1052 = vmatpush1.bf16.xpose.msra.mxu0 0
    %1053 = vmatprep.subr.bf16.mxu0 0
    %1054 = vmatpush1.bf16.xpose.msra.mxu0 0
    %1055 = vmatprep.subr.bf16.mxu0 0
    %1056 = vmatpush1.bf16.xpose.msra.mxu0 0
    %1057 = vmatprep.subr.bf16.mxu0 0
    %1058 = vmatpush1.bf16.xpose.msra.mxu0 0
    %1059 = vmatprep.subr.bf16.mxu0 0
    %1060 = vmatpush1.bf16.xpose.msra.mxu0 0
    %1061 = vmatprep.subr.bf16.mxu0 0
    %1062 = vmatpush1.bf16.xpose.msra.mxu0 0
    %1063 = vmatprep.subr.bf16.mxu0 0
    %1064 = vmatpush1.bf16.xpose.msra.mxu0 0
    %1065 = vmatprep.subr.bf16.mxu0 0
    %1066 = vmatpush1.bf16.xpose.msra.mxu0 0
    %1067 = vmatprep.subr.bf16.mxu0 0
    %1068 = vmatpush1.bf16.xpose.msra.mxu0 0
    %1069 = vmatprep.subr.bf16.mxu0 0
    %1070 = vmatpush1.bf16.xpose.msra.mxu0 0
    %1071 = vmatprep.subr.bf16.mxu0 0
    %1072 = vmatpush1.bf16.xpose.msra.mxu0 0
    %1073 = vmatprep.subr.bf16.mxu0 0
    %1074 = vmatpush1.bf16.xpose.msra.mxu0 0
    %1075 = vmatprep.subr.bf16.mxu0 0
    %1076 = vmatpush1.bf16.xpose.msra.mxu0 0
    %1077 = vmatprep.mubr.bf16.mxu0 0
    %1078 = vmatmul.mubr.bf16.gmra.mrb[0].mxu0 %v1040
    %v1079 = vpop.f32.mrb[0].mxu0
    %v1080 = vadd.f32 0.0, %v1079
    %v1081 = vpop.f32.mrb[0].mxu0
    %v1082 = vpop.f32.mrb[0].mxu0
    %v1083 = vpop.f32.mrb[0].mxu0
    %1084 = vdwg.mxu0
    %1085 = vrot.lane.b32.xlu0 %v228, 104
    %v1086 = vpop.permute.xlu0 %1085
    %1087 = vrot.lane.b32.xlu0 %v228, 40
    %v1088 = vpop.permute.xlu0 %1087
    %v1090 = vsel %vm234, %v1086, 0
    %v1093 = vsel %vm234, %v1088, 0
    %1095 = vmatprep.subr.bf16.mxu0 0
    %1096 = vmatpush1.bf16.xpose.msra.mxu0 %v1093
    %1097 = vmatprep.subr.bf16.mxu0 0
    %1098 = vmatpush1.bf16.xpose.msra.mxu0 0
    %1099 = vmatprep.subr.bf16.mxu0 0
    %1100 = vmatpush1.bf16.xpose.msra.mxu0 0
    %1101 = vmatprep.subr.bf16.mxu0 0
    %1102 = vmatpush1.bf16.xpose.msra.mxu0 0
    %1103 = vmatprep.subr.bf16.mxu0 0
    %1104 = vmatpush1.bf16.xpose.msra.mxu0 0
    %1105 = vmatprep.subr.bf16.mxu0 0
    %1106 = vmatpush1.bf16.xpose.msra.mxu0 0
    %1107 = vmatprep.subr.bf16.mxu0 0
    %1108 = vmatpush1.bf16.xpose.msra.mxu0 0
    %1109 = vmatprep.subr.bf16.mxu0 0
    %1110 = vmatpush1.bf16.xpose.msra.mxu0 0
    %1111 = vmatprep.subr.bf16.mxu0 0
    %1112 = vmatpush1.bf16.xpose.msra.mxu0 0
    %1113 = vmatprep.subr.bf16.mxu0 0
    %1114 = vmatpush1.bf16.xpose.msra.mxu0 0
    %1115 = vmatprep.subr.bf16.mxu0 0
    %1116 = vmatpush1.bf16.xpose.msra.mxu0 0
    %1117 = vmatprep.subr.bf16.mxu0 0
    %1118 = vmatpush1.bf16.xpose.msra.mxu0 0
    %1119 = vmatprep.subr.bf16.mxu0 0
    %1120 = vmatpush1.bf16.xpose.msra.mxu0 0
    %1121 = vmatprep.subr.bf16.mxu0 0
    %1122 = vmatpush1.bf16.xpose.msra.mxu0 0
    %1123 = vmatprep.subr.bf16.mxu0 0
    %1124 = vmatpush1.bf16.xpose.msra.mxu0 0
    %1125 = vmatprep.subr.bf16.mxu0 0
    %1126 = vmatpush1.bf16.xpose.msra.mxu0 0
    %1127 = vmatprep.mubr.bf16.mxu0 0
    %1128 = vmatmul.mubr.bf16.gmra.mrb[0].mxu0 %v1090
    %v1129 = vpop.f32.mrb[0].mxu0
    %v1130 = vadd.f32 0.0, %v1129
    %v1131 = vpop.f32.mrb[0].mxu0
    %v1132 = vpop.f32.mrb[0].mxu0
    %v1133 = vpop.f32.mrb[0].mxu0
    %1134 = vdwg.mxu0
    %v1135 = vsel %vm234, %v1080, -inf
    %1136 = vmax.xlane.f32.xlu0 %v1135
    %v1137 = vpop.xlane.xlu0 %1136
    %v1138 = vsel %vm234, %v1130, -inf
    %1139 = vmax.xlane.f32.xlu0 %v1138
    %v1140 = vpop.xlane.xlu0 %1139
    %v1141 = vsub.f32 %v1080, %v1137
    %v1142 = vsub.f32 %v1130, %v1140
    %v1143 = vmul.f32 %v1141, 1.442695
    %v1144 = vpow.pop %v1143
    %v1145 = vmul.f32 %v1142, 1.442695
    %v1146 = vpow.pop %v1145
    %v1147 = vsel %vm234, %v1144, 0.0
    %1148 = vadd.xlane.f32.xlu0 %v1147
    %v1149 = vpop.xlane.xlu0 %1148
    %v1150 = vsel %vm234, %v1146, 0.0
    %1151 = vadd.xlane.f32.xlu0 %v1150
    %v1152 = vpop.xlane.xlu0 %1151
    %v1153 = vrcp.pop %v1149
    %v1154 = vrcp.pop %v1152
    %v1155 = vmul.f32 %v1144, %v1153
    %v1156 = vmul.f32 %v1146, %v1154
    %v1157 = vpack.c.bf16 %v1155, %v1155
    %v1158 = vpack.c.bf16 %v1156, %v1156
    %1159 = vrot.lane.b32.xlu0 %v229, 104
    %v1160 = vpop.permute.xlu0 %1159
    %v1162 = vsel %vm234, %v1157, 0
    %v1165 = vsel %vm357, %v1160, 0
    %1167 = vmatprep.subr.bf16.mxu0 0
    %1168 = vmatpush1.bf16.msra.mxu0 %v1165
    %1169 = vmatprep.subr.bf16.mxu0 0
    %1170 = vmatpush1.bf16.msra.mxu0 0
    %1171 = vmatprep.subr.bf16.mxu0 0
    %1172 = vmatpush1.bf16.msra.mxu0 0
    %1173 = vmatprep.subr.bf16.mxu0 0
    %1174 = vmatpush1.bf16.msra.mxu0 0
    %1175 = vmatprep.subr.bf16.mxu0 0
    %1176 = vmatpush1.bf16.msra.mxu0 0
    %1177 = vmatprep.subr.bf16.mxu0 0
    %1178 = vmatpush1.bf16.msra.mxu0 0
    %1179 = vmatprep.subr.bf16.mxu0 0
    %1180 = vmatpush1.bf16.msra.mxu0 0
    %1181 = vmatprep.subr.bf16.mxu0 0
    %1182 = vmatpush1.bf16.msra.mxu0 0
    %1183 = vmatprep.subr.bf16.mxu0 0
    %1184 = vmatpush1.bf16.msra.mxu0 0
    %1185 = vmatprep.subr.bf16.mxu0 0
    %1186 = vmatpush1.bf16.msra.mxu0 0
    %1187 = vmatprep.subr.bf16.mxu0 0
    %1188 = vmatpush1.bf16.msra.mxu0 0
    %1189 = vmatprep.subr.bf16.mxu0 0
    %1190 = vmatpush1.bf16.msra.mxu0 0
    %1191 = vmatprep.subr.bf16.mxu0 0
    %1192 = vmatpush1.bf16.msra.mxu0 0
    %1193 = vmatprep.subr.bf16.mxu0 0
    %1194 = vmatpush1.bf16.msra.mxu0 0
    %1195 = vmatprep.subr.bf16.mxu0 0
    %1196 = vmatpush1.bf16.msra.mxu0 0
    %1197 = vmatprep.subr.bf16.mxu0 0
    %1198 = vmatpush1.bf16.msra.mxu0 0
    %1199 = vmatprep.mubr.bf16.mxu0 0
    %1200 = vmatmul.mubr.bf16.gmra.mrb[0].mxu0 %v1162
    %v1201 = vpop.f32.mrb[0].mxu0
    %v1202 = vadd.f32 0.0, %v1201
    %v1203 = vpop.f32.mrb[0].mxu0
    %v1204 = vpop.f32.mrb[0].mxu0
    %v1205 = vpop.f32.mrb[0].mxu0
    %1206 = vdwg.mxu0
    %1207 = vrot.lane.b32.xlu0 %v230, 104
    %v1208 = vpop.permute.xlu0 %1207
    %v1210 = vsel %vm234, %v1158, 0
    %v1213 = vsel %vm357, %v1208, 0
    %1215 = vmatprep.subr.bf16.mxu0 0
    %1216 = vmatpush1.bf16.msra.mxu0 %v1213
    %1217 = vmatprep.subr.bf16.mxu0 0
    %1218 = vmatpush1.bf16.msra.mxu0 0
    %1219 = vmatprep.subr.bf16.mxu0 0
    %1220 = vmatpush1.bf16.msra.mxu0 0
    %1221 = vmatprep.subr.bf16.mxu0 0
    %1222 = vmatpush1.bf16.msra.mxu0 0
    %1223 = vmatprep.subr.bf16.mxu0 0
    %1224 = vmatpush1.bf16.msra.mxu0 0
    %1225 = vmatprep.subr.bf16.mxu0 0
    %1226 = vmatpush1.bf16.msra.mxu0 0
    %1227 = vmatprep.subr.bf16.mxu0 0
    %1228 = vmatpush1.bf16.msra.mxu0 0
    %1229 = vmatprep.subr.bf16.mxu0 0
    %1230 = vmatpush1.bf16.msra.mxu0 0
    %1231 = vmatprep.subr.bf16.mxu0 0
    %1232 = vmatpush1.bf16.msra.mxu0 0
    %1233 = vmatprep.subr.bf16.mxu0 0
    %1234 = vmatpush1.bf16.msra.mxu0 0
    %1235 = vmatprep.subr.bf16.mxu0 0
    %1236 = vmatpush1.bf16.msra.mxu0 0
    %1237 = vmatprep.subr.bf16.mxu0 0
    %1238 = vmatpush1.bf16.msra.mxu0 0
    %1239 = vmatprep.subr.bf16.mxu0 0
    %1240 = vmatpush1.bf16.msra.mxu0 0
    %1241 = vmatprep.subr.bf16.mxu0 0
    %1242 = vmatpush1.bf16.msra.mxu0 0
    %1243 = vmatprep.subr.bf16.mxu0 0
    %1244 = vmatpush1.bf16.msra.mxu0 0
    %1245 = vmatprep.subr.bf16.mxu0 0
    %1246 = vmatpush1.bf16.msra.mxu0 0
    %1247 = vmatprep.mubr.bf16.mxu0 0
    %1248 = vmatmul.mubr.bf16.gmra.mrb[0].mxu0 %v1210
    %v1249 = vpop.f32.mrb[0].mxu0
    %v1250 = vadd.f32 0.0, %v1249
    %v1251 = vpop.f32.mrb[0].mxu0
    %v1252 = vpop.f32.mrb[0].mxu0
    %v1253 = vpop.f32.mrb[0].mxu0
    %1254 = vdwg.mxu0
    %v1255 = vpack.c.bf16 %v1250, %v1202
    %v1257 = vsel %vm234, %v1255, 0
    %v1260 = vsel %vm357, %v222, 0
    %1262 = vmatprep.subr.bf16.mxu0 0
    %1263 = vmatpush1.bf16.msra.mxu0 %v1260
    %1264 = vmatprep.subr.bf16.mxu0 0
    %1265 = vmatpush1.bf16.msra.mxu0 0
    %1266 = vmatprep.subr.bf16.mxu0 0
    %1267 = vmatpush1.bf16.msra.mxu0 0
    %1268 = vmatprep.subr.bf16.mxu0 0
    %1269 = vmatpush1.bf16.msra.mxu0 0
    %1270 = vmatprep.subr.bf16.mxu0 0
    %1271 = vmatpush1.bf16.msra.mxu0 0
    %1272 = vmatprep.subr.bf16.mxu0 0
    %1273 = vmatpush1.bf16.msra.mxu0 0
    %1274 = vmatprep.subr.bf16.mxu0 0
    %1275 = vmatpush1.bf16.msra.mxu0 0
    %1276 = vmatprep.subr.bf16.mxu0 0
    %1277 = vmatpush1.bf16.msra.mxu0 0
    %1278 = vmatprep.subr.bf16.mxu0 0
    %1279 = vmatpush1.bf16.msra.mxu0 0
    %1280 = vmatprep.subr.bf16.mxu0 0
    %1281 = vmatpush1.bf16.msra.mxu0 0
    %1282 = vmatprep.subr.bf16.mxu0 0
    %1283 = vmatpush1.bf16.msra.mxu0 0
    %1284 = vmatprep.subr.bf16.mxu0 0
    %1285 = vmatpush1.bf16.msra.mxu0 0
    %1286 = vmatprep.subr.bf16.mxu0 0
    %1287 = vmatpush1.bf16.msra.mxu0 0
    %1288 = vmatprep.subr.bf16.mxu0 0
    %1289 = vmatpush1.bf16.msra.mxu0 0
    %1290 = vmatprep.subr.bf16.mxu0 0
    %1291 = vmatpush1.bf16.msra.mxu0 0
    %1292 = vmatprep.subr.bf16.mxu0 0
    %1293 = vmatpush1.bf16.msra.mxu0 0
    %1294 = vmatprep.mubr.bf16.mxu0 0
    %1295 = vmatmul.mubr.bf16.gmra.mrb[0].mxu0 %v1257
    %v1296 = vpop.f32.mrb[0].mxu0
    %v1297 = vadd.f32 0.0, %v1296
    %v1298 = vpop.f32.mrb[0].mxu0
    %v1299 = vpop.f32.mrb[0].mxu0
    %v1300 = vadd.f32 0.0, %v1299
    %v1301 = vpop.f32.mrb[0].mxu0
    %1302 = vdwg.mxu0
    %v1303 = vadd.f32 %v1033, %v1297
    %v1304 = vadd.f32 %v1034, %v1300
    %1305 = vrot.lane.b32.xlu0 %v227, 96
    %v1306 = vpop.permute.xlu0 %1305
    %1307 = vrot.lane.b32.xlu0 %v227, 32
    %v1308 = vpop.permute.xlu0 %1307
    %v1310 = vsel %vm234, %v1306, 0
    %v1313 = vsel %vm234, %v1308, 0
    %1315 = vmatprep.subr.bf16.mxu0 0
    %1316 = vmatpush1.bf16.xpose.msra.mxu0 %v1313
    %1317 = vmatprep.subr.bf16.mxu0 0
    %1318 = vmatpush1.bf16.xpose.msra.mxu0 0
    %1319 = vmatprep.subr.bf16.mxu0 0
    %1320 = vmatpush1.bf16.xpose.msra.mxu0 0
    %1321 = vmatprep.subr.bf16.mxu0 0
    %1322 = vmatpush1.bf16.xpose.msra.mxu0 0
    %1323 = vmatprep.subr.bf16.mxu0 0
    %1324 = vmatpush1.bf16.xpose.msra.mxu0 0
    %1325 = vmatprep.subr.bf16.mxu0 0
    %1326 = vmatpush1.bf16.xpose.msra.mxu0 0
    %1327 = vmatprep.subr.bf16.mxu0 0
    %1328 = vmatpush1.bf16.xpose.msra.mxu0 0
    %1329 = vmatprep.subr.bf16.mxu0 0
    %1330 = vmatpush1.bf16.xpose.msra.mxu0 0
    %1331 = vmatprep.subr.bf16.mxu0 0
    %1332 = vmatpush1.bf16.xpose.msra.mxu0 0
    %1333 = vmatprep.subr.bf16.mxu0 0
    %1334 = vmatpush1.bf16.xpose.msra.mxu0 0
    %1335 = vmatprep.subr.bf16.mxu0 0
    %1336 = vmatpush1.bf16.xpose.msra.mxu0 0
    %1337 = vmatprep.subr.bf16.mxu0 0
    %1338 = vmatpush1.bf16.xpose.msra.mxu0 0
    %1339 = vmatprep.subr.bf16.mxu0 0
    %1340 = vmatpush1.bf16.xpose.msra.mxu0 0
    %1341 = vmatprep.subr.bf16.mxu0 0
    %1342 = vmatpush1.bf16.xpose.msra.mxu0 0
    %1343 = vmatprep.subr.bf16.mxu0 0
    %1344 = vmatpush1.bf16.xpose.msra.mxu0 0
    %1345 = vmatprep.subr.bf16.mxu0 0
    %1346 = vmatpush1.bf16.xpose.msra.mxu0 0
    %1347 = vmatprep.mubr.bf16.mxu0 0
    %1348 = vmatmul.mubr.bf16.gmra.mrb[0].mxu0 %v1310
    %v1349 = vpop.f32.mrb[0].mxu0
    %v1350 = vadd.f32 0.0, %v1349
    %v1351 = vpop.f32.mrb[0].mxu0
    %v1352 = vpop.f32.mrb[0].mxu0
    %v1353 = vpop.f32.mrb[0].mxu0
    %1354 = vdwg.mxu0
    %1355 = vrot.lane.b32.xlu0 %v228, 96
    %v1356 = vpop.permute.xlu0 %1355
    %1357 = vrot.lane.b32.xlu0 %v228, 32
    %v1358 = vpop.permute.xlu0 %1357
    %v1360 = vsel %vm234, %v1356, 0
    %v1363 = vsel %vm234, %v1358, 0
    %1365 = vmatprep.subr.bf16.mxu0 0
    %1366 = vmatpush1.bf16.xpose.msra.mxu0 %v1363
    %1367 = vmatprep.subr.bf16.mxu0 0
    %1368 = vmatpush1.bf16.xpose.msra.mxu0 0
    %1369 = vmatprep.subr.bf16.mxu0 0
    %1370 = vmatpush1.bf16.xpose.msra.mxu0 0
    %1371 = vmatprep.subr.bf16.mxu0 0
    %1372 = vmatpush1.bf16.xpose.msra.mxu0 0
    %1373 = vmatprep.subr.bf16.mxu0 0
    %1374 = vmatpush1.bf16.xpose.msra.mxu0 0
    %1375 = vmatprep.subr.bf16.mxu0 0
    %1376 = vmatpush1.bf16.xpose.msra.mxu0 0
    %1377 = vmatprep.subr.bf16.mxu0 0
    %1378 = vmatpush1.bf16.xpose.msra.mxu0 0
    %1379 = vmatprep.subr.bf16.mxu0 0
    %1380 = vmatpush1.bf16.xpose.msra.mxu0 0
    %1381 = vmatprep.subr.bf16.mxu0 0
    %1382 = vmatpush1.bf16.xpose.msra.mxu0 0
    %1383 = vmatprep.subr.bf16.mxu0 0
    %1384 = vmatpush1.bf16.xpose.msra.mxu0 0
    %1385 = vmatprep.subr.bf16.mxu0 0
    %1386 = vmatpush1.bf16.xpose.msra.mxu0 0
    %1387 = vmatprep.subr.bf16.mxu0 0
    %1388 = vmatpush1.bf16.xpose.msra.mxu0 0
    %1389 = vmatprep.subr.bf16.mxu0 0
    %1390 = vmatpush1.bf16.xpose.msra.mxu0 0
    %1391 = vmatprep.subr.bf16.mxu0 0
    %1392 = vmatpush1.bf16.xpose.msra.mxu0 0
    %1393 = vmatprep.subr.bf16.mxu0 0
    %1394 = vmatpush1.bf16.xpose.msra.mxu0 0
    %1395 = vmatprep.subr.bf16.mxu0 0
    %1396 = vmatpush1.bf16.xpose.msra.mxu0 0
    %1397 = vmatprep.mubr.bf16.mxu0 0
    %1398 = vmatmul.mubr.bf16.gmra.mrb[0].mxu0 %v1360
    %v1399 = vpop.f32.mrb[0].mxu0
    %v1400 = vadd.f32 0.0, %v1399
    %v1401 = vpop.f32.mrb[0].mxu0
    %v1402 = vpop.f32.mrb[0].mxu0
    %v1403 = vpop.f32.mrb[0].mxu0
    %1404 = vdwg.mxu0
    %v1405 = vsel %vm234, %v1350, -inf
    %1406 = vmax.xlane.f32.xlu0 %v1405
    %v1407 = vpop.xlane.xlu0 %1406
    %v1408 = vsel %vm234, %v1400, -inf
    %1409 = vmax.xlane.f32.xlu0 %v1408
    %v1410 = vpop.xlane.xlu0 %1409
    %v1411 = vsub.f32 %v1350, %v1407
    %v1412 = vsub.f32 %v1400, %v1410
    %v1413 = vmul.f32 %v1411, 1.442695
    %v1414 = vpow.pop %v1413
    %v1415 = vmul.f32 %v1412, 1.442695
    %v1416 = vpow.pop %v1415
    %v1417 = vsel %vm234, %v1414, 0.0
    %1418 = vadd.xlane.f32.xlu0 %v1417
    %v1419 = vpop.xlane.xlu0 %1418
    %v1420 = vsel %vm234, %v1416, 0.0
    %1421 = vadd.xlane.f32.xlu0 %v1420
    %v1422 = vpop.xlane.xlu0 %1421
    %v1423 = vrcp.pop %v1419
    %v1424 = vrcp.pop %v1422
    %v1425 = vmul.f32 %v1414, %v1423
    %v1426 = vmul.f32 %v1416, %v1424
    %v1427 = vpack.c.bf16 %v1425, %v1425
    %v1428 = vpack.c.bf16 %v1426, %v1426
    %1429 = vrot.lane.b32.xlu0 %v229, 96
    %v1430 = vpop.permute.xlu0 %1429
    %v1432 = vsel %vm234, %v1427, 0
    %v1435 = vsel %vm357, %v1430, 0
    %1437 = vmatprep.subr.bf16.mxu0 0
    %1438 = vmatpush1.bf16.msra.mxu0 %v1435
    %1439 = vmatprep.subr.bf16.mxu0 0
    %1440 = vmatpush1.bf16.msra.mxu0 0
    %1441 = vmatprep.subr.bf16.mxu0 0
    %1442 = vmatpush1.bf16.msra.mxu0 0
    %1443 = vmatprep.subr.bf16.mxu0 0
    %1444 = vmatpush1.bf16.msra.mxu0 0
    %1445 = vmatprep.subr.bf16.mxu0 0
    %1446 = vmatpush1.bf16.msra.mxu0 0
    %1447 = vmatprep.subr.bf16.mxu0 0
    %1448 = vmatpush1.bf16.msra.mxu0 0
    %1449 = vmatprep.subr.bf16.mxu0 0
    %1450 = vmatpush1.bf16.msra.mxu0 0
    %1451 = vmatprep.subr.bf16.mxu0 0
    %1452 = vmatpush1.bf16.msra.mxu0 0
    %1453 = vmatprep.subr.bf16.mxu0 0
    %1454 = vmatpush1.bf16.msra.mxu0 0
    %1455 = vmatprep.subr.bf16.mxu0 0
    %1456 = vmatpush1.bf16.msra.mxu0 0
    %1457 = vmatprep.subr.bf16.mxu0 0
    %1458 = vmatpush1.bf16.msra.mxu0 0
    %1459 = vmatprep.subr.bf16.mxu0 0
    %1460 = vmatpush1.bf16.msra.mxu0 0
    %1461 = vmatprep.subr.bf16.mxu0 0
    %1462 = vmatpush1.bf16.msra.mxu0 0
    %1463 = vmatprep.subr.bf16.mxu0 0
    %1464 = vmatpush1.bf16.msra.mxu0 0
    %1465 = vmatprep.subr.bf16.mxu0 0
    %1466 = vmatpush1.bf16.msra.mxu0 0
    %1467 = vmatprep.subr.bf16.mxu0 0
    %1468 = vmatpush1.bf16.msra.mxu0 0
    %1469 = vmatprep.mubr.bf16.mxu0 0
    %1470 = vmatmul.mubr.bf16.gmra.mrb[0].mxu0 %v1432
    %v1471 = vpop.f32.mrb[0].mxu0
    %v1472 = vadd.f32 0.0, %v1471
    %v1473 = vpop.f32.mrb[0].mxu0
    %v1474 = vpop.f32.mrb[0].mxu0
    %v1475 = vpop.f32.mrb[0].mxu0
    %1476 = vdwg.mxu0
    %1477 = vrot.lane.b32.xlu0 %v230, 96
    %v1478 = vpop.permute.xlu0 %1477
    %v1480 = vsel %vm234, %v1428, 0
    %v1483 = vsel %vm357, %v1478, 0
    %1485 = vmatprep.subr.bf16.mxu0 0
    %1486 = vmatpush1.bf16.msra.mxu0 %v1483
    %1487 = vmatprep.subr.bf16.mxu0 0
    %1488 = vmatpush1.bf16.msra.mxu0 0
    %1489 = vmatprep.subr.bf16.mxu0 0
    %1490 = vmatpush1.bf16.msra.mxu0 0
    %1491 = vmatprep.subr.bf16.mxu0 0
    %1492 = vmatpush1.bf16.msra.mxu0 0
    %1493 = vmatprep.subr.bf16.mxu0 0
    %1494 = vmatpush1.bf16.msra.mxu0 0
    %1495 = vmatprep.subr.bf16.mxu0 0
    %1496 = vmatpush1.bf16.msra.mxu0 0
    %1497 = vmatprep.subr.bf16.mxu0 0
    %1498 = vmatpush1.bf16.msra.mxu0 0
    %1499 = vmatprep.subr.bf16.mxu0 0
    %1500 = vmatpush1.bf16.msra.mxu0 0
    %1501 = vmatprep.subr.bf16.mxu0 0
    %1502 = vmatpush1.bf16.msra.mxu0 0
    %1503 = vmatprep.subr.bf16.mxu0 0
    %1504 = vmatpush1.bf16.msra.mxu0 0
    %1505 = vmatprep.subr.bf16.mxu0 0
    %1506 = vmatpush1.bf16.msra.mxu0 0
    %1507 = vmatprep.subr.bf16.mxu0 0
    %1508 = vmatpush1.bf16.msra.mxu0 0
    %1509 = vmatprep.subr.bf16.mxu0 0
    %1510 = vmatpush1.bf16.msra.mxu0 0
    %1511 = vmatprep.subr.bf16.mxu0 0
    %1512 = vmatpush1.bf16.msra.mxu0 0
    %1513 = vmatprep.subr.bf16.mxu0 0
    %1514 = vmatpush1.bf16.msra.mxu0 0
    %1515 = vmatprep.subr.bf16.mxu0 0
    %1516 = vmatpush1.bf16.msra.mxu0 0
    %1517 = vmatprep.mubr.bf16.mxu0 0
    %1518 = vmatmul.mubr.bf16.gmra.mrb[0].mxu0 %v1480
    %v1519 = vpop.f32.mrb[0].mxu0
    %v1520 = vadd.f32 0.0, %v1519
    %v1521 = vpop.f32.mrb[0].mxu0
    %v1522 = vpop.f32.mrb[0].mxu0
    %v1523 = vpop.f32.mrb[0].mxu0
    %1524 = vdwg.mxu0
    %v1525 = vpack.c.bf16 %v1520, %v1472
    %v1527 = vsel %vm234, %v1525, 0
    %v1530 = vsel %vm357, %v223, 0
    %1532 = vmatprep.subr.bf16.mxu0 0
    %1533 = vmatpush1.bf16.msra.mxu0 %v1530
    %1534 = vmatprep.subr.bf16.mxu0 0
    %1535 = vmatpush1.bf16.msra.mxu0 0
    %1536 = vmatprep.subr.bf16.mxu0 0
    %1537 = vmatpush1.bf16.msra.mxu0 0
    %1538 = vmatprep.subr.bf16.mxu0 0
    %1539 = vmatpush1.bf16.msra.mxu0 0
    %1540 = vmatprep.subr.bf16.mxu0 0
    %1541 = vmatpush1.bf16.msra.mxu0 0
    %1542 = vmatprep.subr.bf16.mxu0 0
    %1543 = vmatpush1.bf16.msra.mxu0 0
    %1544 = vmatprep.subr.bf16.mxu0 0
    %1545 = vmatpush1.bf16.msra.mxu0 0
    %1546 = vmatprep.subr.bf16.mxu0 0
    %1547 = vmatpush1.bf16.msra.mxu0 0
    %1548 = vmatprep.subr.bf16.mxu0 0
    %1549 = vmatpush1.bf16.msra.mxu0 0
    %1550 = vmatprep.subr.bf16.mxu0 0
    %1551 = vmatpush1.bf16.msra.mxu0 0
    %1552 = vmatprep.subr.bf16.mxu0 0
    %1553 = vmatpush1.bf16.msra.mxu0 0
    %1554 = vmatprep.subr.bf16.mxu0 0
    %1555 = vmatpush1.bf16.msra.mxu0 0
    %1556 = vmatprep.subr.bf16.mxu0 0
    %1557 = vmatpush1.bf16.msra.mxu0 0
    %1558 = vmatprep.subr.bf16.mxu0 0
    %1559 = vmatpush1.bf16.msra.mxu0 0
    %1560 = vmatprep.subr.bf16.mxu0 0
    %1561 = vmatpush1.bf16.msra.mxu0 0
    %1562 = vmatprep.subr.bf16.mxu0 0
    %1563 = vmatpush1.bf16.msra.mxu0 0
    %1564 = vmatprep.mubr.bf16.mxu0 0
    %1565 = vmatmul.mubr.bf16.gmra.mrb[0].mxu0 %v1527
    %v1566 = vpop.f32.mrb[0].mxu0
    %v1567 = vadd.f32 0.0, %v1566
    %v1568 = vpop.f32.mrb[0].mxu0
    %v1569 = vpop.f32.mrb[0].mxu0
    %v1570 = vadd.f32 0.0, %v1569
    %v1571 = vpop.f32.mrb[0].mxu0
    %1572 = vdwg.mxu0
    %v1573 = vadd.f32 %v1303, %v1567
    %v1574 = vadd.f32 %v1304, %v1570
    %1575 = vrot.lane.b32.xlu0 %v227, 88
    %v1576 = vpop.permute.xlu0 %1575
    %1577 = vrot.lane.b32.xlu0 %v227, 24
    %v1578 = vpop.permute.xlu0 %1577
    %v1580 = vsel %vm234, %v1576, 0
    %v1583 = vsel %vm234, %v1578, 0
    %1585 = vmatprep.subr.bf16.mxu0 0
    %1586 = vmatpush1.bf16.xpose.msra.mxu0 %v1583
    %1587 = vmatprep.subr.bf16.mxu0 0
    %1588 = vmatpush1.bf16.xpose.msra.mxu0 0
    %1589 = vmatprep.subr.bf16.mxu0 0
    %1590 = vmatpush1.bf16.xpose.msra.mxu0 0
    %1591 = vmatprep.subr.bf16.mxu0 0
    %1592 = vmatpush1.bf16.xpose.msra.mxu0 0
    %1593 = vmatprep.subr.bf16.mxu0 0
    %1594 = vmatpush1.bf16.xpose.msra.mxu0 0
    %1595 = vmatprep.subr.bf16.mxu0 0
    %1596 = vmatpush1.bf16.xpose.msra.mxu0 0
    %1597 = vmatprep.subr.bf16.mxu0 0
    %1598 = vmatpush1.bf16.xpose.msra.mxu0 0
    %1599 = vmatprep.subr.bf16.mxu0 0
    %1600 = vmatpush1.bf16.xpose.msra.mxu0 0
    %1601 = vmatprep.subr.bf16.mxu0 0
    %1602 = vmatpush1.bf16.xpose.msra.mxu0 0
    %1603 = vmatprep.subr.bf16.mxu0 0
    %1604 = vmatpush1.bf16.xpose.msra.mxu0 0
    %1605 = vmatprep.subr.bf16.mxu0 0
    %1606 = vmatpush1.bf16.xpose.msra.mxu0 0
    %1607 = vmatprep.subr.bf16.mxu0 0
    %1608 = vmatpush1.bf16.xpose.msra.mxu0 0
    %1609 = vmatprep.subr.bf16.mxu0 0
    %1610 = vmatpush1.bf16.xpose.msra.mxu0 0
    %1611 = vmatprep.subr.bf16.mxu0 0
    %1612 = vmatpush1.bf16.xpose.msra.mxu0 0
    %1613 = vmatprep.subr.bf16.mxu0 0
    %1614 = vmatpush1.bf16.xpose.msra.mxu0 0
    %1615 = vmatprep.subr.bf16.mxu0 0
    %1616 = vmatpush1.bf16.xpose.msra.mxu0 0
    %1617 = vmatprep.mubr.bf16.mxu0 0
    %1618 = vmatmul.mubr.bf16.gmra.mrb[0].mxu0 %v1580
    %v1619 = vpop.f32.mrb[0].mxu0
    %v1620 = vadd.f32 0.0, %v1619
    %v1621 = vpop.f32.mrb[0].mxu0
    %v1622 = vpop.f32.mrb[0].mxu0
    %v1623 = vpop.f32.mrb[0].mxu0
    %1624 = vdwg.mxu0
    %1625 = vrot.lane.b32.xlu0 %v228, 88
    %v1626 = vpop.permute.xlu0 %1625
    %1627 = vrot.lane.b32.xlu0 %v228, 24
    %v1628 = vpop.permute.xlu0 %1627
    %v1630 = vsel %vm234, %v1626, 0
    %v1633 = vsel %vm234, %v1628, 0
    %1635 = vmatprep.subr.bf16.mxu0 0
    %1636 = vmatpush1.bf16.xpose.msra.mxu0 %v1633
    %1637 = vmatprep.subr.bf16.mxu0 0
    %1638 = vmatpush1.bf16.xpose.msra.mxu0 0
    %1639 = vmatprep.subr.bf16.mxu0 0
    %1640 = vmatpush1.bf16.xpose.msra.mxu0 0
    %1641 = vmatprep.subr.bf16.mxu0 0
    %1642 = vmatpush1.bf16.xpose.msra.mxu0 0
    %1643 = vmatprep.subr.bf16.mxu0 0
    %1644 = vmatpush1.bf16.xpose.msra.mxu0 0
    %1645 = vmatprep.subr.bf16.mxu0 0
    %1646 = vmatpush1.bf16.xpose.msra.mxu0 0
    %1647 = vmatprep.subr.bf16.mxu0 0
    %1648 = vmatpush1.bf16.xpose.msra.mxu0 0
    %1649 = vmatprep.subr.bf16.mxu0 0
    %1650 = vmatpush1.bf16.xpose.msra.mxu0 0
    %1651 = vmatprep.subr.bf16.mxu0 0
    %1652 = vmatpush1.bf16.xpose.msra.mxu0 0
    %1653 = vmatprep.subr.bf16.mxu0 0
    %1654 = vmatpush1.bf16.xpose.msra.mxu0 0
    %1655 = vmatprep.subr.bf16.mxu0 0
    %1656 = vmatpush1.bf16.xpose.msra.mxu0 0
    %1657 = vmatprep.subr.bf16.mxu0 0
    %1658 = vmatpush1.bf16.xpose.msra.mxu0 0
    %1659 = vmatprep.subr.bf16.mxu0 0
    %1660 = vmatpush1.bf16.xpose.msra.mxu0 0
    %1661 = vmatprep.subr.bf16.mxu0 0
    %1662 = vmatpush1.bf16.xpose.msra.mxu0 0
    %1663 = vmatprep.subr.bf16.mxu0 0
    %1664 = vmatpush1.bf16.xpose.msra.mxu0 0
    %1665 = vmatprep.subr.bf16.mxu0 0
    %1666 = vmatpush1.bf16.xpose.msra.mxu0 0
    %1667 = vmatprep.mubr.bf16.mxu0 0
    %1668 = vmatmul.mubr.bf16.gmra.mrb[0].mxu0 %v1630
    %v1669 = vpop.f32.mrb[0].mxu0
    %v1670 = vadd.f32 0.0, %v1669
    %v1671 = vpop.f32.mrb[0].mxu0
    %v1672 = vpop.f32.mrb[0].mxu0
    %v1673 = vpop.f32.mrb[0].mxu0
    %1674 = vdwg.mxu0
    %v1675 = vsel %vm234, %v1620, -inf
    %1676 = vmax.xlane.f32.xlu0 %v1675
    %v1677 = vpop.xlane.xlu0 %1676
    %v1678 = vsel %vm234, %v1670, -inf
    %1679 = vmax.xlane.f32.xlu0 %v1678
    %v1680 = vpop.xlane.xlu0 %1679
    %v1681 = vsub.f32 %v1620, %v1677
    %v1682 = vsub.f32 %v1670, %v1680
    %v1683 = vmul.f32 %v1681, 1.442695
    %v1684 = vpow.pop %v1683
    %v1685 = vmul.f32 %v1682, 1.442695
    %v1686 = vpow.pop %v1685
    %v1687 = vsel %vm234, %v1684, 0.0
    %1688 = vadd.xlane.f32.xlu0 %v1687
    %v1689 = vpop.xlane.xlu0 %1688
    %v1690 = vsel %vm234, %v1686, 0.0
    %1691 = vadd.xlane.f32.xlu0 %v1690
    %v1692 = vpop.xlane.xlu0 %1691
    %v1693 = vrcp.pop %v1689
    %v1694 = vrcp.pop %v1692
    %v1695 = vmul.f32 %v1684, %v1693
    %v1696 = vmul.f32 %v1686, %v1694
    %v1697 = vpack.c.bf16 %v1695, %v1695
    %v1698 = vpack.c.bf16 %v1696, %v1696
    %1699 = vrot.lane.b32.xlu0 %v229, 88
    %v1700 = vpop.permute.xlu0 %1699
    %v1702 = vsel %vm234, %v1697, 0
    %v1705 = vsel %vm357, %v1700, 0
    %1707 = vmatprep.subr.bf16.mxu0 0
    %1708 = vmatpush1.bf16.msra.mxu0 %v1705
    %1709 = vmatprep.subr.bf16.mxu0 0
    %1710 = vmatpush1.bf16.msra.mxu0 0
    %1711 = vmatprep.subr.bf16.mxu0 0
    %1712 = vmatpush1.bf16.msra.mxu0 0
    %1713 = vmatprep.subr.bf16.mxu0 0
    %1714 = vmatpush1.bf16.msra.mxu0 0
    %1715 = vmatprep.subr.bf16.mxu0 0
    %1716 = vmatpush1.bf16.msra.mxu0 0
    %1717 = vmatprep.subr.bf16.mxu0 0
    %1718 = vmatpush1.bf16.msra.mxu0 0
    %1719 = vmatprep.subr.bf16.mxu0 0
    %1720 = vmatpush1.bf16.msra.mxu0 0
    %1721 = vmatprep.subr.bf16.mxu0 0
    %1722 = vmatpush1.bf16.msra.mxu0 0
    %1723 = vmatprep.subr.bf16.mxu0 0
    %1724 = vmatpush1.bf16.msra.mxu0 0
    %1725 = vmatprep.subr.bf16.mxu0 0
    %1726 = vmatpush1.bf16.msra.mxu0 0
    %1727 = vmatprep.subr.bf16.mxu0 0
    %1728 = vmatpush1.bf16.msra.mxu0 0
    %1729 = vmatprep.subr.bf16.mxu0 0
    %1730 = vmatpush1.bf16.msra.mxu0 0
    %1731 = vmatprep.subr.bf16.mxu0 0
    %1732 = vmatpush1.bf16.msra.mxu0 0
    %1733 = vmatprep.subr.bf16.mxu0 0
    %1734 = vmatpush1.bf16.msra.mxu0 0
    %1735 = vmatprep.subr.bf16.mxu0 0
    %1736 = vmatpush1.bf16.msra.mxu0 0
    %1737 = vmatprep.subr.bf16.mxu0 0
    %1738 = vmatpush1.bf16.msra.mxu0 0
    %1739 = vmatprep.mubr.bf16.mxu0 0
    %1740 = vmatmul.mubr.bf16.gmra.mrb[0].mxu0 %v1702
    %v1741 = vpop.f32.mrb[0].mxu0
    %v1742 = vadd.f32 0.0, %v1741
    %v1743 = vpop.f32.mrb[0].mxu0
    %v1744 = vpop.f32.mrb[0].mxu0
    %v1745 = vpop.f32.mrb[0].mxu0
    %1746 = vdwg.mxu0
    %1747 = vrot.lane.b32.xlu0 %v230, 88
    %v1748 = vpop.permute.xlu0 %1747
    %v1750 = vsel %vm234, %v1698, 0
    %v1753 = vsel %vm357, %v1748, 0
    %1755 = vmatprep.subr.bf16.mxu0 0
    %1756 = vmatpush1.bf16.msra.mxu0 %v1753
    %1757 = vmatprep.subr.bf16.mxu0 0
    %1758 = vmatpush1.bf16.msra.mxu0 0
    %1759 = vmatprep.subr.bf16.mxu0 0
    %1760 = vmatpush1.bf16.msra.mxu0 0
    %1761 = vmatprep.subr.bf16.mxu0 0
    %1762 = vmatpush1.bf16.msra.mxu0 0
    %1763 = vmatprep.subr.bf16.mxu0 0
    %1764 = vmatpush1.bf16.msra.mxu0 0
    %1765 = vmatprep.subr.bf16.mxu0 0
    %1766 = vmatpush1.bf16.msra.mxu0 0
    %1767 = vmatprep.subr.bf16.mxu0 0
    %1768 = vmatpush1.bf16.msra.mxu0 0
    %1769 = vmatprep.subr.bf16.mxu0 0
    %1770 = vmatpush1.bf16.msra.mxu0 0
    %1771 = vmatprep.subr.bf16.mxu0 0
    %1772 = vmatpush1.bf16.msra.mxu0 0
    %1773 = vmatprep.subr.bf16.mxu0 0
    %1774 = vmatpush1.bf16.msra.mxu0 0
    %1775 = vmatprep.subr.bf16.mxu0 0
    %1776 = vmatpush1.bf16.msra.mxu0 0
    %1777 = vmatprep.subr.bf16.mxu0 0
    %1778 = vmatpush1.bf16.msra.mxu0 0
    %1779 = vmatprep.subr.bf16.mxu0 0
    %1780 = vmatpush1.bf16.msra.mxu0 0
    %1781 = vmatprep.subr.bf16.mxu0 0
    %1782 = vmatpush1.bf16.msra.mxu0 0
    %1783 = vmatprep.subr.bf16.mxu0 0
    %1784 = vmatpush1.bf16.msra.mxu0 0
    %1785 = vmatprep.subr.bf16.mxu0 0
    %1786 = vmatpush1.bf16.msra.mxu0 0
    %1787 = vmatprep.mubr.bf16.mxu0 0
    %1788 = vmatmul.mubr.bf16.gmra.mrb[0].mxu0 %v1750
    %v1789 = vpop.f32.mrb[0].mxu0
    %v1790 = vadd.f32 0.0, %v1789
    %v1791 = vpop.f32.mrb[0].mxu0
    %v1792 = vpop.f32.mrb[0].mxu0
    %v1793 = vpop.f32.mrb[0].mxu0
    %1794 = vdwg.mxu0
    %v1795 = vpack.c.bf16 %v1790, %v1742
    %v1797 = vsel %vm234, %v1795, 0
    %v1800 = vsel %vm357, %v224, 0
    %1802 = vmatprep.subr.bf16.mxu0 0
    %1803 = vmatpush1.bf16.msra.mxu0 %v1800
    %1804 = vmatprep.subr.bf16.mxu0 0
    %1805 = vmatpush1.bf16.msra.mxu0 0
    %1806 = vmatprep.subr.bf16.mxu0 0
    %1807 = vmatpush1.bf16.msra.mxu0 0
    %1808 = vmatprep.subr.bf16.mxu0 0
    %1809 = vmatpush1.bf16.msra.mxu0 0
    %1810 = vmatprep.subr.bf16.mxu0 0
    %1811 = vmatpush1.bf16.msra.mxu0 0
    %1812 = vmatprep.subr.bf16.mxu0 0
    %1813 = vmatpush1.bf16.msra.mxu0 0
    %1814 = vmatprep.subr.bf16.mxu0 0
    %1815 = vmatpush1.bf16.msra.mxu0 0
    %1816 = vmatprep.subr.bf16.mxu0 0
    %1817 = vmatpush1.bf16.msra.mxu0 0
    %1818 = vmatprep.subr.bf16.mxu0 0
    %1819 = vmatpush1.bf16.msra.mxu0 0
    %1820 = vmatprep.subr.bf16.mxu0 0
    %1821 = vmatpush1.bf16.msra.mxu0 0
    %1822 = vmatprep.subr.bf16.mxu0 0
    %1823 = vmatpush1.bf16.msra.mxu0 0
    %1824 = vmatprep.subr.bf16.mxu0 0
    %1825 = vmatpush1.bf16.msra.mxu0 0
    %1826 = vmatprep.subr.bf16.mxu0 0
    %1827 = vmatpush1.bf16.msra.mxu0 0
    %1828 = vmatprep.subr.bf16.mxu0 0
    %1829 = vmatpush1.bf16.msra.mxu0 0
    %1830 = vmatprep.subr.bf16.mxu0 0
    %1831 = vmatpush1.bf16.msra.mxu0 0
    %1832 = vmatprep.subr.bf16.mxu0 0
    %1833 = vmatpush1.bf16.msra.mxu0 0
    %1834 = vmatprep.mubr.bf16.mxu0 0
    %1835 = vmatmul.mubr.bf16.gmra.mrb[0].mxu0 %v1797
    %v1836 = vpop.f32.mrb[0].mxu0
    %v1837 = vadd.f32 0.0, %v1836
    %v1838 = vpop.f32.mrb[0].mxu0
    %v1839 = vpop.f32.mrb[0].mxu0
    %v1840 = vadd.f32 0.0, %v1839
    %v1841 = vpop.f32.mrb[0].mxu0
    %1842 = vdwg.mxu0
    %v1843 = vadd.f32 %v1573, %v1837
    %v1844 = vadd.f32 %v1574, %v1840
    %1845 = vrot.lane.b32.xlu0 %v227, 80
    %v1846 = vpop.permute.xlu0 %1845
    %1847 = vrot.lane.b32.xlu0 %v227, 16
    %v1848 = vpop.permute.xlu0 %1847
    %v1850 = vsel %vm234, %v1846, 0
    %v1853 = vsel %vm234, %v1848, 0
    %1855 = vmatprep.subr.bf16.mxu0 0
    %1856 = vmatpush1.bf16.xpose.msra.mxu0 %v1853
    %1857 = vmatprep.subr.bf16.mxu0 0
    %1858 = vmatpush1.bf16.xpose.msra.mxu0 0
    %1859 = vmatprep.subr.bf16.mxu0 0
    %1860 = vmatpush1.bf16.xpose.msra.mxu0 0
    %1861 = vmatprep.subr.bf16.mxu0 0
    %1862 = vmatpush1.bf16.xpose.msra.mxu0 0
    %1863 = vmatprep.subr.bf16.mxu0 0
    %1864 = vmatpush1.bf16.xpose.msra.mxu0 0
    %1865 = vmatprep.subr.bf16.mxu0 0
    %1866 = vmatpush1.bf16.xpose.msra.mxu0 0
    %1867 = vmatprep.subr.bf16.mxu0 0
    %1868 = vmatpush1.bf16.xpose.msra.mxu0 0
    %1869 = vmatprep.subr.bf16.mxu0 0
    %1870 = vmatpush1.bf16.xpose.msra.mxu0 0
    %1871 = vmatprep.subr.bf16.mxu0 0
    %1872 = vmatpush1.bf16.xpose.msra.mxu0 0
    %1873 = vmatprep.subr.bf16.mxu0 0
    %1874 = vmatpush1.bf16.xpose.msra.mxu0 0
    %1875 = vmatprep.subr.bf16.mxu0 0
    %1876 = vmatpush1.bf16.xpose.msra.mxu0 0
    %1877 = vmatprep.subr.bf16.mxu0 0
    %1878 = vmatpush1.bf16.xpose.msra.mxu0 0
    %1879 = vmatprep.subr.bf16.mxu0 0
    %1880 = vmatpush1.bf16.xpose.msra.mxu0 0
    %1881 = vmatprep.subr.bf16.mxu0 0
    %1882 = vmatpush1.bf16.xpose.msra.mxu0 0
    %1883 = vmatprep.subr.bf16.mxu0 0
    %1884 = vmatpush1.bf16.xpose.msra.mxu0 0
    %1885 = vmatprep.subr.bf16.mxu0 0
    %1886 = vmatpush1.bf16.xpose.msra.mxu0 0
    %1887 = vmatprep.mubr.bf16.mxu0 0
    %1888 = vmatmul.mubr.bf16.gmra.mrb[0].mxu0 %v1850
    %v1889 = vpop.f32.mrb[0].mxu0
    %v1890 = vadd.f32 0.0, %v1889
    %v1891 = vpop.f32.mrb[0].mxu0
    %v1892 = vpop.f32.mrb[0].mxu0
    %v1893 = vpop.f32.mrb[0].mxu0
    %1894 = vdwg.mxu0
    %1895 = vrot.lane.b32.xlu0 %v228, 80
    %v1896 = vpop.permute.xlu0 %1895
    %1897 = vrot.lane.b32.xlu0 %v228, 16
    %v1898 = vpop.permute.xlu0 %1897
    %v1900 = vsel %vm234, %v1896, 0
    %v1903 = vsel %vm234, %v1898, 0
    %1905 = vmatprep.subr.bf16.mxu0 0
    %1906 = vmatpush1.bf16.xpose.msra.mxu0 %v1903
    %1907 = vmatprep.subr.bf16.mxu0 0
    %1908 = vmatpush1.bf16.xpose.msra.mxu0 0
    %1909 = vmatprep.subr.bf16.mxu0 0
    %1910 = vmatpush1.bf16.xpose.msra.mxu0 0
    %1911 = vmatprep.subr.bf16.mxu0 0
    %1912 = vmatpush1.bf16.xpose.msra.mxu0 0
    %1913 = vmatprep.subr.bf16.mxu0 0
    %1914 = vmatpush1.bf16.xpose.msra.mxu0 0
    %1915 = vmatprep.subr.bf16.mxu0 0
    %1916 = vmatpush1.bf16.xpose.msra.mxu0 0
    %1917 = vmatprep.subr.bf16.mxu0 0
    %1918 = vmatpush1.bf16.xpose.msra.mxu0 0
    %1919 = vmatprep.subr.bf16.mxu0 0
    %1920 = vmatpush1.bf16.xpose.msra.mxu0 0
    %1921 = vmatprep.subr.bf16.mxu0 0
    %1922 = vmatpush1.bf16.xpose.msra.mxu0 0
    %1923 = vmatprep.subr.bf16.mxu0 0
    %1924 = vmatpush1.bf16.xpose.msra.mxu0 0
    %1925 = vmatprep.subr.bf16.mxu0 0
    %1926 = vmatpush1.bf16.xpose.msra.mxu0 0
    %1927 = vmatprep.subr.bf16.mxu0 0
    %1928 = vmatpush1.bf16.xpose.msra.mxu0 0
    %1929 = vmatprep.subr.bf16.mxu0 0
    %1930 = vmatpush1.bf16.xpose.msra.mxu0 0
    %1931 = vmatprep.subr.bf16.mxu0 0
    %1932 = vmatpush1.bf16.xpose.msra.mxu0 0
    %1933 = vmatprep.subr.bf16.mxu0 0
    %1934 = vmatpush1.bf16.xpose.msra.mxu0 0
    %1935 = vmatprep.subr.bf16.mxu0 0
    %1936 = vmatpush1.bf16.xpose.msra.mxu0 0
    %1937 = vmatprep.mubr.bf16.mxu0 0
    %1938 = vmatmul.mubr.bf16.gmra.mrb[0].mxu0 %v1900
    %v1939 = vpop.f32.mrb[0].mxu0
    %v1940 = vadd.f32 0.0, %v1939
    %v1941 = vpop.f32.mrb[0].mxu0
    %v1942 = vpop.f32.mrb[0].mxu0
    %v1943 = vpop.f32.mrb[0].mxu0
    %1944 = vdwg.mxu0
    %v1945 = vsel %vm234, %v1890, -inf
    %1946 = vmax.xlane.f32.xlu0 %v1945
    %v1947 = vpop.xlane.xlu0 %1946
    %v1948 = vsel %vm234, %v1940, -inf
    %1949 = vmax.xlane.f32.xlu0 %v1948
    %v1950 = vpop.xlane.xlu0 %1949
    %v1951 = vsub.f32 %v1890, %v1947
    %v1952 = vsub.f32 %v1940, %v1950
    %v1953 = vmul.f32 %v1951, 1.442695
    %v1954 = vpow.pop %v1953
    %v1955 = vmul.f32 %v1952, 1.442695
    %v1956 = vpow.pop %v1955
    %v1957 = vsel %vm234, %v1954, 0.0
    %1958 = vadd.xlane.f32.xlu0 %v1957
    %v1959 = vpop.xlane.xlu0 %1958
    %v1960 = vsel %vm234, %v1956, 0.0
    %1961 = vadd.xlane.f32.xlu0 %v1960
    %v1962 = vpop.xlane.xlu0 %1961
    %v1963 = vrcp.pop %v1959
    %v1964 = vrcp.pop %v1962
    %v1965 = vmul.f32 %v1954, %v1963
    %v1966 = vmul.f32 %v1956, %v1964
    %v1967 = vpack.c.bf16 %v1965, %v1965
    %v1968 = vpack.c.bf16 %v1966, %v1966
    %1969 = vrot.lane.b32.xlu0 %v229, 80
    %v1970 = vpop.permute.xlu0 %1969
    %v1972 = vsel %vm234, %v1967, 0
    %v1975 = vsel %vm357, %v1970, 0
    %1977 = vmatprep.subr.bf16.mxu0 0
    %1978 = vmatpush1.bf16.msra.mxu0 %v1975
    %1979 = vmatprep.subr.bf16.mxu0 0
    %1980 = vmatpush1.bf16.msra.mxu0 0
    %1981 = vmatprep.subr.bf16.mxu0 0
    %1982 = vmatpush1.bf16.msra.mxu0 0
    %1983 = vmatprep.subr.bf16.mxu0 0
    %1984 = vmatpush1.bf16.msra.mxu0 0
    %1985 = vmatprep.subr.bf16.mxu0 0
    %1986 = vmatpush1.bf16.msra.mxu0 0
    %1987 = vmatprep.subr.bf16.mxu0 0
    %1988 = vmatpush1.bf16.msra.mxu0 0
    %1989 = vmatprep.subr.bf16.mxu0 0
    %1990 = vmatpush1.bf16.msra.mxu0 0
    %1991 = vmatprep.subr.bf16.mxu0 0
    %1992 = vmatpush1.bf16.msra.mxu0 0
    %1993 = vmatprep.subr.bf16.mxu0 0
    %1994 = vmatpush1.bf16.msra.mxu0 0
    %1995 = vmatprep.subr.bf16.mxu0 0
    %1996 = vmatpush1.bf16.msra.mxu0 0
    %1997 = vmatprep.subr.bf16.mxu0 0
    %1998 = vmatpush1.bf16.msra.mxu0 0
    %1999 = vmatprep.subr.bf16.mxu0 0
    %2000 = vmatpush1.bf16.msra.mxu0 0
    %2001 = vmatprep.subr.bf16.mxu0 0
    %2002 = vmatpush1.bf16.msra.mxu0 0
    %2003 = vmatprep.subr.bf16.mxu0 0
    %2004 = vmatpush1.bf16.msra.mxu0 0
    %2005 = vmatprep.subr.bf16.mxu0 0
    %2006 = vmatpush1.bf16.msra.mxu0 0
    %2007 = vmatprep.subr.bf16.mxu0 0
    %2008 = vmatpush1.bf16.msra.mxu0 0
    %2009 = vmatprep.mubr.bf16.mxu0 0
    %2010 = vmatmul.mubr.bf16.gmra.mrb[0].mxu0 %v1972
    %v2011 = vpop.f32.mrb[0].mxu0
    %v2012 = vadd.f32 0.0, %v2011
    %v2013 = vpop.f32.mrb[0].mxu0
    %v2014 = vpop.f32.mrb[0].mxu0
    %v2015 = vpop.f32.mrb[0].mxu0
    %2016 = vdwg.mxu0
    %2017 = vrot.lane.b32.xlu0 %v230, 80
    %v2018 = vpop.permute.xlu0 %2017
    %v2020 = vsel %vm234, %v1968, 0
    %v2023 = vsel %vm357, %v2018, 0
    %2025 = vmatprep.subr.bf16.mxu0 0
    %2026 = vmatpush1.bf16.msra.mxu0 %v2023
    %2027 = vmatprep.subr.bf16.mxu0 0
    %2028 = vmatpush1.bf16.msra.mxu0 0
    %2029 = vmatprep.subr.bf16.mxu0 0
    %2030 = vmatpush1.bf16.msra.mxu0 0
    %2031 = vmatprep.subr.bf16.mxu0 0
    %2032 = vmatpush1.bf16.msra.mxu0 0
    %2033 = vmatprep.subr.bf16.mxu0 0
    %2034 = vmatpush1.bf16.msra.mxu0 0
    %2035 = vmatprep.subr.bf16.mxu0 0
    %2036 = vmatpush1.bf16.msra.mxu0 0
    %2037 = vmatprep.subr.bf16.mxu0 0
    %2038 = vmatpush1.bf16.msra.mxu0 0
    %2039 = vmatprep.subr.bf16.mxu0 0
    %2040 = vmatpush1.bf16.msra.mxu0 0
    %2041 = vmatprep.subr.bf16.mxu0 0
    %2042 = vmatpush1.bf16.msra.mxu0 0
    %2043 = vmatprep.subr.bf16.mxu0 0
    %2044 = vmatpush1.bf16.msra.mxu0 0
    %2045 = vmatprep.subr.bf16.mxu0 0
    %2046 = vmatpush1.bf16.msra.mxu0 0
    %2047 = vmatprep.subr.bf16.mxu0 0
    %2048 = vmatpush1.bf16.msra.mxu0 0
    %2049 = vmatprep.subr.bf16.mxu0 0
    %2050 = vmatpush1.bf16.msra.mxu0 0
    %2051 = vmatprep.subr.bf16.mxu0 0
    %2052 = vmatpush1.bf16.msra.mxu0 0
    %2053 = vmatprep.subr.bf16.mxu0 0
    %2054 = vmatpush1.bf16.msra.mxu0 0
    %2055 = vmatprep.subr.bf16.mxu0 0
    %2056 = vmatpush1.bf16.msra.mxu0 0
    %2057 = vmatprep.mubr.bf16.mxu0 0
    %2058 = vmatmul.mubr.bf16.gmra.mrb[0].mxu0 %v2020
    %v2059 = vpop.f32.mrb[0].mxu0
    %v2060 = vadd.f32 0.0, %v2059
    %v2061 = vpop.f32.mrb[0].mxu0
    %v2062 = vpop.f32.mrb[0].mxu0
    %v2063 = vpop.f32.mrb[0].mxu0
    %2064 = vdwg.mxu0
    %v2065 = vpack.c.bf16 %v2060, %v2012
    %v2067 = vsel %vm234, %v2065, 0
    %v2070 = vsel %vm357, %v225, 0
    %2072 = vmatprep.subr.bf16.mxu0 0
    %2073 = vmatpush1.bf16.msra.mxu0 %v2070
    %2074 = vmatprep.subr.bf16.mxu0 0
    %2075 = vmatpush1.bf16.msra.mxu0 0
    %2076 = vmatprep.subr.bf16.mxu0 0
    %2077 = vmatpush1.bf16.msra.mxu0 0
    %2078 = vmatprep.subr.bf16.mxu0 0
    %2079 = vmatpush1.bf16.msra.mxu0 0
    %2080 = vmatprep.subr.bf16.mxu0 0
    %2081 = vmatpush1.bf16.msra.mxu0 0
    %2082 = vmatprep.subr.bf16.mxu0 0
    %2083 = vmatpush1.bf16.msra.mxu0 0
    %2084 = vmatprep.subr.bf16.mxu0 0
    %2085 = vmatpush1.bf16.msra.mxu0 0
    %2086 = vmatprep.subr.bf16.mxu0 0
    %2087 = vmatpush1.bf16.msra.mxu0 0
    %2088 = vmatprep.subr.bf16.mxu0 0
    %2089 = vmatpush1.bf16.msra.mxu0 0
    %2090 = vmatprep.subr.bf16.mxu0 0
    %2091 = vmatpush1.bf16.msra.mxu0 0
    %2092 = vmatprep.subr.bf16.mxu0 0
    %2093 = vmatpush1.bf16.msra.mxu0 0
    %2094 = vmatprep.subr.bf16.mxu0 0
    %2095 = vmatpush1.bf16.msra.mxu0 0
    %2096 = vmatprep.subr.bf16.mxu0 0
    %2097 = vmatpush1.bf16.msra.mxu0 0
    %2098 = vmatprep.subr.bf16.mxu0 0
    %2099 = vmatpush1.bf16.msra.mxu0 0
    %2100 = vmatprep.subr.bf16.mxu0 0
    %2101 = vmatpush1.bf16.msra.mxu0 0
    %2102 = vmatprep.subr.bf16.mxu0 0
    %2103 = vmatpush1.bf16.msra.mxu0 0
    %2104 = vmatprep.mubr.bf16.mxu0 0
    %2105 = vmatmul.mubr.bf16.gmra.mrb[0].mxu0 %v2067
    %v2106 = vpop.f32.mrb[0].mxu0
    %v2107 = vadd.f32 0.0, %v2106
    %v2108 = vpop.f32.mrb[0].mxu0
    %v2109 = vpop.f32.mrb[0].mxu0
    %v2110 = vadd.f32 0.0, %v2109
    %v2111 = vpop.f32.mrb[0].mxu0
    %2112 = vdwg.mxu0
    %v2113 = vadd.f32 %v1843, %v2107
    %v2114 = vadd.f32 %v1844, %v2110
    %2115 = vrot.lane.b32.xlu0 %v227, 72
    %v2116 = vpop.permute.xlu0 %2115
    %2117 = vrot.lane.b32.xlu0 %v227, 8
    %v2118 = vpop.permute.xlu0 %2117
    %v2120 = vsel %vm234, %v2116, 0
    %v2123 = vsel %vm234, %v2118, 0
    %2125 = vmatprep.subr.bf16.mxu0 0
    %2126 = vmatpush1.bf16.xpose.msra.mxu0 %v2123
    %2127 = vmatprep.subr.bf16.mxu0 0
    %2128 = vmatpush1.bf16.xpose.msra.mxu0 0
    %2129 = vmatprep.subr.bf16.mxu0 0
    %2130 = vmatpush1.bf16.xpose.msra.mxu0 0
    %2131 = vmatprep.subr.bf16.mxu0 0
    %2132 = vmatpush1.bf16.xpose.msra.mxu0 0
    %2133 = vmatprep.subr.bf16.mxu0 0
    %2134 = vmatpush1.bf16.xpose.msra.mxu0 0
    %2135 = vmatprep.subr.bf16.mxu0 0
    %2136 = vmatpush1.bf16.xpose.msra.mxu0 0
    %2137 = vmatprep.subr.bf16.mxu0 0
    %2138 = vmatpush1.bf16.xpose.msra.mxu0 0
    %2139 = vmatprep.subr.bf16.mxu0 0
    %2140 = vmatpush1.bf16.xpose.msra.mxu0 0
    %2141 = vmatprep.subr.bf16.mxu0 0
    %2142 = vmatpush1.bf16.xpose.msra.mxu0 0
    %2143 = vmatprep.subr.bf16.mxu0 0
    %2144 = vmatpush1.bf16.xpose.msra.mxu0 0
    %2145 = vmatprep.subr.bf16.mxu0 0
    %2146 = vmatpush1.bf16.xpose.msra.mxu0 0
    %2147 = vmatprep.subr.bf16.mxu0 0
    %2148 = vmatpush1.bf16.xpose.msra.mxu0 0
    %2149 = vmatprep.subr.bf16.mxu0 0
    %2150 = vmatpush1.bf16.xpose.msra.mxu0 0
    %2151 = vmatprep.subr.bf16.mxu0 0
    %2152 = vmatpush1.bf16.xpose.msra.mxu0 0
    %2153 = vmatprep.subr.bf16.mxu0 0
    %2154 = vmatpush1.bf16.xpose.msra.mxu0 0
    %2155 = vmatprep.subr.bf16.mxu0 0
    %2156 = vmatpush1.bf16.xpose.msra.mxu0 0
    %2157 = vmatprep.mubr.bf16.mxu0 0
    %2158 = vmatmul.mubr.bf16.gmra.mrb[0].mxu0 %v2120
    %v2159 = vpop.f32.mrb[0].mxu0
    %v2160 = vadd.f32 0.0, %v2159
    %v2161 = vpop.f32.mrb[0].mxu0
    %v2162 = vpop.f32.mrb[0].mxu0
    %v2163 = vpop.f32.mrb[0].mxu0
    %2164 = vdwg.mxu0
    %2165 = vrot.lane.b32.xlu0 %v228, 72
    %v2166 = vpop.permute.xlu0 %2165
    %2167 = vrot.lane.b32.xlu0 %v228, 8
    %v2168 = vpop.permute.xlu0 %2167
    %v2170 = vsel %vm234, %v2166, 0
    %v2173 = vsel %vm234, %v2168, 0
    %2175 = vmatprep.subr.bf16.mxu0 0
    %2176 = vmatpush1.bf16.xpose.msra.mxu0 %v2173
    %2177 = vmatprep.subr.bf16.mxu0 0
    %2178 = vmatpush1.bf16.xpose.msra.mxu0 0
    %2179 = vmatprep.subr.bf16.mxu0 0
    %2180 = vmatpush1.bf16.xpose.msra.mxu0 0
    %2181 = vmatprep.subr.bf16.mxu0 0
    %2182 = vmatpush1.bf16.xpose.msra.mxu0 0
    %2183 = vmatprep.subr.bf16.mxu0 0
    %2184 = vmatpush1.bf16.xpose.msra.mxu0 0
    %2185 = vmatprep.subr.bf16.mxu0 0
    %2186 = vmatpush1.bf16.xpose.msra.mxu0 0
    %2187 = vmatprep.subr.bf16.mxu0 0
    %2188 = vmatpush1.bf16.xpose.msra.mxu0 0
    %2189 = vmatprep.subr.bf16.mxu0 0
    %2190 = vmatpush1.bf16.xpose.msra.mxu0 0
    %2191 = vmatprep.subr.bf16.mxu0 0
    %2192 = vmatpush1.bf16.xpose.msra.mxu0 0
    %2193 = vmatprep.subr.bf16.mxu0 0
    %2194 = vmatpush1.bf16.xpose.msra.mxu0 0
    %2195 = vmatprep.subr.bf16.mxu0 0
    %2196 = vmatpush1.bf16.xpose.msra.mxu0 0
    %2197 = vmatprep.subr.bf16.mxu0 0
    %2198 = vmatpush1.bf16.xpose.msra.mxu0 0
    %2199 = vmatprep.subr.bf16.mxu0 0
    %2200 = vmatpush1.bf16.xpose.msra.mxu0 0
    %2201 = vmatprep.subr.bf16.mxu0 0
    %2202 = vmatpush1.bf16.xpose.msra.mxu0 0
    %2203 = vmatprep.subr.bf16.mxu0 0
    %2204 = vmatpush1.bf16.xpose.msra.mxu0 0
    %2205 = vmatprep.subr.bf16.mxu0 0
    %2206 = vmatpush1.bf16.xpose.msra.mxu0 0
    %2207 = vmatprep.mubr.bf16.mxu0 0
    %2208 = vmatmul.mubr.bf16.gmra.mrb[0].mxu0 %v2170
    %v2209 = vpop.f32.mrb[0].mxu0
    %v2210 = vadd.f32 0.0, %v2209
    %v2211 = vpop.f32.mrb[0].mxu0
    %v2212 = vpop.f32.mrb[0].mxu0
    %v2213 = vpop.f32.mrb[0].mxu0
    %2214 = vdwg.mxu0
    %v2215 = vsel %vm234, %v2160, -inf
    %2216 = vmax.xlane.f32.xlu0 %v2215
    %v2217 = vpop.xlane.xlu0 %2216
    %v2218 = vsel %vm234, %v2210, -inf
    %2219 = vmax.xlane.f32.xlu0 %v2218
    %v2220 = vpop.xlane.xlu0 %2219
    %v2221 = vsub.f32 %v2160, %v2217
    %v2222 = vsub.f32 %v2210, %v2220
    %v2223 = vmul.f32 %v2221, 1.442695
    %v2224 = vpow.pop %v2223
    %v2225 = vmul.f32 %v2222, 1.442695
    %v2226 = vpow.pop %v2225
    %v2227 = vsel %vm234, %v2224, 0.0
    %2228 = vadd.xlane.f32.xlu0 %v2227
    %v2229 = vpop.xlane.xlu0 %2228
    %v2230 = vsel %vm234, %v2226, 0.0
    %2231 = vadd.xlane.f32.xlu0 %v2230
    %v2232 = vpop.xlane.xlu0 %2231
    %v2233 = vrcp.pop %v2229
    %v2234 = vrcp.pop %v2232
    %v2235 = vmul.f32 %v2224, %v2233
    %v2236 = vmul.f32 %v2226, %v2234
    %v2237 = vpack.c.bf16 %v2235, %v2235
    %v2238 = vpack.c.bf16 %v2236, %v2236
    %2239 = vrot.lane.b32.xlu0 %v229, 72
    %v2240 = vpop.permute.xlu0 %2239
    %v2242 = vsel %vm234, %v2237, 0
    %v2245 = vsel %vm357, %v2240, 0
    %2247 = vmatprep.subr.bf16.mxu0 0
    %2248 = vmatpush1.bf16.msra.mxu0 %v2245
    %2249 = vmatprep.subr.bf16.mxu0 0
    %2250 = vmatpush1.bf16.msra.mxu0 0
    %2251 = vmatprep.subr.bf16.mxu0 0
    %2252 = vmatpush1.bf16.msra.mxu0 0
    %2253 = vmatprep.subr.bf16.mxu0 0
    %2254 = vmatpush1.bf16.msra.mxu0 0
    %2255 = vmatprep.subr.bf16.mxu0 0
    %2256 = vmatpush1.bf16.msra.mxu0 0
    %2257 = vmatprep.subr.bf16.mxu0 0
    %2258 = vmatpush1.bf16.msra.mxu0 0
    %2259 = vmatprep.subr.bf16.mxu0 0
    %2260 = vmatpush1.bf16.msra.mxu0 0
    %2261 = vmatprep.subr.bf16.mxu0 0
    %2262 = vmatpush1.bf16.msra.mxu0 0
    %2263 = vmatprep.subr.bf16.mxu0 0
    %2264 = vmatpush1.bf16.msra.mxu0 0
    %2265 = vmatprep.subr.bf16.mxu0 0
    %2266 = vmatpush1.bf16.msra.mxu0 0
    %2267 = vmatprep.subr.bf16.mxu0 0
    %2268 = vmatpush1.bf16.msra.mxu0 0
    %2269 = vmatprep.subr.bf16.mxu0 0
    %2270 = vmatpush1.bf16.msra.mxu0 0
    %2271 = vmatprep.subr.bf16.mxu0 0
    %2272 = vmatpush1.bf16.msra.mxu0 0
    %2273 = vmatprep.subr.bf16.mxu0 0
    %2274 = vmatpush1.bf16.msra.mxu0 0
    %2275 = vmatprep.subr.bf16.mxu0 0
    %2276 = vmatpush1.bf16.msra.mxu0 0
    %2277 = vmatprep.subr.bf16.mxu0 0
    %2278 = vmatpush1.bf16.msra.mxu0 0
    %2279 = vmatprep.mubr.bf16.mxu0 0
    %2280 = vmatmul.mubr.bf16.gmra.mrb[0].mxu0 %v2242
    %v2281 = vpop.f32.mrb[0].mxu0
    %v2282 = vadd.f32 0.0, %v2281
    %v2283 = vpop.f32.mrb[0].mxu0
    %v2284 = vpop.f32.mrb[0].mxu0
    %v2285 = vpop.f32.mrb[0].mxu0
    %2286 = vdwg.mxu0
    %2287 = vrot.lane.b32.xlu0 %v230, 72
    %v2288 = vpop.permute.xlu0 %2287
    %v2290 = vsel %vm234, %v2238, 0
    %v2293 = vsel %vm357, %v2288, 0
    %2295 = vmatprep.subr.bf16.mxu0 0
    %2296 = vmatpush1.bf16.msra.mxu0 %v2293
    %2297 = vmatprep.subr.bf16.mxu0 0
    %2298 = vmatpush1.bf16.msra.mxu0 0
    %2299 = vmatprep.subr.bf16.mxu0 0
    %2300 = vmatpush1.bf16.msra.mxu0 0
    %2301 = vmatprep.subr.bf16.mxu0 0
    %2302 = vmatpush1.bf16.msra.mxu0 0
    %2303 = vmatprep.subr.bf16.mxu0 0
    %2304 = vmatpush1.bf16.msra.mxu0 0
    %2305 = vmatprep.subr.bf16.mxu0 0
    %2306 = vmatpush1.bf16.msra.mxu0 0
    %2307 = vmatprep.subr.bf16.mxu0 0
    %2308 = vmatpush1.bf16.msra.mxu0 0
    %2309 = vmatprep.subr.bf16.mxu0 0
    %2310 = vmatpush1.bf16.msra.mxu0 0
    %2311 = vmatprep.subr.bf16.mxu0 0
    %2312 = vmatpush1.bf16.msra.mxu0 0
    %2313 = vmatprep.subr.bf16.mxu0 0
    %2314 = vmatpush1.bf16.msra.mxu0 0
    %2315 = vmatprep.subr.bf16.mxu0 0
    %2316 = vmatpush1.bf16.msra.mxu0 0
    %2317 = vmatprep.subr.bf16.mxu0 0
    %2318 = vmatpush1.bf16.msra.mxu0 0
    %2319 = vmatprep.subr.bf16.mxu0 0
    %2320 = vmatpush1.bf16.msra.mxu0 0
    %2321 = vmatprep.subr.bf16.mxu0 0
    %2322 = vmatpush1.bf16.msra.mxu0 0
    %2323 = vmatprep.subr.bf16.mxu0 0
    %2324 = vmatpush1.bf16.msra.mxu0 0
    %2325 = vmatprep.subr.bf16.mxu0 0
    %2326 = vmatpush1.bf16.msra.mxu0 0
    %2327 = vmatprep.mubr.bf16.mxu0 0
    %2328 = vmatmul.mubr.bf16.gmra.mrb[0].mxu0 %v2290
    %v2329 = vpop.f32.mrb[0].mxu0
    %v2330 = vadd.f32 0.0, %v2329
    %v2331 = vpop.f32.mrb[0].mxu0
    %v2332 = vpop.f32.mrb[0].mxu0
    %v2333 = vpop.f32.mrb[0].mxu0
    %2334 = vdwg.mxu0
    %v2335 = vpack.c.bf16 %v2330, %v2282
    %v2337 = vsel %vm234, %v2335, 0
    %v2340 = vsel %vm357, %v226, 0
    %2342 = vmatprep.subr.bf16.mxu0 0
    %2343 = vmatpush1.bf16.msra.mxu0 %v2340
    %2344 = vmatprep.subr.bf16.mxu0 0
    %2345 = vmatpush1.bf16.msra.mxu0 0
    %2346 = vmatprep.subr.bf16.mxu0 0
    %2347 = vmatpush1.bf16.msra.mxu0 0
    %2348 = vmatprep.subr.bf16.mxu0 0
    %2349 = vmatpush1.bf16.msra.mxu0 0
    %2350 = vmatprep.subr.bf16.mxu0 0
    %2351 = vmatpush1.bf16.msra.mxu0 0
    %2352 = vmatprep.subr.bf16.mxu0 0
    %2353 = vmatpush1.bf16.msra.mxu0 0
    %2354 = vmatprep.subr.bf16.mxu0 0
    %2355 = vmatpush1.bf16.msra.mxu0 0
    %2356 = vmatprep.subr.bf16.mxu0 0
    %2357 = vmatpush1.bf16.msra.mxu0 0
    %2358 = vmatprep.subr.bf16.mxu0 0
    %2359 = vmatpush1.bf16.msra.mxu0 0
    %2360 = vmatprep.subr.bf16.mxu0 0
    %2361 = vmatpush1.bf16.msra.mxu0 0
    %2362 = vmatprep.subr.bf16.mxu0 0
    %2363 = vmatpush1.bf16.msra.mxu0 0
    %2364 = vmatprep.subr.bf16.mxu0 0
    %2365 = vmatpush1.bf16.msra.mxu0 0
    %2366 = vmatprep.subr.bf16.mxu0 0
    %2367 = vmatpush1.bf16.msra.mxu0 0
    %2368 = vmatprep.subr.bf16.mxu0 0
    %2369 = vmatpush1.bf16.msra.mxu0 0
    %2370 = vmatprep.subr.bf16.mxu0 0
    %2371 = vmatpush1.bf16.msra.mxu0 0
    %2372 = vmatprep.subr.bf16.mxu0 0
    %2373 = vmatpush1.bf16.msra.mxu0 0
    %2374 = vmatprep.mubr.bf16.mxu0 0
    %2375 = vmatmul.mubr.bf16.gmra.mrb[0].mxu0 %v2337
    %v2376 = vpop.f32.mrb[0].mxu0
    %v2377 = vadd.f32 0.0, %v2376
    %v2378 = vpop.f32.mrb[0].mxu0
    %v2379 = vpop.f32.mrb[0].mxu0
    %v2380 = vadd.f32 0.0, %v2379
    %v2381 = vpop.f32.mrb[0].mxu0
    %2382 = vdwg.mxu0
    %v2383 = vadd.f32 %v2113, %v2377
    %v2384 = vadd.f32 %v2114, %v2380
    %v2385 = vadd.f32 %v110, %v2383
    %v2386 = vadd.f32 %v111, %v2384
    %v2387 = vld [vmem:[%s6] sm:$0x1]
    %v2389 = vlaneseq
    %v2390 = vshrl.u32 %v2389, 7
    %v2391 = vsub.s32 0, %v2390
    %v2392 = vrot.slane %v2387, %v2391
    %v2394 = vadd.f32 %v2385, %v2392
    %v2395 = vadd.f32 %v2386, %v2392
    %v2396 = vpack.c.bf16 %v2395, %v2394
    %v2397 = vld [vmem:[%s7] sm:$0xff]
    %v2398 = vld [vmem:[%s7 + $0x8] sm:$0xff]
    %v2399 = vld [vmem:[%s7 + $0x10] sm:$0xff]
    %v2400 = vld [vmem:[%s7 + $0x18] sm:$0xff]
    %v2401 = vld [vmem:[%s7 + $0x20] sm:$0xff]
    %v2402 = vld [vmem:[%s7 + $0x28] sm:$0xff]
    %v2403 = vld [vmem:[%s7 + $0x30] sm:$0xff]
    %v2404 = vld [vmem:[%s7 + $0x38] sm:$0xff]
    %v2405 = vld [vmem:[%s10] sm:$0x3]
    %v2407 = vlaneseq
    %v2408 = vshrl.u32 %v2407, 7
    %v2409 = vsub.s32 0, %v2408
    %v2410 = vrot.slane %v2405, %v2409
    %v2411 = vlaneseq
    %v2412 = vshrl.u32 %v2411, 7
    %v2413 = vsub.s32 1, %v2412
    %v2414 = vrot.slane %v2405, %v2413
    %v2425 = vunpack.c.l.b16 %v2397
    %v2426 = vunpack.c.h.b16 %v2397
    %v2427 = vunpack.c.l.b16 %v2398
    %v2428 = vunpack.c.h.b16 %v2398
    %v2429 = vunpack.c.l.b16 %v2399
    %v2430 = vunpack.c.h.b16 %v2399
    %v2431 = vunpack.c.l.b16 %v2400
    %v2432 = vunpack.c.h.b16 %v2400
    %v2433 = vunpack.c.l.b16 %v2401
    %v2434 = vunpack.c.h.b16 %v2401
    %v2435 = vunpack.c.l.b16 %v2402
    %v2436 = vunpack.c.h.b16 %v2402
    %v2437 = vunpack.c.l.b16 %v2403
    %v2438 = vunpack.c.h.b16 %v2403
    %v2439 = vunpack.c.l.b16 %v2404
    %v2440 = vunpack.c.h.b16 %v2404
    %v2441 = vpack.c.b16 %v2427, %v2425
    %v2442 = vpack.c.b16 %v2428, %v2426
    %v2443 = vpack.c.b16 %v2431, %v2429
    %v2444 = vpack.c.b16 %v2432, %v2430
    %v2445 = vpack.c.b16 %v2435, %v2433
    %v2446 = vpack.c.b16 %v2436, %v2434
    %v2447 = vpack.c.b16 %v2439, %v2437
    %v2448 = vpack.c.b16 %v2440, %v2438
    %v2458 = vsel %vm66, %v2396, 0
    %2460 = vmatprep.subr.bf16.mxu0 %v2442
    %2461 = vmatpush1.bf16.msra.mxu0 %v2441
    %2462 = vmatprep.subr.bf16.mxu0 %v2444
    %2463 = vmatpush1.bf16.msra.mxu0 %v2443
    %2464 = vmatprep.subr.bf16.mxu0 %v2446
    %2465 = vmatpush1.bf16.msra.mxu0 %v2445
    %2466 = vmatprep.subr.bf16.mxu0 %v2448
    %2467 = vmatpush1.bf16.msra.mxu0 %v2447
    %2468 = vmatprep.subr.bf16.mxu0 0
    %2469 = vmatpush1.bf16.msra.mxu0 0
    %2470 = vmatprep.subr.bf16.mxu0 0
    %2471 = vmatpush1.bf16.msra.mxu0 0
    %2472 = vmatprep.subr.bf16.mxu0 0
    %2473 = vmatpush1.bf16.msra.mxu0 0
    %2474 = vmatprep.subr.bf16.mxu0 0
    %2475 = vmatpush1.bf16.msra.mxu0 0
    %2476 = vmatprep.subr.bf16.mxu0 0
    %2477 = vmatpush1.bf16.msra.mxu0 0
    %2478 = vmatprep.subr.bf16.mxu0 0
    %2479 = vmatpush1.bf16.msra.mxu0 0
    %2480 = vmatprep.subr.bf16.mxu0 0
    %2481 = vmatpush1.bf16.msra.mxu0 0
    %2482 = vmatprep.subr.bf16.mxu0 0
    %2483 = vmatpush1.bf16.msra.mxu0 0
    %2484 = vmatprep.subr.bf16.mxu0 0
    %2485 = vmatpush1.bf16.msra.mxu0 0
    %2486 = vmatprep.subr.bf16.mxu0 0
    %2487 = vmatpush1.bf16.msra.mxu0 0
    %2488 = vmatprep.subr.bf16.mxu0 0
    %2489 = vmatpush1.bf16.msra.mxu0 0
    %2490 = vmatprep.subr.bf16.mxu0 0
    %2491 = vmatpush1.bf16.msra.mxu0 0
    %2492 = vmatprep.mubr.bf16.mxu0 0
    %2493 = vmatmul.mubr.bf16.gmra.mrb[0].mxu0 %v2458
    %v2494 = vpop.f32.mrb[0].mxu0
    %v2495 = vadd.f32 %v2410, %v2494
    %v2496 = vpop.f32.mrb[0].mxu0
    %v2497 = vadd.f32 %v2414, %v2496
    %v2498 = vpop.f32.mrb[0].mxu0
    %v2499 = vadd.f32 %v2410, %v2498
    %v2500 = vpop.f32.mrb[0].mxu0
    %v2501 = vadd.f32 %v2414, %v2500
    %2502 = vdwg.mxu0
    %v2503 = vld [vmem:[%s8] sm:$0xff]
    %v2504 = vld [vmem:[%s8 + $0x8] sm:$0xff]
    %v2505 = vld [vmem:[%s8 + $0x10] sm:$0xff]
    %v2506 = vld [vmem:[%s8 + $0x18] sm:$0xff]
    %v2507 = vld [vmem:[%s8 + $0x20] sm:$0xff]
    %v2508 = vld [vmem:[%s8 + $0x28] sm:$0xff]
    %v2509 = vld [vmem:[%s8 + $0x30] sm:$0xff]
    %v2510 = vld [vmem:[%s8 + $0x38] sm:$0xff]
    %v2519 = vunpack.c.l.b16 %v2503
    %v2520 = vunpack.c.h.b16 %v2503
    %v2521 = vunpack.c.l.b16 %v2504
    %v2522 = vunpack.c.h.b16 %v2504
    %v2523 = vunpack.c.l.b16 %v2505
    %v2524 = vunpack.c.h.b16 %v2505
    %v2525 = vunpack.c.l.b16 %v2506
    %v2526 = vunpack.c.h.b16 %v2506
    %v2527 = vunpack.c.l.b16 %v2507
    %v2528 = vunpack.c.h.b16 %v2507
    %v2529 = vunpack.c.l.b16 %v2508
    %v2530 = vunpack.c.h.b16 %v2508
    %v2531 = vunpack.c.l.b16 %v2509
    %v2532 = vunpack.c.h.b16 %v2509
    %v2533 = vunpack.c.l.b16 %v2510
    %v2534 = vunpack.c.h.b16 %v2510
    %v2535 = vpack.c.b16 %v2521, %v2519
    %v2536 = vpack.c.b16 %v2522, %v2520
    %v2537 = vpack.c.b16 %v2525, %v2523
    %v2538 = vpack.c.b16 %v2526, %v2524
    %v2539 = vpack.c.b16 %v2529, %v2527
    %v2540 = vpack.c.b16 %v2530, %v2528
    %v2541 = vpack.c.b16 %v2533, %v2531
    %v2542 = vpack.c.b16 %v2534, %v2532
    %2551 = vmatprep.subr.bf16.mxu0 %v2536
    %2552 = vmatpush1.bf16.msra.mxu0 %v2535
    %2553 = vmatprep.subr.bf16.mxu0 %v2538
    %2554 = vmatpush1.bf16.msra.mxu0 %v2537
    %2555 = vmatprep.subr.bf16.mxu0 %v2540
    %2556 = vmatpush1.bf16.msra.mxu0 %v2539
    %2557 = vmatprep.subr.bf16.mxu0 %v2542
    %2558 = vmatpush1.bf16.msra.mxu0 %v2541
    %2559 = vmatprep.subr.bf16.mxu0 0
    %2560 = vmatpush1.bf16.msra.mxu0 0
    %2561 = vmatprep.subr.bf16.mxu0 0
    %2562 = vmatpush1.bf16.msra.mxu0 0
    %2563 = vmatprep.subr.bf16.mxu0 0
    %2564 = vmatpush1.bf16.msra.mxu0 0
    %2565 = vmatprep.subr.bf16.mxu0 0
    %2566 = vmatpush1.bf16.msra.mxu0 0
    %2567 = vmatprep.subr.bf16.mxu0 0
    %2568 = vmatpush1.bf16.msra.mxu0 0
    %2569 = vmatprep.subr.bf16.mxu0 0
    %2570 = vmatpush1.bf16.msra.mxu0 0
    %2571 = vmatprep.subr.bf16.mxu0 0
    %2572 = vmatpush1.bf16.msra.mxu0 0
    %2573 = vmatprep.subr.bf16.mxu0 0
    %2574 = vmatpush1.bf16.msra.mxu0 0
    %2575 = vmatprep.subr.bf16.mxu0 0
    %2576 = vmatpush1.bf16.msra.mxu0 0
    %2577 = vmatprep.subr.bf16.mxu0 0
    %2578 = vmatpush1.bf16.msra.mxu0 0
    %2579 = vmatprep.subr.bf16.mxu0 0
    %2580 = vmatpush1.bf16.msra.mxu0 0
    %2581 = vmatprep.subr.bf16.mxu0 0
    %2582 = vmatpush1.bf16.msra.mxu0 0
    %2583 = vmatprep.mubr.bf16.mxu0 0
    %2584 = vmatmul.mubr.bf16.gmra.mrb[0].mxu0 %v2458
    %v2585 = vpop.f32.mrb[0].mxu0
    %v2586 = vadd.f32 0.0, %v2585
    %v2587 = vpop.f32.mrb[0].mxu0
    %v2588 = vadd.f32 0.0, %v2587
    %v2589 = vpop.f32.mrb[0].mxu0
    %v2590 = vadd.f32 0.0, %v2589
    %v2591 = vpop.f32.mrb[0].mxu0
    %v2592 = vadd.f32 0.0, %v2591
    %2593 = vdwg.mxu0
    %v2594 = vld [vmem:[%s9] sm:$0xff]
    %v2595 = vld [vmem:[%s9 + $0x8] sm:$0xff]
    %v2596 = vld [vmem:[%s9 + $0x10] sm:$0xff]
    %v2597 = vld [vmem:[%s9 + $0x18] sm:$0xff]
    %v2598 = vld [vmem:[%s9 + $0x20] sm:$0xff]
    %v2599 = vld [vmem:[%s9 + $0x28] sm:$0xff]
    %v2600 = vld [vmem:[%s9 + $0x30] sm:$0xff]
    %v2601 = vld [vmem:[%s9 + $0x38] sm:$0xff]
    %v2602 = vld [vmem:[%s11] sm:$0x1]
    %v2607 = vrot.slane %v2586, 7
    %v2608 = vrot.slane %v2588, 7
    %v2609 = vrot.slane %v2590, 7
    %v2610 = vrot.slane %v2592, 7
    %v2615 = vadd.f32 %v2495, %v2607
    %v2616 = vadd.f32 %v2497, %v2608
    %v2617 = vadd.f32 %v2499, %v2609
    %v2618 = vadd.f32 %v2501, %v2610
    %v2627 = vunpack.c.l.b16 %v2594
    %v2628 = vunpack.c.h.b16 %v2594
    %v2629 = vunpack.c.l.b16 %v2595
    %v2630 = vunpack.c.h.b16 %v2595
    %v2631 = vunpack.c.l.b16 %v2596
    %v2632 = vunpack.c.h.b16 %v2596
    %v2633 = vunpack.c.l.b16 %v2597
    %v2634 = vunpack.c.h.b16 %v2597
    %v2635 = vunpack.c.l.b16 %v2598
    %v2636 = vunpack.c.h.b16 %v2598
    %v2637 = vunpack.c.l.b16 %v2599
    %v2638 = vunpack.c.h.b16 %v2599
    %v2639 = vunpack.c.l.b16 %v2600
    %v2640 = vunpack.c.h.b16 %v2600
    %v2641 = vunpack.c.l.b16 %v2601
    %v2642 = vunpack.c.h.b16 %v2601
    %v2643 = vpack.c.b16 %v2629, %v2627
    %v2644 = vpack.c.b16 %v2630, %v2628
    %v2645 = vpack.c.b16 %v2633, %v2631
    %v2646 = vpack.c.b16 %v2634, %v2632
    %v2647 = vpack.c.b16 %v2637, %v2635
    %v2648 = vpack.c.b16 %v2638, %v2636
    %v2649 = vpack.c.b16 %v2641, %v2639
    %v2650 = vpack.c.b16 %v2642, %v2640
    %v2660 = vsel %vm66, 0, 0
    %2662 = vmatprep.subr.bf16.mxu0 %v2644
    %2663 = vmatpush1.bf16.msra.mxu0 %v2643
    %2664 = vmatprep.subr.bf16.mxu0 %v2646
    %2665 = vmatpush1.bf16.msra.mxu0 %v2645
    %2666 = vmatprep.subr.bf16.mxu0 %v2648
    %2667 = vmatpush1.bf16.msra.mxu0 %v2647
    %2668 = vmatprep.subr.bf16.mxu0 %v2650
    %2669 = vmatpush1.bf16.msra.mxu0 %v2649
    %2670 = vmatprep.subr.bf16.mxu0 0
    %2671 = vmatpush1.bf16.msra.mxu0 0
    %2672 = vmatprep.subr.bf16.mxu0 0
    %2673 = vmatpush1.bf16.msra.mxu0 0
    %2674 = vmatprep.subr.bf16.mxu0 0
    %2675 = vmatpush1.bf16.msra.mxu0 0
    %2676 = vmatprep.subr.bf16.mxu0 0
    %2677 = vmatpush1.bf16.msra.mxu0 0
    %2678 = vmatprep.subr.bf16.mxu0 0
    %2679 = vmatpush1.bf16.msra.mxu0 0
    %2680 = vmatprep.subr.bf16.mxu0 0
    %2681 = vmatpush1.bf16.msra.mxu0 0
    %2682 = vmatprep.subr.bf16.mxu0 0
    %2683 = vmatpush1.bf16.msra.mxu0 0
    %2684 = vmatprep.subr.bf16.mxu0 0
    %2685 = vmatpush1.bf16.msra.mxu0 0
    %2686 = vmatprep.subr.bf16.mxu0 0
    %2687 = vmatpush1.bf16.msra.mxu0 0
    %2688 = vmatprep.subr.bf16.mxu0 0
    %2689 = vmatpush1.bf16.msra.mxu0 0
    %2690 = vmatprep.subr.bf16.mxu0 0
    %2691 = vmatpush1.bf16.msra.mxu0 0
    %2692 = vmatprep.subr.bf16.mxu0 0
    %2693 = vmatpush1.bf16.msra.mxu0 0
    %2694 = vmatprep.mubr.bf16.mxu0 0
    %2695 = vmatmul.mubr.bf16.gmra.mrb[0].mxu0 %v2660
    %v2696 = vpop.f32.mrb[0].mxu0
    %v2697 = vadd.f32 0.0, %v2696
    %v2698 = vpop.f32.mrb[0].mxu0
    %v2699 = vadd.f32 0.0, %v2698
    %v2700 = vpop.f32.mrb[0].mxu0
    %v2701 = vpop.f32.mrb[0].mxu0
    %2702 = vdwg.mxu0
    %v2704 = vrot.slane %v2697, 1
    %v2707 = vadd.f32 %v2615, %v2697
    %v2708 = vadd.f32 %v2617, %v2704
    %v2709 = vxor.u32 %v2707, 2147483648
    %v2710 = vxor.u32 %v2708, 2147483648
    %v2711 = vmul.f32 %v2709, 1.442695
    %v2712 = vpow.pop %v2711
    %v2713 = vmul.f32 %v2710, 1.442695
    %v2714 = vpow.pop %v2713
    %v2715 = vadd.f32 %v2712, 1.0
    %v2716 = vadd.f32 %v2714, 1.0
    %v2717 = vrcp.pop %v2715
    %v2718 = vmul.f32 1.0, %v2717
    %v2719 = vrcp.pop %v2716
    %v2720 = vmul.f32 1.0, %v2719
    %v2722 = vlaneseq
    %v2723 = vshrl.u32 %v2722, 7
    %v2724 = vsub.s32 0, %v2723
    %v2725 = vrot.slane %v2602, %v2724
    %v2727 = vadd.f32 %v2699, %v2725
    %v2729 = vrot.slane %v2727, 1
    %v2732 = vmul.f32 %v2718, %v2727
    %v2733 = vmul.f32 %v2720, %v2729
    %v2734 = vadd.f32 %v2616, %v2732
    %v2735 = vadd.f32 %v2618, %v2733
    %v2736 = vtanh.pop %v2734
    %v2737 = vtanh.pop %v2735
    %v2738 = vsub.f32 0.0, %v2736
    %v2739 = vsub.f32 0.0, %v2737
    %2742 = vrot.lane.b32.xlu0 %v2738, 64
    %v2743 = vpop.permute.xlu0 %2742
    %2744 = vrot.lane.b32.xlu0 %v2739, 64
    %v2745 = vpop.permute.xlu0 %2744
    %v2748 = vmul.f32 %v2718, %v2743
    %v2749 = vmul.f32 %v2720, %v2745
    %2752 = vrot.lane.b32.xlu0 %v2748, 64
    %v2753 = vpop.permute.xlu0 %2752
    %2754 = vrot.lane.b32.xlu0 %v2749, 64
    %v2755 = vpop.permute.xlu0 %2754
    %v2758 = vadd.f32 %v2736, %v2753
    %v2759 = vadd.f32 %v2737, %v2755
    %v2762 = vrot.slane %v2759, 7
    %vm2763 = vcmask 1041409
    %v2764 = vsel %vm2763, %v2762, %v2758
    %vm2766 = vcmask 517120
    %2767 = vst.msk [vmem:[#allocation2] sm:$0x3] %vm2766, %v2764
    %v2768 = vrot.slane %v2586, 5
    %v2769 = vrot.slane %v2588, 5
    %v2770 = vrot.slane %v2590, 5
    %v2771 = vrot.slane %v2592, 5
    %v2776 = vadd.f32 %v2495, %v2768
    %v2777 = vadd.f32 %v2497, %v2769
    %v2778 = vadd.f32 %v2499, %v2770
    %v2779 = vadd.f32 %v2501, %v2771
    %v2780 = vpack.c.bf16 %v2758, %v2758
    %v2781 = vpack.c.bf16 %v2759, %v2759
    %v2784 = vunpack.c.l.b16 %v2780
    %v2785 = vunpack.c.l.b16 %v2781
    %v2786 = vrot.slane %v2785, 7
    %v2787 = vsel %vm2763, %v2786, %v2784
    %v2788 = vpack.c.b16 %v2787, %v2787
    %v2790 = vsel %vm66, %v2788, 0
    %2792 = vmatprep.subr.bf16.mxu0 %v2644
    %2793 = vmatpush1.bf16.msra.mxu0 %v2643
    %2794 = vmatprep.subr.bf16.mxu0 %v2646
    %2795 = vmatpush1.bf16.msra.mxu0 %v2645
    %2796 = vmatprep.subr.bf16.mxu0 %v2648
    %2797 = vmatpush1.bf16.msra.mxu0 %v2647
    %2798 = vmatprep.subr.bf16.mxu0 %v2650
    %2799 = vmatpush1.bf16.msra.mxu0 %v2649
    %2800 = vmatprep.subr.bf16.mxu0 0
    %2801 = vmatpush1.bf16.msra.mxu0 0
    %2802 = vmatprep.subr.bf16.mxu0 0
    %2803 = vmatpush1.bf16.msra.mxu0 0
    %2804 = vmatprep.subr.bf16.mxu0 0
    %2805 = vmatpush1.bf16.msra.mxu0 0
    %2806 = vmatprep.subr.bf16.mxu0 0
    %2807 = vmatpush1.bf16.msra.mxu0 0
    %2808 = vmatprep.subr.bf16.mxu0 0
    %2809 = vmatpush1.bf16.msra.mxu0 0
    %2810 = vmatprep.subr.bf16.mxu0 0
    %2811 = vmatpush1.bf16.msra.mxu0 0
    %2812 = vmatprep.subr.bf16.mxu0 0
    %2813 = vmatpush1.bf16.msra.mxu0 0
    %2814 = vmatprep.subr.bf16.mxu0 0
    %2815 = vmatpush1.bf16.msra.mxu0 0
    %2816 = vmatprep.subr.bf16.mxu0 0
    %2817 = vmatpush1.bf16.msra.mxu0 0
    %2818 = vmatprep.subr.bf16.mxu0 0
    %2819 = vmatpush1.bf16.msra.mxu0 0
    %2820 = vmatprep.subr.bf16.mxu0 0
    %2821 = vmatpush1.bf16.msra.mxu0 0
    %2822 = vmatprep.subr.bf16.mxu0 0
    %2823 = vmatpush1.bf16.msra.mxu0 0
    %2824 = vmatprep.mubr.bf16.mxu0 0
    %2825 = vmatmul.mubr.bf16.gmra.mrb[0].mxu0 %v2790
    %v2826 = vpop.f32.mrb[0].mxu0
    %v2827 = vadd.f32 0.0, %v2826
    %v2828 = vpop.f32.mrb[0].mxu0
    %v2829 = vadd.f32 0.0, %v2828
    %v2830 = vpop.f32.mrb[0].mxu0
    %v2831 = vpop.f32.mrb[0].mxu0
    %2832 = vdwg.mxu0
    %v2834 = vrot.slane %v2827, 7
    %v2837 = vadd.f32 %v2776, %v2834
    %v2838 = vadd.f32 %v2778, %v2827
    %v2839 = vxor.u32 %v2837, 2147483648
    %v2840 = vxor.u32 %v2838, 2147483648
    %v2841 = vmul.f32 %v2839, 1.442695
    %v2842 = vpow.pop %v2841
    %v2843 = vmul.f32 %v2840, 1.442695
    %v2844 = vpow.pop %v2843
    %v2845 = vadd.f32 %v2842, 1.0
    %v2846 = vadd.f32 %v2844, 1.0
    %v2847 = vrcp.pop %v2845
    %v2848 = vmul.f32 1.0, %v2847
    %v2849 = vrcp.pop %v2846
    %v2850 = vmul.f32 1.0, %v2849
    %v2851 = vadd.f32 %v2829, %v2725
    %v2853 = vrot.slane %v2851, 7
    %v2856 = vmul.f32 %v2848, %v2853
    %v2857 = vmul.f32 %v2850, %v2851
    %v2858 = vadd.f32 %v2777, %v2856
    %v2859 = vadd.f32 %v2779, %v2857
    %v2860 = vtanh.pop %v2858
    %v2861 = vtanh.pop %v2859
    %v2864 = vrot.slane %v2860, 1
    %v2865 = vrot.slane %v2861, 1
    %v2868 = vsub.f32 %v2758, %v2864
    %v2869 = vsub.f32 %v2759, %v2865
    %v2872 = vrot.slane %v2868, 7
    %v2873 = vrot.slane %v2869, 7
    %2874 = vrot.lane.b32.xlu0 %v2872, 64
    %v2875 = vpop.permute.xlu0 %2874
    %2876 = vrot.lane.b32.xlu0 %v2873, 64
    %v2877 = vpop.permute.xlu0 %2876
    %v2880 = vmul.f32 %v2848, %v2875
    %v2881 = vmul.f32 %v2850, %v2877
    %2884 = vrot.lane.b32.xlu0 %v2880, 64
    %v2885 = vpop.permute.xlu0 %2884
    %2886 = vrot.lane.b32.xlu0 %v2881, 64
    %v2887 = vpop.permute.xlu0 %2886
    %v2890 = vadd.f32 %v2860, %v2885
    %v2891 = vadd.f32 %v2861, %v2887
    %v2894 = vrot.slane %v2891, 7
    %vm2895 = vcmask 1042434
    %v2896 = vsel %vm2895, %v2894, %v2890
    %vm2898 = vcmask 518145
    %2899 = vst.msk [vmem:[#allocation2 + $0x1] sm:$0x6] %vm2898, %v2896
    %v2900 = vrot.slane %v2586, 3
    %v2901 = vrot.slane %v2588, 3
    %v2902 = vrot.slane %v2590, 3
    %v2903 = vrot.slane %v2592, 3
    %v2908 = vadd.f32 %v2495, %v2900
    %v2909 = vadd.f32 %v2497, %v2901
    %v2910 = vadd.f32 %v2499, %v2902
    %v2911 = vadd.f32 %v2501, %v2903
    %v2912 = vpack.c.bf16 %v2890, %v2890
    %v2913 = vpack.c.bf16 %v2891, %v2891
    %v2916 = vunpack.c.l.b16 %v2912
    %v2917 = vunpack.c.l.b16 %v2913
    %v2918 = vrot.slane %v2916, 1
    %v2919 = vsel %vm2763, %v2917, %v2918
    %v2920 = vpack.c.b16 %v2919, %v2919
    %v2922 = vsel %vm66, %v2920, 0
    %2924 = vmatprep.subr.bf16.mxu0 %v2644
    %2925 = vmatpush1.bf16.msra.mxu0 %v2643
    %2926 = vmatprep.subr.bf16.mxu0 %v2646
    %2927 = vmatpush1.bf16.msra.mxu0 %v2645
    %2928 = vmatprep.subr.bf16.mxu0 %v2648
    %2929 = vmatpush1.bf16.msra.mxu0 %v2647
    %2930 = vmatprep.subr.bf16.mxu0 %v2650
    %2931 = vmatpush1.bf16.msra.mxu0 %v2649
    %2932 = vmatprep.subr.bf16.mxu0 0
    %2933 = vmatpush1.bf16.msra.mxu0 0
    %2934 = vmatprep.subr.bf16.mxu0 0
    %2935 = vmatpush1.bf16.msra.mxu0 0
    %2936 = vmatprep.subr.bf16.mxu0 0
    %2937 = vmatpush1.bf16.msra.mxu0 0
    %2938 = vmatprep.subr.bf16.mxu0 0
    %2939 = vmatpush1.bf16.msra.mxu0 0
    %2940 = vmatprep.subr.bf16.mxu0 0
    %2941 = vmatpush1.bf16.msra.mxu0 0
    %2942 = vmatprep.subr.bf16.mxu0 0
    %2943 = vmatpush1.bf16.msra.mxu0 0
    %2944 = vmatprep.subr.bf16.mxu0 0
    %2945 = vmatpush1.bf16.msra.mxu0 0
    %2946 = vmatprep.subr.bf16.mxu0 0
    %2947 = vmatpush1.bf16.msra.mxu0 0
    %2948 = vmatprep.subr.bf16.mxu0 0
    %2949 = vmatpush1.bf16.msra.mxu0 0
    %2950 = vmatprep.subr.bf16.mxu0 0
    %2951 = vmatpush1.bf16.msra.mxu0 0
    %2952 = vmatprep.subr.bf16.mxu0 0
    %2953 = vmatpush1.bf16.msra.mxu0 0
    %2954 = vmatprep.subr.bf16.mxu0 0
    %2955 = vmatpush1.bf16.msra.mxu0 0
    %2956 = vmatprep.mubr.bf16.mxu0 0
    %2957 = vmatmul.mubr.bf16.gmra.mrb[0].mxu0 %v2922
    %v2958 = vpop.f32.mrb[0].mxu0
    %v2959 = vadd.f32 0.0, %v2958
    %v2960 = vpop.f32.mrb[0].mxu0
    %v2961 = vadd.f32 0.0, %v2960
    %v2962 = vpop.f32.mrb[0].mxu0
    %v2963 = vpop.f32.mrb[0].mxu0
    %2964 = vdwg.mxu0
    %v2966 = vrot.slane %v2959, 6
    %v2967 = vrot.slane %v2959, 7
    %v2970 = vadd.f32 %v2908, %v2966
    %v2971 = vadd.f32 %v2910, %v2967
    %v2972 = vxor.u32 %v2970, 2147483648
    %v2973 = vxor.u32 %v2971, 2147483648
    %v2974 = vmul.f32 %v2972, 1.442695
    %v2975 = vpow.pop %v2974
    %v2976 = vmul.f32 %v2973, 1.442695
    %v2977 = vpow.pop %v2976
    %v2978 = vadd.f32 %v2975, 1.0
    %v2979 = vadd.f32 %v2977, 1.0
    %v2980 = vrcp.pop %v2978
    %v2981 = vmul.f32 1.0, %v2980
    %v2982 = vrcp.pop %v2979
    %v2983 = vmul.f32 1.0, %v2982
    %v2984 = vadd.f32 %v2961, %v2725
    %v2986 = vrot.slane %v2984, 6
    %v2987 = vrot.slane %v2984, 7
    %v2990 = vmul.f32 %v2981, %v2986
    %v2991 = vmul.f32 %v2983, %v2987
    %v2992 = vadd.f32 %v2909, %v2990
    %v2993 = vadd.f32 %v2911, %v2991
    %v2994 = vtanh.pop %v2992
    %v2995 = vtanh.pop %v2993
    %v2998 = vrot.slane %v2994, 1
    %v2999 = vrot.slane %v2995, 1
    %v3002 = vsub.f32 %v2890, %v2998
    %v3003 = vsub.f32 %v2891, %v2999
    %v3006 = vrot.slane %v3002, 7
    %v3007 = vrot.slane %v3003, 7
    %3008 = vrot.lane.b32.xlu0 %v3006, 64
    %v3009 = vpop.permute.xlu0 %3008
    %3010 = vrot.lane.b32.xlu0 %v3007, 64
    %v3011 = vpop.permute.xlu0 %3010
    %v3014 = vmul.f32 %v2981, %v3009
    %v3015 = vmul.f32 %v2983, %v3011
    %3018 = vrot.lane.b32.xlu0 %v3014, 64
    %v3019 = vpop.permute.xlu0 %3018
    %3020 = vrot.lane.b32.xlu0 %v3015, 64
    %v3021 = vpop.permute.xlu0 %3020
    %v3024 = vadd.f32 %v2994, %v3019
    %v3025 = vadd.f32 %v2995, %v3021
    %v3028 = vrot.slane %v3025, 7
    %vm3029 = vcmask 1043459
    %v3030 = vsel %vm3029, %v3028, %v3024
    %vm3032 = vcmask 519170
    %3033 = vst.msk [vmem:[#allocation2 + $0x2] sm:$0xc] %vm3032, %v3030
    %v3034 = vrot.slane %v2586, 1
    %v3035 = vrot.slane %v2588, 1
    %v3036 = vrot.slane %v2590, 1
    %v3037 = vrot.slane %v2592, 1
    %v3042 = vadd.f32 %v2495, %v3034
    %v3043 = vadd.f32 %v2497, %v3035
    %v3044 = vadd.f32 %v2499, %v3036
    %v3045 = vadd.f32 %v2501, %v3037
    %v3046 = vpack.c.bf16 %v3024, %v3024
    %v3047 = vpack.c.bf16 %v3025, %v3025
    %v3050 = vunpack.c.l.b16 %v3046
    %v3051 = vunpack.c.l.b16 %v3047
    %v3052 = vrot.slane %v3050, 2
    %v3053 = vrot.slane %v3051, 1
    %v3054 = vsel %vm2763, %v3053, %v3052
    %v3055 = vpack.c.b16 %v3054, %v3054
    %v3057 = vsel %vm66, %v3055, 0
    %3059 = vmatprep.subr.bf16.mxu0 %v2644
    %3060 = vmatpush1.bf16.msra.mxu0 %v2643
    %3061 = vmatprep.subr.bf16.mxu0 %v2646
    %3062 = vmatpush1.bf16.msra.mxu0 %v2645
    %3063 = vmatprep.subr.bf16.mxu0 %v2648
    %3064 = vmatpush1.bf16.msra.mxu0 %v2647
    %3065 = vmatprep.subr.bf16.mxu0 %v2650
    %3066 = vmatpush1.bf16.msra.mxu0 %v2649
    %3067 = vmatprep.subr.bf16.mxu0 0
    %3068 = vmatpush1.bf16.msra.mxu0 0
    %3069 = vmatprep.subr.bf16.mxu0 0
    %3070 = vmatpush1.bf16.msra.mxu0 0
    %3071 = vmatprep.subr.bf16.mxu0 0
    %3072 = vmatpush1.bf16.msra.mxu0 0
    %3073 = vmatprep.subr.bf16.mxu0 0
    %3074 = vmatpush1.bf16.msra.mxu0 0
    %3075 = vmatprep.subr.bf16.mxu0 0
    %3076 = vmatpush1.bf16.msra.mxu0 0
    %3077 = vmatprep.subr.bf16.mxu0 0
    %3078 = vmatpush1.bf16.msra.mxu0 0
    %3079 = vmatprep.subr.bf16.mxu0 0
    %3080 = vmatpush1.bf16.msra.mxu0 0
    %3081 = vmatprep.subr.bf16.mxu0 0
    %3082 = vmatpush1.bf16.msra.mxu0 0
    %3083 = vmatprep.subr.bf16.mxu0 0
    %3084 = vmatpush1.bf16.msra.mxu0 0
    %3085 = vmatprep.subr.bf16.mxu0 0
    %3086 = vmatpush1.bf16.msra.mxu0 0
    %3087 = vmatprep.subr.bf16.mxu0 0
    %3088 = vmatpush1.bf16.msra.mxu0 0
    %3089 = vmatprep.subr.bf16.mxu0 0
    %3090 = vmatpush1.bf16.msra.mxu0 0
    %3091 = vmatprep.mubr.bf16.mxu0 0
    %3092 = vmatmul.mubr.bf16.gmra.mrb[0].mxu0 %v3057
    %v3093 = vpop.f32.mrb[0].mxu0
    %v3094 = vadd.f32 0.0, %v3093
    %v3095 = vpop.f32.mrb[0].mxu0
    %v3096 = vadd.f32 0.0, %v3095
    %v3097 = vpop.f32.mrb[0].mxu0
    %v3098 = vpop.f32.mrb[0].mxu0
    %3099 = vdwg.mxu0
    %v3101 = vrot.slane %v3094, 5
    %v3102 = vrot.slane %v3094, 6
    %v3105 = vadd.f32 %v3042, %v3101
    %v3106 = vadd.f32 %v3044, %v3102
    %v3107 = vxor.u32 %v3105, 2147483648
    %v3108 = vxor.u32 %v3106, 2147483648
    %v3109 = vmul.f32 %v3107, 1.442695
    %v3110 = vpow.pop %v3109
    %v3111 = vmul.f32 %v3108, 1.442695
    %v3112 = vpow.pop %v3111
    %v3113 = vadd.f32 %v3110, 1.0
    %v3114 = vadd.f32 %v3112, 1.0
    %v3115 = vrcp.pop %v3113
    %v3116 = vmul.f32 1.0, %v3115
    %v3117 = vrcp.pop %v3114
    %v3118 = vmul.f32 1.0, %v3117
    %v3119 = vadd.f32 %v3096, %v2725
    %v3121 = vrot.slane %v3119, 5
    %v3122 = vrot.slane %v3119, 6
    %v3125 = vmul.f32 %v3116, %v3121
    %v3126 = vmul.f32 %v3118, %v3122
    %v3127 = vadd.f32 %v3043, %v3125
    %v3128 = vadd.f32 %v3045, %v3126
    %v3129 = vtanh.pop %v3127
    %v3130 = vtanh.pop %v3128
    %v3133 = vrot.slane %v3129, 1
    %v3134 = vrot.slane %v3130, 1
    %v3137 = vsub.f32 %v3024, %v3133
    %v3138 = vsub.f32 %v3025, %v3134
    %v3141 = vrot.slane %v3137, 7
    %v3142 = vrot.slane %v3138, 7
    %3143 = vrot.lane.b32.xlu0 %v3141, 64
    %v3144 = vpop.permute.xlu0 %3143
    %3145 = vrot.lane.b32.xlu0 %v3142, 64
    %v3146 = vpop.permute.xlu0 %3145
    %v3149 = vmul.f32 %v3116, %v3144
    %v3150 = vmul.f32 %v3118, %v3146
    %3153 = vrot.lane.b32.xlu0 %v3149, 64
    %v3154 = vpop.permute.xlu0 %3153
    %3155 = vrot.lane.b32.xlu0 %v3150, 64
    %v3156 = vpop.permute.xlu0 %3155
    %v3159 = vadd.f32 %v3129, %v3154
    %v3160 = vadd.f32 %v3130, %v3156
    %v3163 = vrot.slane %v3160, 7
    %vm3164 = vcmask 1044484
    %v3165 = vsel %vm3164, %v3163, %v3159
    %vm3167 = vcmask 520195
    %3168 = vst.msk [vmem:[#allocation2 + $0x3] sm:$0x18] %vm3167, %v3165
    %v3169 = vpack.c.bf16 %v3159, %v3159
    %v3170 = vpack.c.bf16 %v3160, %v3160
    %v3173 = vunpack.c.l.b16 %v3169
    %v3174 = vunpack.c.l.b16 %v3170
    %v3175 = vrot.slane %v3173, 3
    %v3176 = vrot.slane %v3174, 2
    %v3177 = vsel %vm2763, %v3176, %v3175
    %v3178 = vpack.c.b16 %v3177, %v3177
    %v3180 = vsel %vm66, %v3178, 0
    %3182 = vmatprep.subr.bf16.mxu0 %v2644
    %3183 = vmatpush1.bf16.msra.mxu0 %v2643
    %3184 = vmatprep.subr.bf16.mxu0 %v2646
    %3185 = vmatpush1.bf16.msra.mxu0 %v2645
    %3186 = vmatprep.subr.bf16.mxu0 %v2648
    %3187 = vmatpush1.bf16.msra.mxu0 %v2647
    %3188 = vmatprep.subr.bf16.mxu0 %v2650
    %3189 = vmatpush1.bf16.msra.mxu0 %v2649
    %3190 = vmatprep.subr.bf16.mxu0 0
    %3191 = vmatpush1.bf16.msra.mxu0 0
    %3192 = vmatprep.subr.bf16.mxu0 0
    %3193 = vmatpush1.bf16.msra.mxu0 0
    %3194 = vmatprep.subr.bf16.mxu0 0
    %3195 = vmatpush1.bf16.msra.mxu0 0
    %3196 = vmatprep.subr.bf16.mxu0 0
    %3197 = vmatpush1.bf16.msra.mxu0 0
    %3198 = vmatprep.subr.bf16.mxu0 0
    %3199 = vmatpush1.bf16.msra.mxu0 0
    %3200 = vmatprep.subr.bf16.mxu0 0
    %3201 = vmatpush1.bf16.msra.mxu0 0
    %3202 = vmatprep.subr.bf16.mxu0 0
    %3203 = vmatpush1.bf16.msra.mxu0 0
    %3204 = vmatprep.subr.bf16.mxu0 0
    %3205 = vmatpush1.bf16.msra.mxu0 0
    %3206 = vmatprep.subr.bf16.mxu0 0
    %3207 = vmatpush1.bf16.msra.mxu0 0
    %3208 = vmatprep.subr.bf16.mxu0 0
    %3209 = vmatpush1.bf16.msra.mxu0 0
    %3210 = vmatprep.subr.bf16.mxu0 0
    %3211 = vmatpush1.bf16.msra.mxu0 0
    %3212 = vmatprep.subr.bf16.mxu0 0
    %3213 = vmatpush1.bf16.msra.mxu0 0
    %3214 = vmatprep.mubr.bf16.mxu0 0
    %3215 = vmatmul.mubr.bf16.gmra.mrb[0].mxu0 %v3180
    %v3216 = vpop.f32.mrb[0].mxu0
    %v3217 = vadd.f32 0.0, %v3216
    %v3218 = vpop.f32.mrb[0].mxu0
    %v3219 = vadd.f32 0.0, %v3218
    %v3220 = vpop.f32.mrb[0].mxu0
    %v3221 = vpop.f32.mrb[0].mxu0
    %3222 = vdwg.mxu0
    %v3224 = vrot.slane %v3217, 4
    %v3225 = vrot.slane %v3217, 5
    %v3228 = vadd.f32 %v2615, %v3224
    %v3229 = vadd.f32 %v2617, %v3225
    %v3230 = vxor.u32 %v3228, 2147483648
    %v3231 = vxor.u32 %v3229, 2147483648
    %v3232 = vmul.f32 %v3230, 1.442695
    %v3233 = vpow.pop %v3232
    %v3234 = vmul.f32 %v3231, 1.442695
    %v3235 = vpow.pop %v3234
    %v3236 = vadd.f32 %v3233, 1.0
    %v3237 = vadd.f32 %v3235, 1.0
    %v3238 = vrcp.pop %v3236
    %v3239 = vmul.f32 1.0, %v3238
    %v3240 = vrcp.pop %v3237
    %v3241 = vmul.f32 1.0, %v3240
    %v3242 = vadd.f32 %v3219, %v2725
    %v3244 = vrot.slane %v3242, 4
    %v3245 = vrot.slane %v3242, 5
    %v3248 = vmul.f32 %v3239, %v3244
    %v3249 = vmul.f32 %v3241, %v3245
    %v3250 = vadd.f32 %v2616, %v3248
    %v3251 = vadd.f32 %v2618, %v3249
    %v3252 = vtanh.pop %v3250
    %v3253 = vtanh.pop %v3251
    %v3256 = vrot.slane %v3252, 1
    %v3257 = vrot.slane %v3253, 1
    %v3260 = vsub.f32 %v3159, %v3256
    %v3261 = vsub.f32 %v3160, %v3257
    %v3264 = vrot.slane %v3260, 7
    %v3265 = vrot.slane %v3261, 7
    %3266 = vrot.lane.b32.xlu0 %v3264, 64
    %v3267 = vpop.permute.xlu0 %3266
    %3268 = vrot.lane.b32.xlu0 %v3265, 64
    %v3269 = vpop.permute.xlu0 %3268
    %v3272 = vmul.f32 %v3239, %v3267
    %v3273 = vmul.f32 %v3241, %v3269
    %3276 = vrot.lane.b32.xlu0 %v3272, 64
    %v3277 = vpop.permute.xlu0 %3276
    %3278 = vrot.lane.b32.xlu0 %v3273, 64
    %v3279 = vpop.permute.xlu0 %3278
    %v3282 = vadd.f32 %v3252, %v3277
    %v3283 = vadd.f32 %v3253, %v3279
    %v3286 = vrot.slane %v3283, 7
    %vm3287 = vcmask 1045509
    %v3288 = vsel %vm3287, %v3286, %v3282
    %vm3290 = vcmask 521220
    %3291 = vst.msk [vmem:[#allocation2 + $0x4] sm:$0x30] %vm3290, %v3288
    %v3292 = vpack.c.bf16 %v3282, %v3282
    %v3293 = vpack.c.bf16 %v3283, %v3283
    %v3296 = vunpack.c.l.b16 %v3292
    %v3297 = vunpack.c.l.b16 %v3293
    %v3298 = vrot.slane %v3296, 4
    %v3299 = vrot.slane %v3297, 3
    %v3300 = vsel %vm2763, %v3299, %v3298
    %v3301 = vpack.c.b16 %v3300, %v3300
    %v3303 = vsel %vm66, %v3301, 0
    %3305 = vmatprep.subr.bf16.mxu0 %v2644
    %3306 = vmatpush1.bf16.msra.mxu0 %v2643
    %3307 = vmatprep.subr.bf16.mxu0 %v2646
    %3308 = vmatpush1.bf16.msra.mxu0 %v2645
    %3309 = vmatprep.subr.bf16.mxu0 %v2648
    %3310 = vmatpush1.bf16.msra.mxu0 %v2647
    %3311 = vmatprep.subr.bf16.mxu0 %v2650
    %3312 = vmatpush1.bf16.msra.mxu0 %v2649
    %3313 = vmatprep.subr.bf16.mxu0 0
    %3314 = vmatpush1.bf16.msra.mxu0 0
    %3315 = vmatprep.subr.bf16.mxu0 0
    %3316 = vmatpush1.bf16.msra.mxu0 0
    %3317 = vmatprep.subr.bf16.mxu0 0
    %3318 = vmatpush1.bf16.msra.mxu0 0
    %3319 = vmatprep.subr.bf16.mxu0 0
    %3320 = vmatpush1.bf16.msra.mxu0 0
    %3321 = vmatprep.subr.bf16.mxu0 0
    %3322 = vmatpush1.bf16.msra.mxu0 0
    %3323 = vmatprep.subr.bf16.mxu0 0
    %3324 = vmatpush1.bf16.msra.mxu0 0
    %3325 = vmatprep.subr.bf16.mxu0 0
    %3326 = vmatpush1.bf16.msra.mxu0 0
    %3327 = vmatprep.subr.bf16.mxu0 0
    %3328 = vmatpush1.bf16.msra.mxu0 0
    %3329 = vmatprep.subr.bf16.mxu0 0
    %3330 = vmatpush1.bf16.msra.mxu0 0
    %3331 = vmatprep.subr.bf16.mxu0 0
    %3332 = vmatpush1.bf16.msra.mxu0 0
    %3333 = vmatprep.subr.bf16.mxu0 0
    %3334 = vmatpush1.bf16.msra.mxu0 0
    %3335 = vmatprep.subr.bf16.mxu0 0
    %3336 = vmatpush1.bf16.msra.mxu0 0
    %3337 = vmatprep.mubr.bf16.mxu0 0
    %3338 = vmatmul.mubr.bf16.gmra.mrb[0].mxu0 %v3303
    %v3339 = vpop.f32.mrb[0].mxu0
    %v3340 = vadd.f32 0.0, %v3339
    %v3341 = vpop.f32.mrb[0].mxu0
    %v3342 = vadd.f32 0.0, %v3341
    %v3343 = vpop.f32.mrb[0].mxu0
    %v3344 = vpop.f32.mrb[0].mxu0
    %3345 = vdwg.mxu0
    %v3347 = vrot.slane %v3340, 3
    %v3348 = vrot.slane %v3340, 4
    %v3351 = vadd.f32 %v2776, %v3347
    %v3352 = vadd.f32 %v2778, %v3348
    %v3353 = vxor.u32 %v3351, 2147483648
    %v3354 = vxor.u32 %v3352, 2147483648
    %v3355 = vmul.f32 %v3353, 1.442695
    %v3356 = vpow.pop %v3355
    %v3357 = vmul.f32 %v3354, 1.442695
    %v3358 = vpow.pop %v3357
    %v3359 = vadd.f32 %v3356, 1.0
    %v3360 = vadd.f32 %v3358, 1.0
    %v3361 = vrcp.pop %v3359
    %v3362 = vmul.f32 1.0, %v3361
    %v3363 = vrcp.pop %v3360
    %v3364 = vmul.f32 1.0, %v3363
    %v3365 = vadd.f32 %v3342, %v2725
    %v3367 = vrot.slane %v3365, 3
    %v3368 = vrot.slane %v3365, 4
    %v3371 = vmul.f32 %v3362, %v3367
    %v3372 = vmul.f32 %v3364, %v3368
    %v3373 = vadd.f32 %v2777, %v3371
    %v3374 = vadd.f32 %v2779, %v3372
    %v3375 = vtanh.pop %v3373
    %v3376 = vtanh.pop %v3374
    %v3379 = vrot.slane %v3375, 1
    %v3380 = vrot.slane %v3376, 1
    %v3383 = vsub.f32 %v3282, %v3379
    %v3384 = vsub.f32 %v3283, %v3380
    %v3387 = vrot.slane %v3383, 7
    %v3388 = vrot.slane %v3384, 7
    %3389 = vrot.lane.b32.xlu0 %v3387, 64
    %v3390 = vpop.permute.xlu0 %3389
    %3391 = vrot.lane.b32.xlu0 %v3388, 64
    %v3392 = vpop.permute.xlu0 %3391
    %v3395 = vmul.f32 %v3362, %v3390
    %v3396 = vmul.f32 %v3364, %v3392
    %3399 = vrot.lane.b32.xlu0 %v3395, 64
    %v3400 = vpop.permute.xlu0 %3399
    %3401 = vrot.lane.b32.xlu0 %v3396, 64
    %v3402 = vpop.permute.xlu0 %3401
    %v3405 = vadd.f32 %v3375, %v3400
    %v3406 = vadd.f32 %v3376, %v3402
    %v3409 = vrot.slane %v3406, 7
    %vm3410 = vcmask 1046534
    %v3411 = vsel %vm3410, %v3409, %v3405
    %vm3413 = vcmask 522245
    %3414 = vst.msk [vmem:[#allocation2 + $0x5] sm:$0x60] %vm3413, %v3411
    %v3415 = vpack.c.bf16 %v3405, %v3405
    %v3416 = vpack.c.bf16 %v3406, %v3406
    %v3419 = vunpack.c.l.b16 %v3415
    %v3420 = vunpack.c.l.b16 %v3416
    %v3421 = vrot.slane %v3419, 5
    %v3422 = vrot.slane %v3420, 4
    %v3423 = vsel %vm2763, %v3422, %v3421
    %v3424 = vpack.c.b16 %v3423, %v3423
    %v3426 = vsel %vm66, %v3424, 0
    %3428 = vmatprep.subr.bf16.mxu0 %v2644
    %3429 = vmatpush1.bf16.msra.mxu0 %v2643
    %3430 = vmatprep.subr.bf16.mxu0 %v2646
    %3431 = vmatpush1.bf16.msra.mxu0 %v2645
    %3432 = vmatprep.subr.bf16.mxu0 %v2648
    %3433 = vmatpush1.bf16.msra.mxu0 %v2647
    %3434 = vmatprep.subr.bf16.mxu0 %v2650
    %3435 = vmatpush1.bf16.msra.mxu0 %v2649
    %3436 = vmatprep.subr.bf16.mxu0 0
    %3437 = vmatpush1.bf16.msra.mxu0 0
    %3438 = vmatprep.subr.bf16.mxu0 0
    %3439 = vmatpush1.bf16.msra.mxu0 0
    %3440 = vmatprep.subr.bf16.mxu0 0
    %3441 = vmatpush1.bf16.msra.mxu0 0
    %3442 = vmatprep.subr.bf16.mxu0 0
    %3443 = vmatpush1.bf16.msra.mxu0 0
    %3444 = vmatprep.subr.bf16.mxu0 0
    %3445 = vmatpush1.bf16.msra.mxu0 0
    %3446 = vmatprep.subr.bf16.mxu0 0
    %3447 = vmatpush1.bf16.msra.mxu0 0
    %3448 = vmatprep.subr.bf16.mxu0 0
    %3449 = vmatpush1.bf16.msra.mxu0 0
    %3450 = vmatprep.subr.bf16.mxu0 0
    %3451 = vmatpush1.bf16.msra.mxu0 0
    %3452 = vmatprep.subr.bf16.mxu0 0
    %3453 = vmatpush1.bf16.msra.mxu0 0
    %3454 = vmatprep.subr.bf16.mxu0 0
    %3455 = vmatpush1.bf16.msra.mxu0 0
    %3456 = vmatprep.subr.bf16.mxu0 0
    %3457 = vmatpush1.bf16.msra.mxu0 0
    %3458 = vmatprep.subr.bf16.mxu0 0
    %3459 = vmatpush1.bf16.msra.mxu0 0
    %3460 = vmatprep.mubr.bf16.mxu0 0
    %3461 = vmatmul.mubr.bf16.gmra.mrb[0].mxu0 %v3426
    %v3462 = vpop.f32.mrb[0].mxu0
    %v3463 = vadd.f32 0.0, %v3462
    %v3464 = vpop.f32.mrb[0].mxu0
    %v3465 = vadd.f32 0.0, %v3464
    %v3466 = vpop.f32.mrb[0].mxu0
    %v3467 = vpop.f32.mrb[0].mxu0
    %3468 = vdwg.mxu0
    %v3470 = vrot.slane %v3463, 2
    %v3471 = vrot.slane %v3463, 3
    %v3474 = vadd.f32 %v2908, %v3470
    %v3475 = vadd.f32 %v2910, %v3471
    %v3476 = vxor.u32 %v3474, 2147483648
    %v3477 = vxor.u32 %v3475, 2147483648
    %v3478 = vmul.f32 %v3476, 1.442695
    %v3479 = vpow.pop %v3478
    %v3480 = vmul.f32 %v3477, 1.442695
    %v3481 = vpow.pop %v3480
    %v3482 = vadd.f32 %v3479, 1.0
    %v3483 = vadd.f32 %v3481, 1.0
    %v3484 = vrcp.pop %v3482
    %v3485 = vmul.f32 1.0, %v3484
    %v3486 = vrcp.pop %v3483
    %v3487 = vmul.f32 1.0, %v3486
    %v3488 = vadd.f32 %v3465, %v2725
    %v3490 = vrot.slane %v3488, 2
    %v3491 = vrot.slane %v3488, 3
    %v3494 = vmul.f32 %v3485, %v3490
    %v3495 = vmul.f32 %v3487, %v3491
    %v3496 = vadd.f32 %v2909, %v3494
    %v3497 = vadd.f32 %v2911, %v3495
    %v3498 = vtanh.pop %v3496
    %v3499 = vtanh.pop %v3497
    %v3502 = vrot.slane %v3498, 1
    %v3503 = vrot.slane %v3499, 1
    %v3506 = vsub.f32 %v3405, %v3502
    %v3507 = vsub.f32 %v3406, %v3503
    %v3510 = vrot.slane %v3506, 7
    %v3511 = vrot.slane %v3507, 7
    %3512 = vrot.lane.b32.xlu0 %v3510, 64
    %v3513 = vpop.permute.xlu0 %3512
    %3514 = vrot.lane.b32.xlu0 %v3511, 64
    %v3515 = vpop.permute.xlu0 %3514
    %v3518 = vmul.f32 %v3485, %v3513
    %v3519 = vmul.f32 %v3487, %v3515
    %3522 = vrot.lane.b32.xlu0 %v3518, 64
    %v3523 = vpop.permute.xlu0 %3522
    %3524 = vrot.lane.b32.xlu0 %v3519, 64
    %v3525 = vpop.permute.xlu0 %3524
    %v3528 = vadd.f32 %v3498, %v3523
    %v3529 = vadd.f32 %v3499, %v3525
    %v3532 = vrot.slane %v3529, 7
    %vm3533 = vcmask 1047559
    %v3534 = vsel %vm3533, %v3532, %v3528
    %vm3536 = vcmask 523270
    %3537 = vst.msk [vmem:[#allocation2 + $0x6] sm:$0xc0] %vm3536, %v3534
    %v3538 = vpack.c.bf16 %v3528, %v3528
    %v3539 = vpack.c.bf16 %v3529, %v3529
    %v3542 = vunpack.c.l.b16 %v3538
    %v3543 = vunpack.c.l.b16 %v3539
    %v3544 = vrot.slane %v3542, 6
    %v3545 = vrot.slane %v3543, 5
    %v3546 = vsel %vm2763, %v3545, %v3544
    %v3547 = vpack.c.b16 %v3546, %v3546
    %v3549 = vsel %vm66, %v3547, 0
    %3551 = vmatprep.subr.bf16.mxu0 %v2644
    %3552 = vmatpush1.bf16.msra.mxu0 %v2643
    %3553 = vmatprep.subr.bf16.mxu0 %v2646
    %3554 = vmatpush1.bf16.msra.mxu0 %v2645
    %3555 = vmatprep.subr.bf16.mxu0 %v2648
    %3556 = vmatpush1.bf16.msra.mxu0 %v2647
    %3557 = vmatprep.subr.bf16.mxu0 %v2650
    %3558 = vmatpush1.bf16.msra.mxu0 %v2649
    %3559 = vmatprep.subr.bf16.mxu0 0
    %3560 = vmatpush1.bf16.msra.mxu0 0
    %3561 = vmatprep.subr.bf16.mxu0 0
    %3562 = vmatpush1.bf16.msra.mxu0 0
    %3563 = vmatprep.subr.bf16.mxu0 0
    %3564 = vmatpush1.bf16.msra.mxu0 0
    %3565 = vmatprep.subr.bf16.mxu0 0
    %3566 = vmatpush1.bf16.msra.mxu0 0
    %3567 = vmatprep.subr.bf16.mxu0 0
    %3568 = vmatpush1.bf16.msra.mxu0 0
    %3569 = vmatprep.subr.bf16.mxu0 0
    %3570 = vmatpush1.bf16.msra.mxu0 0
    %3571 = vmatprep.subr.bf16.mxu0 0
    %3572 = vmatpush1.bf16.msra.mxu0 0
    %3573 = vmatprep.subr.bf16.mxu0 0
    %3574 = vmatpush1.bf16.msra.mxu0 0
    %3575 = vmatprep.subr.bf16.mxu0 0
    %3576 = vmatpush1.bf16.msra.mxu0 0
    %3577 = vmatprep.subr.bf16.mxu0 0
    %3578 = vmatpush1.bf16.msra.mxu0 0
    %3579 = vmatprep.subr.bf16.mxu0 0
    %3580 = vmatpush1.bf16.msra.mxu0 0
    %3581 = vmatprep.subr.bf16.mxu0 0
    %3582 = vmatpush1.bf16.msra.mxu0 0
    %3583 = vmatprep.mubr.bf16.mxu0 0
    %3584 = vmatmul.mubr.bf16.gmra.mrb[0].mxu0 %v3549
    %v3585 = vpop.f32.mrb[0].mxu0
    %v3586 = vadd.f32 0.0, %v3585
    %v3587 = vpop.f32.mrb[0].mxu0
    %v3588 = vadd.f32 0.0, %v3587
    %v3589 = vpop.f32.mrb[0].mxu0
    %v3590 = vpop.f32.mrb[0].mxu0
    %3591 = vdwg.mxu0
    %v3593 = vrot.slane %v3586, 1
    %v3594 = vrot.slane %v3586, 2
    %v3597 = vadd.f32 %v3042, %v3593
    %v3598 = vadd.f32 %v3044, %v3594
    %v3599 = vxor.u32 %v3597, 2147483648
    %v3600 = vxor.u32 %v3598, 2147483648
    %v3601 = vmul.f32 %v3599, 1.442695
    %v3602 = vpow.pop %v3601
    %v3603 = vmul.f32 %v3600, 1.442695
    %v3604 = vpow.pop %v3603
    %v3605 = vadd.f32 %v3602, 1.0
    %v3606 = vadd.f32 %v3604, 1.0
    %v3607 = vrcp.pop %v3605
    %v3608 = vmul.f32 1.0, %v3607
    %v3609 = vrcp.pop %v3606
    %v3610 = vmul.f32 1.0, %v3609
    %v3611 = vadd.f32 %v3588, %v2725
    %v3613 = vrot.slane %v3611, 1
    %v3614 = vrot.slane %v3611, 2
    %v3617 = vmul.f32 %v3608, %v3613
    %v3618 = vmul.f32 %v3610, %v3614
    %v3619 = vadd.f32 %v3043, %v3617
    %v3620 = vadd.f32 %v3045, %v3618
    %v3621 = vtanh.pop %v3619
    %v3622 = vtanh.pop %v3620
    %v3625 = vrot.slane %v3621, 1
    %v3626 = vrot.slane %v3622, 1
    %v3629 = vsub.f32 %v3528, %v3625
    %v3630 = vsub.f32 %v3529, %v3626
    %v3633 = vrot.slane %v3629, 7
    %v3634 = vrot.slane %v3630, 7
    %3635 = vrot.lane.b32.xlu0 %v3633, 64
    %v3636 = vpop.permute.xlu0 %3635
    %3637 = vrot.lane.b32.xlu0 %v3634, 64
    %v3638 = vpop.permute.xlu0 %3637
    %v3641 = vmul.f32 %v3608, %v3636
    %v3642 = vmul.f32 %v3610, %v3638
    %3645 = vrot.lane.b32.xlu0 %v3641, 64
    %v3646 = vpop.permute.xlu0 %3645
    %3647 = vrot.lane.b32.xlu0 %v3642, 64
    %v3648 = vpop.permute.xlu0 %3647
    %v3651 = vadd.f32 %v3621, %v3646
    %v3652 = vadd.f32 %v3622, %v3648
    %v3655 = vrot.slane %v3652, 7
    %vm3658 = vcmask 523271
    %3659 = vst.msk [vmem:[#allocation2 + $0x7] sm:$0x80] %vm3658, %v3651
    %vm3660 = vcmask 516096
    %3661 = vst.msk [vmem:[#allocation2 + $0xf] sm:$0x1] %vm3660, %v3655
    %v3662 = vld [vmem:[#allocation2] sm:$0xff]
    %v3663 = vld [vmem:[#allocation2 + $0x8] sm:$0xff]
    %v3664 = vpack.c.bf16 %v3663, %v3662
    %v3665 = vld [vmem:[%s12] sm:$0xff]
    %v3666 = vld [vmem:[%s12 + $0x8] sm:$0xff]
    %v3667 = vld [vmem:[%s12 + $0x10] sm:$0xff]
    %v3668 = vld [vmem:[%s12 + $0x18] sm:$0xff]
    %v3669 = vld [vmem:[%s12 + $0x20] sm:$0xff]
    %v3670 = vld [vmem:[%s12 + $0x28] sm:$0xff]
    %v3671 = vld [vmem:[%s12 + $0x30] sm:$0xff]
    %v3672 = vld [vmem:[%s12 + $0x38] sm:$0xff]
    %v3673 = vld [vmem:[%s15] sm:$0x3]
    %v3675 = vlaneseq
    %v3676 = vshrl.u32 %v3675, 7
    %v3677 = vsub.s32 0, %v3676
    %v3678 = vrot.slane %v3673, %v3677
    %v3679 = vlaneseq
    %v3680 = vshrl.u32 %v3679, 7
    %v3681 = vsub.s32 1, %v3680
    %v3682 = vrot.slane %v3673, %v3681
    %v3693 = vunpack.c.l.b16 %v3665
    %v3694 = vunpack.c.h.b16 %v3665
    %v3695 = vunpack.c.l.b16 %v3666
    %v3696 = vunpack.c.h.b16 %v3666
    %v3697 = vunpack.c.l.b16 %v3667
    %v3698 = vunpack.c.h.b16 %v3667
    %v3699 = vunpack.c.l.b16 %v3668
    %v3700 = vunpack.c.h.b16 %v3668
    %v3701 = vunpack.c.l.b16 %v3669
    %v3702 = vunpack.c.h.b16 %v3669
    %v3703 = vunpack.c.l.b16 %v3670
    %v3704 = vunpack.c.h.b16 %v3670
    %v3705 = vunpack.c.l.b16 %v3671
    %v3706 = vunpack.c.h.b16 %v3671
    %v3707 = vunpack.c.l.b16 %v3672
    %v3708 = vunpack.c.h.b16 %v3672
    %v3709 = vpack.c.b16 %v3695, %v3693
    %v3710 = vpack.c.b16 %v3696, %v3694
    %v3711 = vpack.c.b16 %v3699, %v3697
    %v3712 = vpack.c.b16 %v3700, %v3698
    %v3713 = vpack.c.b16 %v3703, %v3701
    %v3714 = vpack.c.b16 %v3704, %v3702
    %v3715 = vpack.c.b16 %v3707, %v3705
    %v3716 = vpack.c.b16 %v3708, %v3706
    %v3726 = vsel %vm66, %v3664, 0
    %3728 = vmatprep.subr.bf16.mxu0 %v3710
    %3729 = vmatpush1.bf16.msra.mxu0 %v3709
    %3730 = vmatprep.subr.bf16.mxu0 %v3712
    %3731 = vmatpush1.bf16.msra.mxu0 %v3711
    %3732 = vmatprep.subr.bf16.mxu0 %v3714
    %3733 = vmatpush1.bf16.msra.mxu0 %v3713
    %3734 = vmatprep.subr.bf16.mxu0 %v3716
    %3735 = vmatpush1.bf16.msra.mxu0 %v3715
    %3736 = vmatprep.subr.bf16.mxu0 0
    %3737 = vmatpush1.bf16.msra.mxu0 0
    %3738 = vmatprep.subr.bf16.mxu0 0
    %3739 = vmatpush1.bf16.msra.mxu0 0
    %3740 = vmatprep.subr.bf16.mxu0 0
    %3741 = vmatpush1.bf16.msra.mxu0 0
    %3742 = vmatprep.subr.bf16.mxu0 0
    %3743 = vmatpush1.bf16.msra.mxu0 0
    %3744 = vmatprep.subr.bf16.mxu0 0
    %3745 = vmatpush1.bf16.msra.mxu0 0
    %3746 = vmatprep.subr.bf16.mxu0 0
    %3747 = vmatpush1.bf16.msra.mxu0 0
    %3748 = vmatprep.subr.bf16.mxu0 0
    %3749 = vmatpush1.bf16.msra.mxu0 0
    %3750 = vmatprep.subr.bf16.mxu0 0
    %3751 = vmatpush1.bf16.msra.mxu0 0
    %3752 = vmatprep.subr.bf16.mxu0 0
    %3753 = vmatpush1.bf16.msra.mxu0 0
    %3754 = vmatprep.subr.bf16.mxu0 0
    %3755 = vmatpush1.bf16.msra.mxu0 0
    %3756 = vmatprep.subr.bf16.mxu0 0
    %3757 = vmatpush1.bf16.msra.mxu0 0
    %3758 = vmatprep.subr.bf16.mxu0 0
    %3759 = vmatpush1.bf16.msra.mxu0 0
    %3760 = vmatprep.mubr.bf16.mxu0 0
    %3761 = vmatmul.mubr.bf16.gmra.mrb[0].mxu0 %v3726
    %v3762 = vpop.f32.mrb[0].mxu0
    %v3763 = vadd.f32 %v3678, %v3762
    %v3764 = vpop.f32.mrb[0].mxu0
    %v3765 = vadd.f32 %v3682, %v3764
    %v3766 = vpop.f32.mrb[0].mxu0
    %v3767 = vadd.f32 %v3678, %v3766
    %v3768 = vpop.f32.mrb[0].mxu0
    %v3769 = vadd.f32 %v3682, %v3768
    %3770 = vdwg.mxu0
    %v3775 = vcombine.low %v3763, %v3765
    %v3776 = vcombine.high %v3763, %v3765
    %v3778 = vunpack.c.l.s4 1983009808
    %v3779 = vunpack.c.0.s8 %v3778
    %v3780 = vlaneseq
    %v3781 = vshrl.u32 %v3780, 7
    %v3782 = vsub.s32 %v3779, %v3781
    %v3783 = vrot.slane %v3775, %v3782
    %v3785 = vunpack.c.l.s4 1983009808
    %v3786 = vunpack.c.0.s8 %v3785
    %v3787 = vlaneseq
    %v3788 = vshrl.u32 %v3787, 7
    %v3789 = vsub.s32 %v3786, %v3788
    %v3790 = vrot.slane %v3776, %v3789
    %v3791 = vcombine.high %v3783, %v3783
    %v3792 = vcombine.high %v3790, %v3790
    %v3793 = vcombine.low %v3767, %v3769
    %v3794 = vcombine.high %v3767, %v3769
    %v3796 = vunpack.c.l.s4 1983009808
    %v3797 = vunpack.c.0.s8 %v3796
    %v3798 = vlaneseq
    %v3799 = vshrl.u32 %v3798, 7
    %v3800 = vsub.s32 %v3797, %v3799
    %v3801 = vrot.slane %v3793, %v3800
    %v3803 = vunpack.c.l.s4 1983009808
    %v3804 = vunpack.c.0.s8 %v3803
    %v3805 = vlaneseq
    %v3806 = vshrl.u32 %v3805, 7
    %v3807 = vsub.s32 %v3804, %v3806
    %v3808 = vrot.slane %v3794, %v3807
    %v3809 = vcombine.high %v3801, %v3801
    %v3810 = vcombine.high %v3808, %v3808
    %v3819 = vld [vmem:[%s13] sm:$0xff]
    %v3820 = vld [vmem:[%s13 + $0x8] sm:$0xff]
    %v3821 = vld [vmem:[%s13 + $0x10] sm:$0xff]
    %v3822 = vld [vmem:[%s13 + $0x18] sm:$0xff]
    %v3823 = vld [vmem:[%s13 + $0x20] sm:$0xff]
    %v3824 = vld [vmem:[%s13 + $0x28] sm:$0xff]
    %v3825 = vld [vmem:[%s13 + $0x30] sm:$0xff]
    %v3826 = vld [vmem:[%s13 + $0x38] sm:$0xff]
    %v3835 = vunpack.c.l.b16 %v3819
    %v3836 = vunpack.c.h.b16 %v3819
    %v3837 = vunpack.c.l.b16 %v3820
    %v3838 = vunpack.c.h.b16 %v3820
    %v3839 = vunpack.c.l.b16 %v3821
    %v3840 = vunpack.c.h.b16 %v3821
    %v3841 = vunpack.c.l.b16 %v3822
    %v3842 = vunpack.c.h.b16 %v3822
    %v3843 = vunpack.c.l.b16 %v3823
    %v3844 = vunpack.c.h.b16 %v3823
    %v3845 = vunpack.c.l.b16 %v3824
    %v3846 = vunpack.c.h.b16 %v3824
    %v3847 = vunpack.c.l.b16 %v3825
    %v3848 = vunpack.c.h.b16 %v3825
    %v3849 = vunpack.c.l.b16 %v3826
    %v3850 = vunpack.c.h.b16 %v3826
    %v3851 = vpack.c.b16 %v3837, %v3835
    %v3852 = vpack.c.b16 %v3838, %v3836
    %v3853 = vpack.c.b16 %v3841, %v3839
    %v3854 = vpack.c.b16 %v3842, %v3840
    %v3855 = vpack.c.b16 %v3845, %v3843
    %v3856 = vpack.c.b16 %v3846, %v3844
    %v3857 = vpack.c.b16 %v3849, %v3847
    %v3858 = vpack.c.b16 %v3850, %v3848
    %3867 = vmatprep.subr.bf16.mxu0 %v3852
    %3868 = vmatpush1.bf16.msra.mxu0 %v3851
    %3869 = vmatprep.subr.bf16.mxu0 %v3854
    %3870 = vmatpush1.bf16.msra.mxu0 %v3853
    %3871 = vmatprep.subr.bf16.mxu0 %v3856
    %3872 = vmatpush1.bf16.msra.mxu0 %v3855
    %3873 = vmatprep.subr.bf16.mxu0 %v3858
    %3874 = vmatpush1.bf16.msra.mxu0 %v3857
    %3875 = vmatprep.subr.bf16.mxu0 0
    %3876 = vmatpush1.bf16.msra.mxu0 0
    %3877 = vmatprep.subr.bf16.mxu0 0
    %3878 = vmatpush1.bf16.msra.mxu0 0
    %3879 = vmatprep.subr.bf16.mxu0 0
    %3880 = vmatpush1.bf16.msra.mxu0 0
    %3881 = vmatprep.subr.bf16.mxu0 0
    %3882 = vmatpush1.bf16.msra.mxu0 0
    %3883 = vmatprep.subr.bf16.mxu0 0
    %3884 = vmatpush1.bf16.msra.mxu0 0
    %3885 = vmatprep.subr.bf16.mxu0 0
    %3886 = vmatpush1.bf16.msra.mxu0 0
    %3887 = vmatprep.subr.bf16.mxu0 0
    %3888 = vmatpush1.bf16.msra.mxu0 0
    %3889 = vmatprep.subr.bf16.mxu0 0
    %3890 = vmatpush1.bf16.msra.mxu0 0
    %3891 = vmatprep.subr.bf16.mxu0 0
    %3892 = vmatpush1.bf16.msra.mxu0 0
    %3893 = vmatprep.subr.bf16.mxu0 0
    %3894 = vmatpush1.bf16.msra.mxu0 0
    %3895 = vmatprep.subr.bf16.mxu0 0
    %3896 = vmatpush1.bf16.msra.mxu0 0
    %3897 = vmatprep.subr.bf16.mxu0 0
    %3898 = vmatpush1.bf16.msra.mxu0 0
    %3899 = vmatprep.mubr.bf16.mxu0 0
    %3900 = vmatmul.mubr.bf16.gmra.mrb[0].mxu0 %v3726
    %v3901 = vpop.f32.mrb[0].mxu0
    %v3902 = vadd.f32 0.0, %v3901
    %v3903 = vpop.f32.mrb[0].mxu0
    %v3904 = vadd.f32 0.0, %v3903
    %v3905 = vpop.f32.mrb[0].mxu0
    %v3906 = vadd.f32 0.0, %v3905
    %v3907 = vpop.f32.mrb[0].mxu0
    %v3908 = vadd.f32 0.0, %v3907
    %3909 = vdwg.mxu0
    %v3914 = vcombine.low %v3902, %v3904
    %v3915 = vcombine.high %v3902, %v3904
    %v3917 = vunpack.c.l.s4 1983009808
    %v3918 = vunpack.c.0.s8 %v3917
    %v3919 = vlaneseq
    %v3920 = vshrl.u32 %v3919, 7
    %v3921 = vsub.s32 %v3918, %v3920
    %v3922 = vrot.slane %v3914, %v3921
    %v3924 = vunpack.c.l.s4 1983009808
    %v3925 = vunpack.c.0.s8 %v3924
    %v3926 = vlaneseq
    %v3927 = vshrl.u32 %v3926, 7
    %v3928 = vsub.s32 %v3925, %v3927
    %v3929 = vrot.slane %v3915, %v3928
    %v3930 = vcombine.high %v3922, %v3922
    %v3931 = vcombine.high %v3929, %v3929
    %v3932 = vcombine.low %v3906, %v3908
    %v3933 = vcombine.high %v3906, %v3908
    %v3935 = vunpack.c.l.s4 1983009808
    %v3936 = vunpack.c.0.s8 %v3935
    %v3937 = vlaneseq
    %v3938 = vshrl.u32 %v3937, 7
    %v3939 = vsub.s32 %v3936, %v3938
    %v3940 = vrot.slane %v3932, %v3939
    %v3942 = vunpack.c.l.s4 1983009808
    %v3943 = vunpack.c.0.s8 %v3942
    %v3944 = vlaneseq
    %v3945 = vshrl.u32 %v3944, 7
    %v3946 = vsub.s32 %v3943, %v3945
    %v3947 = vrot.slane %v3933, %v3946
    %v3948 = vcombine.high %v3940, %v3940
    %v3949 = vcombine.high %v3947, %v3947
    %v3958 = vld [vmem:[%s14] sm:$0xff]
    %v3959 = vld [vmem:[%s14 + $0x8] sm:$0xff]
    %v3960 = vld [vmem:[%s14 + $0x10] sm:$0xff]
    %v3961 = vld [vmem:[%s14 + $0x18] sm:$0xff]
    %v3962 = vld [vmem:[%s14 + $0x20] sm:$0xff]
    %v3963 = vld [vmem:[%s14 + $0x28] sm:$0xff]
    %v3964 = vld [vmem:[%s14 + $0x30] sm:$0xff]
    %v3965 = vld [vmem:[%s14 + $0x38] sm:$0xff]
    %v3966 = vld [vmem:[%s16] sm:$0x1]
    %v3967 = vadd.f32 %v3783, %v3949
    %v3976 = vunpack.c.l.b16 %v3958
    %v3977 = vunpack.c.h.b16 %v3958
    %v3978 = vunpack.c.l.b16 %v3959
    %v3979 = vunpack.c.h.b16 %v3959
    %v3980 = vunpack.c.l.b16 %v3960
    %v3981 = vunpack.c.h.b16 %v3960
    %v3982 = vunpack.c.l.b16 %v3961
    %v3983 = vunpack.c.h.b16 %v3961
    %v3984 = vunpack.c.l.b16 %v3962
    %v3985 = vunpack.c.h.b16 %v3962
    %v3986 = vunpack.c.l.b16 %v3963
    %v3987 = vunpack.c.h.b16 %v3963
    %v3988 = vunpack.c.l.b16 %v3964
    %v3989 = vunpack.c.h.b16 %v3964
    %v3990 = vunpack.c.l.b16 %v3965
    %v3991 = vunpack.c.h.b16 %v3965
    %v3992 = vpack.c.b16 %v3978, %v3976
    %v3993 = vpack.c.b16 %v3979, %v3977
    %v3994 = vpack.c.b16 %v3982, %v3980
    %v3995 = vpack.c.b16 %v3983, %v3981
    %v3996 = vpack.c.b16 %v3986, %v3984
    %v3997 = vpack.c.b16 %v3987, %v3985
    %v3998 = vpack.c.b16 %v3990, %v3988
    %v3999 = vpack.c.b16 %v3991, %v3989
    %4008 = vmatprep.subr.bf16.mxu0 %v3993
    %4009 = vmatpush1.bf16.msra.mxu0 %v3992
    %4010 = vmatprep.subr.bf16.mxu0 %v3995
    %4011 = vmatpush1.bf16.msra.mxu0 %v3994
    %4012 = vmatprep.subr.bf16.mxu0 %v3997
    %4013 = vmatpush1.bf16.msra.mxu0 %v3996
    %4014 = vmatprep.subr.bf16.mxu0 %v3999
    %4015 = vmatpush1.bf16.msra.mxu0 %v3998
    %4016 = vmatprep.subr.bf16.mxu0 0
    %4017 = vmatpush1.bf16.msra.mxu0 0
    %4018 = vmatprep.subr.bf16.mxu0 0
    %4019 = vmatpush1.bf16.msra.mxu0 0
    %4020 = vmatprep.subr.bf16.mxu0 0
    %4021 = vmatpush1.bf16.msra.mxu0 0
    %4022 = vmatprep.subr.bf16.mxu0 0
    %4023 = vmatpush1.bf16.msra.mxu0 0
    %4024 = vmatprep.subr.bf16.mxu0 0
    %4025 = vmatpush1.bf16.msra.mxu0 0
    %4026 = vmatprep.subr.bf16.mxu0 0
    %4027 = vmatpush1.bf16.msra.mxu0 0
    %4028 = vmatprep.subr.bf16.mxu0 0
    %4029 = vmatpush1.bf16.msra.mxu0 0
    %4030 = vmatprep.subr.bf16.mxu0 0
    %4031 = vmatpush1.bf16.msra.mxu0 0
    %4032 = vmatprep.subr.bf16.mxu0 0
    %4033 = vmatpush1.bf16.msra.mxu0 0
    %4034 = vmatprep.subr.bf16.mxu0 0
    %4035 = vmatpush1.bf16.msra.mxu0 0
    %4036 = vmatprep.subr.bf16.mxu0 0
    %4037 = vmatpush1.bf16.msra.mxu0 0
    %4038 = vmatprep.subr.bf16.mxu0 0
    %4039 = vmatpush1.bf16.msra.mxu0 0
    %4040 = vmatprep.mubr.bf16.mxu0 0
    %4041 = vmatmul.mubr.bf16.gmra.mrb[0].mxu0 %v2660
    %v4042 = vpop.f32.mrb[0].mxu0
    %v4043 = vadd.f32 0.0, %v4042
    %v4044 = vpop.f32.mrb[0].mxu0
    %v4045 = vadd.f32 0.0, %v4044
    %v4046 = vpop.f32.mrb[0].mxu0
    %v4047 = vpop.f32.mrb[0].mxu0
    %4048 = vdwg.mxu0
    %v4049 = vadd.f32 %v3967, %v4043
    %v4050 = vxor.u32 %v4049, 2147483648
    %v4051 = vmul.f32 %v4050, 1.442695
    %v4052 = vpow.pop %v4051
    %v4053 = vadd.f32 %v4052, 1.0
    %v4054 = vrcp.pop %v4053
    %v4055 = vmul.f32 1.0, %v4054
    %v4057 = vlaneseq
    %v4058 = vshrl.u32 %v4057, 7
    %v4059 = vsub.s32 0, %v4058
    %v4060 = vrot.slane %v3966, %v4059
    %v4062 = vadd.f32 %v4045, %v4060
    %v4063 = vmul.f32 %v4055, %v4062
    %v4065 = vrot.slane %v3967, 2
    %v4067 = vadd.f32 %v4065, %v4063
    %v4068 = vtanh.pop %v4067
    %v4069 = vsub.f32 0.0, %v4068
    %4071 = vrot.lane.b32.xlu0 %v4069, 64
    %v4072 = vpop.permute.xlu0 %4071
    %v4074 = vmul.f32 %v4055, %v4072
    %4076 = vrot.lane.b32.xlu0 %v4074, 64
    %v4077 = vpop.permute.xlu0 %4076
    %v4079 = vadd.f32 %v4068, %v4077
    %v4080 = vadd.f32 %v3791, %v3947
    %v4081 = vpack.c.bf16 %v4079, %v4079
    %v4083 = vsel %vm66, %v4081, 0
    %4085 = vmatprep.subr.bf16.mxu0 %v3993
    %4086 = vmatpush1.bf16.msra.mxu0 %v3992
    %4087 = vmatprep.subr.bf16.mxu0 %v3995
    %4088 = vmatpush1.bf16.msra.mxu0 %v3994
    %4089 = vmatprep.subr.bf16.mxu0 %v3997
    %4090 = vmatpush1.bf16.msra.mxu0 %v3996
    %4091 = vmatprep.subr.bf16.mxu0 %v3999
    %4092 = vmatpush1.bf16.msra.mxu0 %v3998
    %4093 = vmatprep.subr.bf16.mxu0 0
    %4094 = vmatpush1.bf16.msra.mxu0 0
    %4095 = vmatprep.subr.bf16.mxu0 0
    %4096 = vmatpush1.bf16.msra.mxu0 0
    %4097 = vmatprep.subr.bf16.mxu0 0
    %4098 = vmatpush1.bf16.msra.mxu0 0
    %4099 = vmatprep.subr.bf16.mxu0 0
    %4100 = vmatpush1.bf16.msra.mxu0 0
    %4101 = vmatprep.subr.bf16.mxu0 0
    %4102 = vmatpush1.bf16.msra.mxu0 0
    %4103 = vmatprep.subr.bf16.mxu0 0
    %4104 = vmatpush1.bf16.msra.mxu0 0
    %4105 = vmatprep.subr.bf16.mxu0 0
    %4106 = vmatpush1.bf16.msra.mxu0 0
    %4107 = vmatprep.subr.bf16.mxu0 0
    %4108 = vmatpush1.bf16.msra.mxu0 0
    %4109 = vmatprep.subr.bf16.mxu0 0
    %4110 = vmatpush1.bf16.msra.mxu0 0
    %4111 = vmatprep.subr.bf16.mxu0 0
    %4112 = vmatpush1.bf16.msra.mxu0 0
    %4113 = vmatprep.subr.bf16.mxu0 0
    %4114 = vmatpush1.bf16.msra.mxu0 0
    %4115 = vmatprep.subr.bf16.mxu0 0
    %4116 = vmatpush1.bf16.msra.mxu0 0
    %4117 = vmatprep.mubr.bf16.mxu0 0
    %4118 = vmatmul.mubr.bf16.gmra.mrb[0].mxu0 %v4083
    %v4119 = vpop.f32.mrb[0].mxu0
    %v4120 = vadd.f32 0.0, %v4119
    %v4121 = vpop.f32.mrb[0].mxu0
    %v4122 = vadd.f32 0.0, %v4121
    %v4123 = vpop.f32.mrb[0].mxu0
    %v4124 = vpop.f32.mrb[0].mxu0
    %4125 = vdwg.mxu0
    %v4126 = vadd.f32 %v4080, %v4120
    %v4127 = vxor.u32 %v4126, 2147483648
    %v4128 = vmul.f32 %v4127, 1.442695
    %v4129 = vpow.pop %v4128
    %v4130 = vadd.f32 %v4129, 1.0
    %v4131 = vrcp.pop %v4130
    %v4132 = vmul.f32 1.0, %v4131
    %v4133 = vadd.f32 %v4122, %v4060
    %v4134 = vmul.f32 %v4132, %v4133
    %v4136 = vrot.slane %v4080, 2
    %v4138 = vadd.f32 %v4136, %v4134
    %v4139 = vtanh.pop %v4138
    %v4140 = vsub.f32 %v4079, %v4139
    %4142 = vrot.lane.b32.xlu0 %v4140, 64
    %v4143 = vpop.permute.xlu0 %4142
    %v4145 = vmul.f32 %v4132, %v4143
    %4147 = vrot.lane.b32.xlu0 %v4145, 64
    %v4148 = vpop.permute.xlu0 %4147
    %v4150 = vadd.f32 %v4139, %v4148
    %v4151 = vadd.f32 %v3790, %v3948
    %v4152 = vpack.c.bf16 %v4150, %v4150
    %v4154 = vsel %vm66, %v4152, 0
    %4156 = vmatprep.subr.bf16.mxu0 %v3993
    %4157 = vmatpush1.bf16.msra.mxu0 %v3992
    %4158 = vmatprep.subr.bf16.mxu0 %v3995
    %4159 = vmatpush1.bf16.msra.mxu0 %v3994
    %4160 = vmatprep.subr.bf16.mxu0 %v3997
    %4161 = vmatpush1.bf16.msra.mxu0 %v3996
    %4162 = vmatprep.subr.bf16.mxu0 %v3999
    %4163 = vmatpush1.bf16.msra.mxu0 %v3998
    %4164 = vmatprep.subr.bf16.mxu0 0
    %4165 = vmatpush1.bf16.msra.mxu0 0
    %4166 = vmatprep.subr.bf16.mxu0 0
    %4167 = vmatpush1.bf16.msra.mxu0 0
    %4168 = vmatprep.subr.bf16.mxu0 0
    %4169 = vmatpush1.bf16.msra.mxu0 0
    %4170 = vmatprep.subr.bf16.mxu0 0
    %4171 = vmatpush1.bf16.msra.mxu0 0
    %4172 = vmatprep.subr.bf16.mxu0 0
    %4173 = vmatpush1.bf16.msra.mxu0 0
    %4174 = vmatprep.subr.bf16.mxu0 0
    %4175 = vmatpush1.bf16.msra.mxu0 0
    %4176 = vmatprep.subr.bf16.mxu0 0
    %4177 = vmatpush1.bf16.msra.mxu0 0
    %4178 = vmatprep.subr.bf16.mxu0 0
    %4179 = vmatpush1.bf16.msra.mxu0 0
    %4180 = vmatprep.subr.bf16.mxu0 0
    %4181 = vmatpush1.bf16.msra.mxu0 0
    %4182 = vmatprep.subr.bf16.mxu0 0
    %4183 = vmatpush1.bf16.msra.mxu0 0
    %4184 = vmatprep.subr.bf16.mxu0 0
    %4185 = vmatpush1.bf16.msra.mxu0 0
    %4186 = vmatprep.subr.bf16.mxu0 0
    %4187 = vmatpush1.bf16.msra.mxu0 0
    %4188 = vmatprep.mubr.bf16.mxu0 0
    %4189 = vmatmul.mubr.bf16.gmra.mrb[0].mxu0 %v4154
    %v4190 = vpop.f32.mrb[0].mxu0
    %v4191 = vadd.f32 0.0, %v4190
    %v4192 = vpop.f32.mrb[0].mxu0
    %v4193 = vadd.f32 0.0, %v4192
    %v4194 = vpop.f32.mrb[0].mxu0
    %v4195 = vpop.f32.mrb[0].mxu0
    %4196 = vdwg.mxu0
    %v4197 = vadd.f32 %v4151, %v4191
    %v4198 = vxor.u32 %v4197, 2147483648
    %v4199 = vmul.f32 %v4198, 1.442695
    %v4200 = vpow.pop %v4199
    %v4201 = vadd.f32 %v4200, 1.0
    %v4202 = vrcp.pop %v4201
    %v4203 = vmul.f32 1.0, %v4202
    %v4204 = vadd.f32 %v4193, %v4060
    %v4205 = vmul.f32 %v4203, %v4204
    %v4207 = vrot.slane %v4151, 2
    %v4209 = vadd.f32 %v4207, %v4205
    %v4210 = vtanh.pop %v4209
    %v4211 = vsub.f32 %v4150, %v4210
    %4213 = vrot.lane.b32.xlu0 %v4211, 64
    %v4214 = vpop.permute.xlu0 %4213
    %v4216 = vmul.f32 %v4203, %v4214
    %4218 = vrot.lane.b32.xlu0 %v4216, 64
    %v4219 = vpop.permute.xlu0 %4218
    %v4221 = vadd.f32 %v4210, %v4219
    %v4222 = vadd.f32 %v3792, %v3940
    %v4223 = vpack.c.bf16 %v4221, %v4221
    %v4225 = vsel %vm66, %v4223, 0
    %4227 = vmatprep.subr.bf16.mxu0 %v3993
    %4228 = vmatpush1.bf16.msra.mxu0 %v3992
    %4229 = vmatprep.subr.bf16.mxu0 %v3995
    %4230 = vmatpush1.bf16.msra.mxu0 %v3994
    %4231 = vmatprep.subr.bf16.mxu0 %v3997
    %4232 = vmatpush1.bf16.msra.mxu0 %v3996
    %4233 = vmatprep.subr.bf16.mxu0 %v3999
    %4234 = vmatpush1.bf16.msra.mxu0 %v3998
    %4235 = vmatprep.subr.bf16.mxu0 0
    %4236 = vmatpush1.bf16.msra.mxu0 0
    %4237 = vmatprep.subr.bf16.mxu0 0
    %4238 = vmatpush1.bf16.msra.mxu0 0
    %4239 = vmatprep.subr.bf16.mxu0 0
    %4240 = vmatpush1.bf16.msra.mxu0 0
    %4241 = vmatprep.subr.bf16.mxu0 0
    %4242 = vmatpush1.bf16.msra.mxu0 0
    %4243 = vmatprep.subr.bf16.mxu0 0
    %4244 = vmatpush1.bf16.msra.mxu0 0
    %4245 = vmatprep.subr.bf16.mxu0 0
    %4246 = vmatpush1.bf16.msra.mxu0 0
    %4247 = vmatprep.subr.bf16.mxu0 0
    %4248 = vmatpush1.bf16.msra.mxu0 0
    %4249 = vmatprep.subr.bf16.mxu0 0
    %4250 = vmatpush1.bf16.msra.mxu0 0
    %4251 = vmatprep.subr.bf16.mxu0 0
    %4252 = vmatpush1.bf16.msra.mxu0 0
    %4253 = vmatprep.subr.bf16.mxu0 0
    %4254 = vmatpush1.bf16.msra.mxu0 0
    %4255 = vmatprep.subr.bf16.mxu0 0
    %4256 = vmatpush1.bf16.msra.mxu0 0
    %4257 = vmatprep.subr.bf16.mxu0 0
    %4258 = vmatpush1.bf16.msra.mxu0 0
    %4259 = vmatprep.mubr.bf16.mxu0 0
    %4260 = vmatmul.mubr.bf16.gmra.mrb[0].mxu0 %v4225
    %v4261 = vpop.f32.mrb[0].mxu0
    %v4262 = vadd.f32 0.0, %v4261
    %v4263 = vpop.f32.mrb[0].mxu0
    %v4264 = vadd.f32 0.0, %v4263
    %v4265 = vpop.f32.mrb[0].mxu0
    %v4266 = vpop.f32.mrb[0].mxu0
    %4267 = vdwg.mxu0
    %v4268 = vadd.f32 %v4222, %v4262
    %v4269 = vxor.u32 %v4268, 2147483648
    %v4270 = vmul.f32 %v4269, 1.442695
    %v4271 = vpow.pop %v4270
    %v4272 = vadd.f32 %v4271, 1.0
    %v4273 = vrcp.pop %v4272
    %v4274 = vmul.f32 1.0, %v4273
    %v4275 = vadd.f32 %v4264, %v4060
    %v4276 = vmul.f32 %v4274, %v4275
    %v4278 = vrot.slane %v4222, 2
    %v4280 = vadd.f32 %v4278, %v4276
    %v4281 = vtanh.pop %v4280
    %v4282 = vsub.f32 %v4221, %v4281
    %4284 = vrot.lane.b32.xlu0 %v4282, 64
    %v4285 = vpop.permute.xlu0 %4284
    %v4287 = vmul.f32 %v4274, %v4285
    %4289 = vrot.lane.b32.xlu0 %v4287, 64
    %v4290 = vpop.permute.xlu0 %4289
    %v4292 = vadd.f32 %v4281, %v4290
    %v4293 = vadd.f32 %v3801, %v3931
    %v4294 = vpack.c.bf16 %v4292, %v4292
    %v4296 = vsel %vm66, %v4294, 0
    %4298 = vmatprep.subr.bf16.mxu0 %v3993
    %4299 = vmatpush1.bf16.msra.mxu0 %v3992
    %4300 = vmatprep.subr.bf16.mxu0 %v3995
    %4301 = vmatpush1.bf16.msra.mxu0 %v3994
    %4302 = vmatprep.subr.bf16.mxu0 %v3997
    %4303 = vmatpush1.bf16.msra.mxu0 %v3996
    %4304 = vmatprep.subr.bf16.mxu0 %v3999
    %4305 = vmatpush1.bf16.msra.mxu0 %v3998
    %4306 = vmatprep.subr.bf16.mxu0 0
    %4307 = vmatpush1.bf16.msra.mxu0 0
    %4308 = vmatprep.subr.bf16.mxu0 0
    %4309 = vmatpush1.bf16.msra.mxu0 0
    %4310 = vmatprep.subr.bf16.mxu0 0
    %4311 = vmatpush1.bf16.msra.mxu0 0
    %4312 = vmatprep.subr.bf16.mxu0 0
    %4313 = vmatpush1.bf16.msra.mxu0 0
    %4314 = vmatprep.subr.bf16.mxu0 0
    %4315 = vmatpush1.bf16.msra.mxu0 0
    %4316 = vmatprep.subr.bf16.mxu0 0
    %4317 = vmatpush1.bf16.msra.mxu0 0
    %4318 = vmatprep.subr.bf16.mxu0 0
    %4319 = vmatpush1.bf16.msra.mxu0 0
    %4320 = vmatprep.subr.bf16.mxu0 0
    %4321 = vmatpush1.bf16.msra.mxu0 0
    %4322 = vmatprep.subr.bf16.mxu0 0
    %4323 = vmatpush1.bf16.msra.mxu0 0
    %4324 = vmatprep.subr.bf16.mxu0 0
    %4325 = vmatpush1.bf16.msra.mxu0 0
    %4326 = vmatprep.subr.bf16.mxu0 0
    %4327 = vmatpush1.bf16.msra.mxu0 0
    %4328 = vmatprep.subr.bf16.mxu0 0
    %4329 = vmatpush1.bf16.msra.mxu0 0
    %4330 = vmatprep.mubr.bf16.mxu0 0
    %4331 = vmatmul.mubr.bf16.gmra.mrb[0].mxu0 %v4296
    %v4332 = vpop.f32.mrb[0].mxu0
    %v4333 = vadd.f32 0.0, %v4332
    %v4334 = vpop.f32.mrb[0].mxu0
    %v4335 = vadd.f32 0.0, %v4334
    %v4336 = vpop.f32.mrb[0].mxu0
    %v4337 = vpop.f32.mrb[0].mxu0
    %4338 = vdwg.mxu0
    %v4339 = vadd.f32 %v4293, %v4333
    %v4340 = vxor.u32 %v4339, 2147483648
    %v4341 = vmul.f32 %v4340, 1.442695
    %v4342 = vpow.pop %v4341
    %v4343 = vadd.f32 %v4342, 1.0
    %v4344 = vrcp.pop %v4343
    %v4345 = vmul.f32 1.0, %v4344
    %v4346 = vadd.f32 %v4335, %v4060
    %v4347 = vmul.f32 %v4345, %v4346
    %v4349 = vrot.slane %v4293, 2
    %v4351 = vadd.f32 %v4349, %v4347
    %v4352 = vtanh.pop %v4351
    %v4353 = vsub.f32 %v4292, %v4352
    %4355 = vrot.lane.b32.xlu0 %v4353, 64
    %v4356 = vpop.permute.xlu0 %4355
    %v4358 = vmul.f32 %v4345, %v4356
    %4360 = vrot.lane.b32.xlu0 %v4358, 64
    %v4361 = vpop.permute.xlu0 %4360
    %v4363 = vadd.f32 %v4352, %v4361
    %v4364 = vadd.f32 %v3809, %v3929
    %v4365 = vpack.c.bf16 %v4363, %v4363
    %v4367 = vsel %vm66, %v4365, 0
    %4369 = vmatprep.subr.bf16.mxu0 %v3993
    %4370 = vmatpush1.bf16.msra.mxu0 %v3992
    %4371 = vmatprep.subr.bf16.mxu0 %v3995
    %4372 = vmatpush1.bf16.msra.mxu0 %v3994
    %4373 = vmatprep.subr.bf16.mxu0 %v3997
    %4374 = vmatpush1.bf16.msra.mxu0 %v3996
    %4375 = vmatprep.subr.bf16.mxu0 %v3999
    %4376 = vmatpush1.bf16.msra.mxu0 %v3998
    %4377 = vmatprep.subr.bf16.mxu0 0
    %4378 = vmatpush1.bf16.msra.mxu0 0
    %4379 = vmatprep.subr.bf16.mxu0 0
    %4380 = vmatpush1.bf16.msra.mxu0 0
    %4381 = vmatprep.subr.bf16.mxu0 0
    %4382 = vmatpush1.bf16.msra.mxu0 0
    %4383 = vmatprep.subr.bf16.mxu0 0
    %4384 = vmatpush1.bf16.msra.mxu0 0
    %4385 = vmatprep.subr.bf16.mxu0 0
    %4386 = vmatpush1.bf16.msra.mxu0 0
    %4387 = vmatprep.subr.bf16.mxu0 0
    %4388 = vmatpush1.bf16.msra.mxu0 0
    %4389 = vmatprep.subr.bf16.mxu0 0
    %4390 = vmatpush1.bf16.msra.mxu0 0
    %4391 = vmatprep.subr.bf16.mxu0 0
    %4392 = vmatpush1.bf16.msra.mxu0 0
    %4393 = vmatprep.subr.bf16.mxu0 0
    %4394 = vmatpush1.bf16.msra.mxu0 0
    %4395 = vmatprep.subr.bf16.mxu0 0
    %4396 = vmatpush1.bf16.msra.mxu0 0
    %4397 = vmatprep.subr.bf16.mxu0 0
    %4398 = vmatpush1.bf16.msra.mxu0 0
    %4399 = vmatprep.subr.bf16.mxu0 0
    %4400 = vmatpush1.bf16.msra.mxu0 0
    %4401 = vmatprep.mubr.bf16.mxu0 0
    %4402 = vmatmul.mubr.bf16.gmra.mrb[0].mxu0 %v4367
    %v4403 = vpop.f32.mrb[0].mxu0
    %v4404 = vadd.f32 0.0, %v4403
    %v4405 = vpop.f32.mrb[0].mxu0
    %v4406 = vadd.f32 0.0, %v4405
    %v4407 = vpop.f32.mrb[0].mxu0
    %v4408 = vpop.f32.mrb[0].mxu0
    %4409 = vdwg.mxu0
    %v4410 = vadd.f32 %v4364, %v4404
    %v4411 = vxor.u32 %v4410, 2147483648
    %v4412 = vmul.f32 %v4411, 1.442695
    %v4413 = vpow.pop %v4412
    %v4414 = vadd.f32 %v4413, 1.0
    %v4415 = vrcp.pop %v4414
    %v4416 = vmul.f32 1.0, %v4415
    %v4417 = vadd.f32 %v4406, %v4060
    %v4418 = vmul.f32 %v4416, %v4417
    %v4420 = vrot.slane %v4364, 2
    %v4422 = vadd.f32 %v4420, %v4418
    %v4423 = vtanh.pop %v4422
    %v4424 = vsub.f32 %v4363, %v4423
    %4426 = vrot.lane.b32.xlu0 %v4424, 64
    %v4427 = vpop.permute.xlu0 %4426
    %v4429 = vmul.f32 %v4416, %v4427
    %4431 = vrot.lane.b32.xlu0 %v4429, 64
    %v4432 = vpop.permute.xlu0 %4431
    %v4434 = vadd.f32 %v4423, %v4432
    %v4435 = vadd.f32 %v3808, %v3930
    %v4436 = vpack.c.bf16 %v4434, %v4434
    %v4438 = vsel %vm66, %v4436, 0
    %4440 = vmatprep.subr.bf16.mxu0 %v3993
    %4441 = vmatpush1.bf16.msra.mxu0 %v3992
    %4442 = vmatprep.subr.bf16.mxu0 %v3995
    %4443 = vmatpush1.bf16.msra.mxu0 %v3994
    %4444 = vmatprep.subr.bf16.mxu0 %v3997
    %4445 = vmatpush1.bf16.msra.mxu0 %v3996
    %4446 = vmatprep.subr.bf16.mxu0 %v3999
    %4447 = vmatpush1.bf16.msra.mxu0 %v3998
    %4448 = vmatprep.subr.bf16.mxu0 0
    %4449 = vmatpush1.bf16.msra.mxu0 0
    %4450 = vmatprep.subr.bf16.mxu0 0
    %4451 = vmatpush1.bf16.msra.mxu0 0
    %4452 = vmatprep.subr.bf16.mxu0 0
    %4453 = vmatpush1.bf16.msra.mxu0 0
    %4454 = vmatprep.subr.bf16.mxu0 0
    %4455 = vmatpush1.bf16.msra.mxu0 0
    %4456 = vmatprep.subr.bf16.mxu0 0
    %4457 = vmatpush1.bf16.msra.mxu0 0
    %4458 = vmatprep.subr.bf16.mxu0 0
    %4459 = vmatpush1.bf16.msra.mxu0 0
    %4460 = vmatprep.subr.bf16.mxu0 0
    %4461 = vmatpush1.bf16.msra.mxu0 0
    %4462 = vmatprep.subr.bf16.mxu0 0
    %4463 = vmatpush1.bf16.msra.mxu0 0
    %4464 = vmatprep.subr.bf16.mxu0 0
    %4465 = vmatpush1.bf16.msra.mxu0 0
    %4466 = vmatprep.subr.bf16.mxu0 0
    %4467 = vmatpush1.bf16.msra.mxu0 0
    %4468 = vmatprep.subr.bf16.mxu0 0
    %4469 = vmatpush1.bf16.msra.mxu0 0
    %4470 = vmatprep.subr.bf16.mxu0 0
    %4471 = vmatpush1.bf16.msra.mxu0 0
    %4472 = vmatprep.mubr.bf16.mxu0 0
    %4473 = vmatmul.mubr.bf16.gmra.mrb[0].mxu0 %v4438
    %v4474 = vpop.f32.mrb[0].mxu0
    %v4475 = vadd.f32 0.0, %v4474
    %v4476 = vpop.f32.mrb[0].mxu0
    %v4477 = vadd.f32 0.0, %v4476
    %v4478 = vpop.f32.mrb[0].mxu0
    %v4479 = vpop.f32.mrb[0].mxu0
    %4480 = vdwg.mxu0
    %v4481 = vadd.f32 %v4435, %v4475
    %v4482 = vxor.u32 %v4481, 2147483648
    %v4483 = vmul.f32 %v4482, 1.442695
    %v4484 = vpow.pop %v4483
    %v4485 = vadd.f32 %v4484, 1.0
    %v4486 = vrcp.pop %v4485
    %v4487 = vmul.f32 1.0, %v4486
    %v4488 = vadd.f32 %v4477, %v4060
    %v4489 = vmul.f32 %v4487, %v4488
    %v4491 = vrot.slane %v4435, 2
    %v4493 = vadd.f32 %v4491, %v4489
    %v4494 = vtanh.pop %v4493
    %v4495 = vsub.f32 %v4434, %v4494
    %4497 = vrot.lane.b32.xlu0 %v4495, 64
    %v4498 = vpop.permute.xlu0 %4497
    %v4500 = vmul.f32 %v4487, %v4498
    %4502 = vrot.lane.b32.xlu0 %v4500, 64
    %v4503 = vpop.permute.xlu0 %4502
    %v4505 = vadd.f32 %v4494, %v4503
    %v4506 = vadd.f32 %v3810, %v3922
    %v4507 = vpack.c.bf16 %v4505, %v4505
    %v4509 = vsel %vm66, %v4507, 0
    %4511 = vmatprep.subr.bf16.mxu0 %v3993
    %4512 = vmatpush1.bf16.msra.mxu0 %v3992
    %4513 = vmatprep.subr.bf16.mxu0 %v3995
    %4514 = vmatpush1.bf16.msra.mxu0 %v3994
    %4515 = vmatprep.subr.bf16.mxu0 %v3997
    %4516 = vmatpush1.bf16.msra.mxu0 %v3996
    %4517 = vmatprep.subr.bf16.mxu0 %v3999
    %4518 = vmatpush1.bf16.msra.mxu0 %v3998
    %4519 = vmatprep.subr.bf16.mxu0 0
    %4520 = vmatpush1.bf16.msra.mxu0 0
    %4521 = vmatprep.subr.bf16.mxu0 0
    %4522 = vmatpush1.bf16.msra.mxu0 0
    %4523 = vmatprep.subr.bf16.mxu0 0
    %4524 = vmatpush1.bf16.msra.mxu0 0
    %4525 = vmatprep.subr.bf16.mxu0 0
    %4526 = vmatpush1.bf16.msra.mxu0 0
    %4527 = vmatprep.subr.bf16.mxu0 0
    %4528 = vmatpush1.bf16.msra.mxu0 0
    %4529 = vmatprep.subr.bf16.mxu0 0
    %4530 = vmatpush1.bf16.msra.mxu0 0
    %4531 = vmatprep.subr.bf16.mxu0 0
    %4532 = vmatpush1.bf16.msra.mxu0 0
    %4533 = vmatprep.subr.bf16.mxu0 0
    %4534 = vmatpush1.bf16.msra.mxu0 0
    %4535 = vmatprep.subr.bf16.mxu0 0
    %4536 = vmatpush1.bf16.msra.mxu0 0
    %4537 = vmatprep.subr.bf16.mxu0 0
    %4538 = vmatpush1.bf16.msra.mxu0 0
    %4539 = vmatprep.subr.bf16.mxu0 0
    %4540 = vmatpush1.bf16.msra.mxu0 0
    %4541 = vmatprep.subr.bf16.mxu0 0
    %4542 = vmatpush1.bf16.msra.mxu0 0
    %4543 = vmatprep.mubr.bf16.mxu0 0
    %4544 = vmatmul.mubr.bf16.gmra.mrb[0].mxu0 %v4509
    %v4545 = vpop.f32.mrb[0].mxu0
    %v4546 = vadd.f32 0.0, %v4545
    %v4547 = vpop.f32.mrb[0].mxu0
    %v4548 = vadd.f32 0.0, %v4547
    %v4549 = vpop.f32.mrb[0].mxu0
    %v4550 = vpop.f32.mrb[0].mxu0
    %4551 = vdwg.mxu0
    %v4552 = vadd.f32 %v4506, %v4546
    %v4553 = vxor.u32 %v4552, 2147483648
    %v4554 = vmul.f32 %v4553, 1.442695
    %v4555 = vpow.pop %v4554
    %v4556 = vadd.f32 %v4555, 1.0
    %v4557 = vrcp.pop %v4556
    %v4558 = vmul.f32 1.0, %v4557
    %v4559 = vadd.f32 %v4548, %v4060
    %v4560 = vmul.f32 %v4558, %v4559
    %v4562 = vrot.slane %v4506, 2
    %v4564 = vadd.f32 %v4562, %v4560
    %v4565 = vtanh.pop %v4564
    %v4566 = vsub.f32 %v4505, %v4565
    %4568 = vrot.lane.b32.xlu0 %v4566, 64
    %v4569 = vpop.permute.xlu0 %4568
    %v4571 = vmul.f32 %v4558, %v4569
    %4573 = vrot.lane.b32.xlu0 %v4571, 64
    %v4574 = vpop.permute.xlu0 %4573
    %v4576 = vadd.f32 %v4565, %v4574
    %v4577 = vpack.c.bf16 %v4576, %v4576
    %v4578 = vld [vmem:[%s17] sm:$0xf]
    %v4579 = vld [vmem:[%s17 + $0x4] sm:$0xf]
    %v4580 = vld [vmem:[%s17 + $0x8] sm:$0xf]
    %v4581 = vld [vmem:[%s17 + $0xc] sm:$0xf]
    %v4582 = vld [vmem:[%s17 + $0x10] sm:$0xf]
    %v4583 = vld [vmem:[%s17 + $0x14] sm:$0xf]
    %v4584 = vld [vmem:[%s17 + $0x18] sm:$0xf]
    %v4585 = vld [vmem:[%s17 + $0x1c] sm:$0xf]
    %v4586 = vld [vmem:[%s18] sm:$0x1]
    %v4588 = vlaneseq
    %v4589 = vshrl.u32 %v4588, 7
    %v4590 = vsub.s32 0, %v4589
    %v4591 = vrot.slane %v4586, %v4590
    %v4601 = vunpack.c.l.b16 %v4578
    %v4602 = vunpack.c.l.b16 %v4579
    %v4603 = vunpack.c.l.b16 %v4580
    %v4604 = vunpack.c.l.b16 %v4581
    %v4605 = vunpack.c.l.b16 %v4582
    %v4606 = vunpack.c.l.b16 %v4583
    %v4607 = vunpack.c.l.b16 %v4584
    %v4608 = vunpack.c.l.b16 %v4585
    %v4609 = vpack.c.b16 %v4602, %v4601
    %v4610 = vpack.c.b16 %v4604, %v4603
    %v4611 = vpack.c.b16 %v4606, %v4605
    %v4612 = vpack.c.b16 %v4608, %v4607
    %v4618 = vsel %vm66, %v4577, 0
    %4620 = vmatprep.subr.bf16.mxu0 0
    %4621 = vmatpush1.bf16.msra.mxu0 %v4609
    %4622 = vmatprep.subr.bf16.mxu0 0
    %4623 = vmatpush1.bf16.msra.mxu0 %v4610
    %4624 = vmatprep.subr.bf16.mxu0 0
    %4625 = vmatpush1.bf16.msra.mxu0 %v4611
    %4626 = vmatprep.subr.bf16.mxu0 0
    %4627 = vmatpush1.bf16.msra.mxu0 %v4612
    %4628 = vmatprep.subr.bf16.mxu0 0
    %4629 = vmatpush1.bf16.msra.mxu0 0
    %4630 = vmatprep.subr.bf16.mxu0 0
    %4631 = vmatpush1.bf16.msra.mxu0 0
    %4632 = vmatprep.subr.bf16.mxu0 0
    %4633 = vmatpush1.bf16.msra.mxu0 0
    %4634 = vmatprep.subr.bf16.mxu0 0
    %4635 = vmatpush1.bf16.msra.mxu0 0
    %4636 = vmatprep.subr.bf16.mxu0 0
    %4637 = vmatpush1.bf16.msra.mxu0 0
    %4638 = vmatprep.subr.bf16.mxu0 0
    %4639 = vmatpush1.bf16.msra.mxu0 0
    %4640 = vmatprep.subr.bf16.mxu0 0
    %4641 = vmatpush1.bf16.msra.mxu0 0
    %4642 = vmatprep.subr.bf16.mxu0 0
    %4643 = vmatpush1.bf16.msra.mxu0 0
    %4644 = vmatprep.subr.bf16.mxu0 0
    %4645 = vmatpush1.bf16.msra.mxu0 0
    %4646 = vmatprep.subr.bf16.mxu0 0
    %4647 = vmatpush1.bf16.msra.mxu0 0
    %4648 = vmatprep.subr.bf16.mxu0 0
    %4649 = vmatpush1.bf16.msra.mxu0 0
    %4650 = vmatprep.subr.bf16.mxu0 0
    %4651 = vmatpush1.bf16.msra.mxu0 0
    %4652 = vmatprep.mubr.bf16.mxu0 0
    %4653 = vmatmul.mubr.bf16.gmra.mrb[0].mxu0 %v4618
    %v4654 = vpop.f32.mrb[0].mxu0
    %v4655 = vadd.f32 %v4591, %v4654
    %v4656 = vpop.f32.mrb[0].mxu0
    %v4657 = vpop.f32.mrb[0].mxu0
    %v4658 = vpop.f32.mrb[0].mxu0
    %4659 = vdwg.mxu0
    %4660 = vst [vmem:[#allocation3] sm:$0x3] %v4655
    // Predicated region
    $region78: #{_lambda_.1} parent=1 // pred_check
      _
    $region79: #{_lambda_.1} parent=1 // pred_check_branch
      %4662 = sbr.rel (0) target = $region81
    $region80: #{_lambda_.1} parent=1 // pred_region
      %s4664 = ssub.s32 32, 32
      %4665 = vsyncadd [#allocation4], %s4664
      %s4667 = sshll.u32 [#allocation3], 4
      %s4668 = int_to_ptr.vmem [resolvable:$true] %s4667
      %4670 = dma.vmem_to_hbm [thread:$0]  %s4668, 32, %s19, [#allocation4]
    $region81: #{_lambda_.1} parent=1 // pred_fallthru
      _
    // Predicated region
    $region82: #{_lambda_.1} parent=1 // pred_check
      _
    $region83: #{_lambda_.1} parent=1 // pred_check_branch
      %4672 = sbr.rel (0) target = $region85
    $region84: #{_lambda_.1} parent=1 // pred_region
      %4673 = dma.done [#allocation4], 32
    $region85: #{_lambda_.1} parent=1 // pred_fallthru
      _
    %4674 = vsyncpa [#allocation4], 1

</llo_original>
